<compile_context>
chip_gen: v6e
topology: v6e:2x2x1
jax: 0.10.0
libtpu: 0.0.40
codegen_flags: <defaults>
</compile_context>

<pallas_src>
import functools
import math

import jax
import jax.numpy as jnp
from jax.experimental import pallas as pl
from jax.experimental.pallas import tpu as pltpu

EPS = 1e-5
LANES = 128
_VMEM = pl.BlockSpec(memory_space=pltpu.MemorySpace.VMEM)


def _round_up(x, m):
    return (x + m - 1) // m * m


# ----------------------------- fused block kernel ---------------------------

def _basic_block_kernel(x_ref, w1_ref, w2_ref, o_ref, acc_ref, h1p_ref, *,
                        stride, n, h, w):
    """Whole BasicBlock in one program.

    x_ref : stride=1 -> [n, h+2, w+2, C]   spatially zero-padded, channel-padded input
            stride=2 -> [4n, Hph, Wph, C]  2x2 phase split of the padded input;
                                           phase (p, q) occupies rows [(2p+q)*n, (2p+q+1)*n)
    w*_ref: [9, C, C] bf16, tap-major (kh*3+kw), zero-padded channels.
    o_ref : [n, ho, wo, C] f32.
    acc_ref: [n*ho*wo, C] f32 scratch  (MXU accumulator, reused by both convs).
    h1p_ref: [n, ho+2, wo+2, C] f32 scratch (zero-padded conv2 input tile).
    """
    ho = (h + 2 - 3) // stride + 1
    wo = (w + 2 - 3) // stride + 1
    m = n * ho * wo
    c = w1_ref.shape[1]

    def in_tap(kh, kw):
        # Unstrided static slice of the resident input for filter tap (kh, kw).
        if stride == 1:
            patch = x_ref[:, kh:kh + ho, kw:kw + wo, :]
        else:
            p, a = kh % 2, kh // 2
            q, b = kw % 2, kw // 2
            base = (2 * p + q) * n
            patch = x_ref[base:base + n, a:a + ho, b:b + wo, :]
        return patch.astype(jnp.bfloat16).reshape(m, c)

    def batchnorm(a):
        # Training-mode BN: biased batch stats over all rows, gamma=1, beta=0.
        mean = jnp.mean(a, axis=0, keepdims=True)
        var = jnp.maximum(jnp.mean(a * a, axis=0, keepdims=True) - mean * mean, 0.0)
        return (a - mean) * jax.lax.rsqrt(var + EPS)

    # ---- conv1: 9-tap bf16 MXU accumulation into the f32 VMEM accumulator ----
    acc_ref[...] = jnp.zeros_like(acc_ref)
    for kh in range(3):
        for kw in range(3):
            acc_ref[...] += jnp.dot(in_tap(kh, kw), w1_ref[kh * 3 + kw],
                                    preferred_element_type=jnp.float32)

    # ---- BN1 + ReLU, staged into a zero-padded VMEM tile for conv2 ----
    h1 = jnp.maximum(batchnorm(acc_ref[...]), 0.0)
    h1p_ref[...] = jnp.zeros_like(h1p_ref)
    h1p_ref[:, 1:1 + ho, 1:1 + wo, :] = h1.reshape(n, ho, wo, c)

    # ---- conv2 (stride 1): 9-tap accumulation over the resident h1 tile ----
    acc_ref[...] = jnp.zeros_like(acc_ref)
    for kh in range(3):
        for kw in range(3):
            patch = h1p_ref[:, kh:kh + ho, kw:kw + wo, :]
            acc_ref[...] += jnp.dot(patch.astype(jnp.bfloat16).reshape(m, c),
                                    w2_ref[kh * 3 + kw],
                                    preferred_element_type=jnp.float32)
    bn2 = batchnorm(acc_ref[...])

    # ---- parameter-free shortcut, computed from the resident input ----------
    if stride == 1:
        # identity; the channel zero-pad shortcut is built into the padded layout.
        ident = x_ref[:, 1:1 + h, 1:1 + w, :]
    else:
        # avg_pool2d(x, 2, 2): original x[2i+di, 2j+dj] lives (after +1 spatial pad)
        # in phase ((di+1)%2, (dj+1)%2) at spatial offset (i+di, j+dj).
        def phase(p, q, a, b):
            base = (2 * p + q) * n
            return x_ref[base:base + n, a:a + ho, b:b + wo, :]
        ident = 0.25 * (phase(1, 1, 0, 0) + phase(1, 0, 0, 1)
                        + phase(0, 1, 1, 0) + phase(0, 0, 1, 1))
    ident = ident.reshape(m, c)

    out = jnp.maximum(bn2 + ident, 0.0)
    o_ref[...] = out.reshape(n, ho, wo, c)


# ------------------------------ wrapper --------------------------------------

def _pack_conv_weights(w, c_pad):
    """PyTorch [C_out, C_in, 3, 3] f32 -> tap-major, lane-dense [9, c_pad, c_pad] bf16."""
    c_out, c_in = w.shape[0], w.shape[1]
    wk = jnp.transpose(w, (2, 3, 1, 0)).reshape(9, c_in, c_out)   # (kh, kw, ci, co)
    wk = jnp.pad(wk, ((0, 0), (0, c_pad - c_in), (0, c_pad - c_out)))
    return wk.astype(jnp.bfloat16)


def basic_block_forward(x_nchw, w1, w2, *, stride):
    """BasicBlock(n_in, n_out, stride).forward with PyTorch-layout conv weights."""
    assert stride in (1, 2)
    n, c_in, h, w = x_nchw.shape
    c_out = w1.shape[0]
    assert w1.shape == (c_out, c_in, 3, 3) and w2.shape == (c_out, c_out, 3, 3)
    assert c_out >= c_in                       # identity_func only zero-pads channels
    if stride == 2:
        assert h % 2 == 0 and w % 2 == 0       # avg_pool2d(2, 2) shortcut

    cp = _round_up(max(c_in, c_out, 1), LANES)   # lane-dense channel padding
    ho = (h + 2 - 3) // stride + 1
    wo = (w + 2 - 3) // stride + 1
    m = n * ho * wo

    # NCHW -> NHWC (channels on the 128-lane dim), channel pad, conv spatial pad.
    x = jnp.transpose(x_nchw, (0, 2, 3, 1)).astype(jnp.float32)
    xp = jnp.pad(x, ((0, 0), (1, 1), (1, 1), (0, cp - c_in)))

    if stride == 1:
        xin = xp
    else:
        # One-time 2x2 phase split so the stride-2 conv (and the avg-pool shortcut)
        # become unstrided static slices inside the kernel. Costs 1x the input in
        # HBM traffic instead of the 9x of an im2col.
        hp, wp = h + 2, w + 2
        hph, wph = (hp + 1) // 2, (wp + 1) // 2
        xpe = jnp.pad(xp, ((0, 0), (0, 2 * hph - hp), (0, 2 * wph - wp), (0, 0)))
        xin = (xpe.reshape(n, hph, 2, wph, 2, cp)
                  .transpose(2, 4, 0, 1, 3, 5)            # (p, q, n, i, j, c)
                  .reshape(4 * n, hph, wph, cp))

    w1k = _pack_conv_weights(w1, cp)
    w2k = _pack_conv_weights(w2, cp)

    flops = 2 * 2 * 9 * m * cp * cp                        # two 9-tap convs on the MXU
    bytes_accessed = xin.size * 4 + w1k.size * 2 + w2k.size * 2 + m * cp * 4

    out = pl.pallas_call(
        functools.partial(_basic_block_kernel, stride=stride, n=n, h=h, w=w),
        out_shape=jax.ShapeDtypeStruct((n, ho, wo, cp), jnp.float32),
        in_specs=[_VMEM, _VMEM, _VMEM],
        out_specs=_VMEM,
        scratch_shapes=[
            pltpu.VMEM((m, cp), jnp.float32),                    # MXU accumulator
            pltpu.VMEM((n, ho + 2, wo + 2, cp), jnp.float32),    # padded conv2 input
        ],
        cost_estimate=pl.CostEstimate(flops=flops, transcendentals=2 * cp,
                                      bytes_accessed=bytes_accessed),
    )(xin, w1k, w2k)

    out = out[..., :c_out]                                  # drop lane padding
    return jnp.transpose(out, (0, 3, 1, 2))                 # NHWC -> NCHW


# ------------------------- pure-JAX reference (f32) --------------------------

def basic_block_reference(x, w1, w2, *, stride):
    def conv(v, wgt, s):
        return jax.lax.conv_general_dilated(
            v, wgt, window_strides=(s, s), padding=((1, 1), (1, 1)),
            dimension_numbers=("NCHW", "OIHW", "NCHW"))

    def bn(v):
        mean = jnp.mean(v, axis=(0, 2, 3), keepdims=True)
        var = jnp.mean(jnp.square(v - mean), axis=(0, 2, 3), keepdims=True)
        return (v - mean) * jax.lax.rsqrt(var + EPS)

    out = jnp.maximum(bn(conv(x, w1, stride)), 0.0)
    out = bn(conv(out, w2, 1))

    ident = x
    if stride == 2:
        nb, ci, hh, ww = x.shape
        ident = x.reshape(nb, ci, hh // 2, 2, ww // 2, 2).mean(axis=(3, 5))
    c_out, c_in = w1.shape[0], x.shape[1]
    if c_out > c_in:
        nb, _, hh, ww = ident.shape
        ident = jnp.concatenate(
            [ident, jnp.zeros((nb, c_out - c_in, hh, ww), ident.dtype)], axis=1)
    return jnp.maximum(out + ident, 0.0)


# ---------------------------------- main --------------------------------------

if __name__ == "__main__":
    key = jax.random.PRNGKey(0)
    kx, k1, k2, kx2, k3 = jax.random.split(key, 5)

    # BasicBlock(n_in=4, n_out=8, stride=2): avg-pool + channel-zero-pad shortcut.
    x = jax.random.normal(kx, (2, 4, 16, 16), jnp.float32)
    w1 = jax.random.normal(k1, (8, 4, 3, 3), jnp.float32) * (1.0 / math.sqrt(9 * 4))
    w2 = jax.random.normal(k2, (8, 8, 3, 3), jnp.float32) * (1.0 / math.sqrt(9 * 8))

    fwd2 = jax.jit(functools.partial(basic_block_forward, stride=2))
    out = jax.block_until_ready(fwd2(x, w1, w2))
    assert out.shape == (2, 8, 8, 8), out.shape
    assert bool(jnp.all(jnp.isfinite(out)))
    mad = float(jnp.mean(jnp.abs(out - basic_block_reference(x, w1, w2, stride=2))))
    assert mad < 0.08, f"stride-2 mean-abs-diff vs reference too large: {mad}"

    # BasicBlock(n_in=8, n_out=8, stride=1): pure identity shortcut.
    x1 = jax.random.normal(kx2, (2, 8, 16, 16), jnp.float32)
    w1b = jax.random.normal(k3, (8, 8, 3, 3), jnp.float32) * (1.0 / math.sqrt(9 * 8))

    fwd1 = jax.jit(functools.partial(basic_block_forward, stride=1))
    out1 = jax.block_until_ready(fwd1(x1, w1b, w2))
    assert out1.shape == (2, 8, 16, 16), out1.shape
    assert bool(jnp.all(jnp.isfinite(out1)))
    mad1 = float(jnp.mean(jnp.abs(out1 - basic_block_reference(x1, w1b, w2, stride=1))))
    assert mad1 < 0.08, f"stride-1 mean-abs-diff vs reference too large: {mad1}"

    print("KERNEL_OK")
</pallas_src>

<mosaic_0001>
module attributes {stable_mosaic.version = 11 : i64} {
  func.func @_basic_block_kernel(%arg0: memref<8x9x9x128xf32, #tpu.memory_space<vmem>>, %arg1: memref<9x128x128xbf16, #tpu.memory_space<vmem>>, %arg2: memref<9x128x128xbf16, #tpu.memory_space<vmem>>, %arg3: memref<2x8x8x128xf32, #tpu.memory_space<vmem>>, %arg4: memref<128x128xf32, #tpu.memory_space<vmem>>, %arg5: memref<2x10x10x128xf32, #tpu.memory_space<vmem>>) attributes {dimension_semantics = [], scalar_prefetch = 0 : i64, scratch_operands = 2 : i64, tpu.core_type = #tpu.core_type<tc>} {
    %cst = arith.constant 0.000000e+00 : f32
    %0 = vector.broadcast %cst : f32 to vector<128x128xf32>
    %c0 = arith.constant 0 : index
    %c0_0 = arith.constant 0 : index
    %1 = vector.load %arg4[%c0, %c0_0] : memref<128x128xf32, #tpu.memory_space<vmem>>, vector<128x128xf32>
    tpu.vector_store %arg4[%c0, %c0_0], %0 {strides = array<i32>} : memref<128x128xf32, #tpu.memory_space<vmem>>, vector<128x128xf32>,
    %c0_1 = arith.constant 0 : index
    %c0_2 = arith.constant 0 : index
    %2 = vector.load %arg4[%c0_1, %c0_2] : memref<128x128xf32, #tpu.memory_space<vmem>>, vector<128x128xf32>
    %c0_3 = arith.constant 0 : index
    %c0_4 = arith.constant 0 : index
    %c0_5 = arith.constant 0 : index
    %c0_6 = arith.constant 0 : index
    %3 = vector.load %arg0[%c0_3, %c0_4, %c0_5, %c0_6] : memref<8x9x9x128xf32, #tpu.memory_space<vmem>>, vector<2x8x8x128xf32>
    %4 = arith.truncf %3 : vector<2x8x8x128xf32> to vector<2x8x8x128xbf16>
    %5 = vector.shape_cast %4 : vector<2x8x8x128xbf16> to vector<128x128xbf16>
    %c0_7 = arith.constant 0 : index
    %c0_8 = arith.constant 0 : index
    %c0_9 = arith.constant 0 : index
    %6 = vector.load %arg1[%c0_7, %c0_8, %c0_9] : memref<9x128x128xbf16, #tpu.memory_space<vmem>>, vector<1x128x128xbf16>
    %7 = vector.shape_cast %6 : vector<1x128x128xbf16> to vector<128x128xbf16>
    %cst_10 = arith.constant dense<0.000000e+00> : vector<128x128xf32>
    %8 = tpu.matmul %5, %7, %cst_10 {dimension_numbers = #tpu.dot_dimension_numbers<[1], [0], [0], [1], [0, 0, 1, 1], [], []>} : vector<128x128xbf16>, vector<128x128xbf16>, vector<128x128xf32> -> vector<128x128xf32>
    %9 = arith.addf %2, %8 : vector<128x128xf32>
    %c0_11 = arith.constant 0 : index
    %c0_12 = arith.constant 0 : index
    %10 = vector.load %arg4[%c0_11, %c0_12] : memref<128x128xf32, #tpu.memory_space<vmem>>, vector<128x128xf32>
    tpu.vector_store %arg4[%c0_11, %c0_12], %9 {strides = array<i32>} : memref<128x128xf32, #tpu.memory_space<vmem>>, vector<128x128xf32>,
    %c0_13 = arith.constant 0 : index
    %c0_14 = arith.constant 0 : index
    %11 = vector.load %arg4[%c0_13, %c0_14] : memref<128x128xf32, #tpu.memory_space<vmem>>, vector<128x128xf32>
    %c2 = arith.constant 2 : index
    %c0_15 = arith.constant 0 : index
    %c0_16 = arith.constant 0 : index
    %c0_17 = arith.constant 0 : index
    %12 = vector.load %arg0[%c2, %c0_15, %c0_16, %c0_17] : memref<8x9x9x128xf32, #tpu.memory_space<vmem>>, vector<2x8x8x128xf32>
    %13 = arith.truncf %12 : vector<2x8x8x128xf32> to vector<2x8x8x128xbf16>
    %14 = vector.shape_cast %13 : vector<2x8x8x128xbf16> to vector<128x128xbf16>
    %c1 = arith.constant 1 : index
    %c0_18 = arith.constant 0 : index
    %c0_19 = arith.constant 0 : index
    %15 = vector.load %arg1[%c1, %c0_18, %c0_19] : memref<9x128x128xbf16, #tpu.memory_space<vmem>>, vector<1x128x128xbf16>
    %16 = vector.shape_cast %15 : vector<1x128x128xbf16> to vector<128x128xbf16>
    %cst_20 = arith.constant dense<0.000000e+00> : vector<128x128xf32>
    %17 = tpu.matmul %14, %16, %cst_20 {dimension_numbers = #tpu.dot_dimension_numbers<[1], [0], [0], [1], [0, 0, 1, 1], [], []>} : vector<128x128xbf16>, vector<128x128xbf16>, vector<128x128xf32> -> vector<128x128xf32>
    %18 = arith.addf %11, %17 : vector<128x128xf32>
    %c0_21 = arith.constant 0 : index
    %c0_22 = arith.constant 0 : index
    %19 = vector.load %arg4[%c0_21, %c0_22] : memref<128x128xf32, #tpu.memory_space<vmem>>, vector<128x128xf32>
    tpu.vector_store %arg4[%c0_21, %c0_22], %18 {strides = array<i32>} : memref<128x128xf32, #tpu.memory_space<vmem>>, vector<128x128xf32>,
    %c0_23 = arith.constant 0 : index
    %c0_24 = arith.constant 0 : index
    %20 = vector.load %arg4[%c0_23, %c0_24] : memref<128x128xf32, #tpu.memory_space<vmem>>, vector<128x128xf32>
    %c0_25 = arith.constant 0 : index
    %c0_26 = arith.constant 0 : index
    %c1_27 = arith.constant 1 : index
    %c0_28 = arith.constant 0 : index
    %21 = vector.load %arg0[%c0_25, %c0_26, %c1_27, %c0_28] : memref<8x9x9x128xf32, #tpu.memory_space<vmem>>, vector<2x8x8x128xf32>
    %22 = arith.truncf %21 : vector<2x8x8x128xf32> to vector<2x8x8x128xbf16>
    %23 = vector.shape_cast %22 : vector<2x8x8x128xbf16> to vector<128x128xbf16>
    %c2_29 = arith.constant 2 : index
    %c0_30 = arith.constant 0 : index
    %c0_31 = arith.constant 0 : index
    %24 = vector.load %arg1[%c2_29, %c0_30, %c0_31] : memref<9x128x128xbf16, #tpu.memory_space<vmem>>, vector<1x128x128xbf16>
    %25 = vector.shape_cast %24 : vector<1x128x128xbf16> to vector<128x128xbf16>
    %cst_32 = arith.constant dense<0.000000e+00> : vector<128x128xf32>
    %26 = tpu.matmul %23, %25, %cst_32 {dimension_numbers = #tpu.dot_dimension_numbers<[1], [0], [0], [1], [0, 0, 1, 1], [], []>} : vector<128x128xbf16>, vector<128x128xbf16>, vector<128x128xf32> -> vector<128x128xf32>
    %27 = arith.addf %20, %26 : vector<128x128xf32>
    %c0_33 = arith.constant 0 : index
    %c0_34 = arith.constant 0 : index
    %28 = vector.load %arg4[%c0_33, %c0_34] : memref<128x128xf32, #tpu.memory_space<vmem>>, vector<128x128xf32>
    tpu.vector_store %arg4[%c0_33, %c0_34], %27 {strides = array<i32>} : memref<128x128xf32, #tpu.memory_space<vmem>>, vector<128x128xf32>,
    %c0_35 = arith.constant 0 : index
    %c0_36 = arith.constant 0 : index
    %29 = vector.load %arg4[%c0_35, %c0_36] : memref<128x128xf32, #tpu.memory_space<vmem>>, vector<128x128xf32>
    %c4 = arith.constant 4 : index
    %c0_37 = arith.constant 0 : index
    %c0_38 = arith.constant 0 : index
    %c0_39 = arith.constant 0 : index
    %30 = vector.load %arg0[%c4, %c0_37, %c0_38, %c0_39] : memref<8x9x9x128xf32, #tpu.memory_space<vmem>>, vector<2x8x8x128xf32>
    %31 = arith.truncf %30 : vector<2x8x8x128xf32> to vector<2x8x8x128xbf16>
    %32 = vector.shape_cast %31 : vector<2x8x8x128xbf16> to vector<128x128xbf16>
    %c3 = arith.constant 3 : index
    %c0_40 = arith.constant 0 : index
    %c0_41 = arith.constant 0 : index
    %33 = vector.load %arg1[%c3, %c0_40, %c0_41] : memref<9x128x128xbf16, #tpu.memory_space<vmem>>, vector<1x128x128xbf16>
    %34 = vector.shape_cast %33 : vector<1x128x128xbf16> to vector<128x128xbf16>
    %cst_42 = arith.constant dense<0.000000e+00> : vector<128x128xf32>
    %35 = tpu.matmul %32, %34, %cst_42 {dimension_numbers = #tpu.dot_dimension_numbers<[1], [0], [0], [1], [0, 0, 1, 1], [], []>} : vector<128x128xbf16>, vector<128x128xbf16>, vector<128x128xf32> -> vector<128x128xf32>
    %36 = arith.addf %29, %35 : vector<128x128xf32>
    %c0_43 = arith.constant 0 : index
    %c0_44 = arith.constant 0 : index
    %37 = vector.load %arg4[%c0_43, %c0_44] : memref<128x128xf32, #tpu.memory_space<vmem>>, vector<128x128xf32>
    tpu.vector_store %arg4[%c0_43, %c0_44], %36 {strides = array<i32>} : memref<128x128xf32, #tpu.memory_space<vmem>>, vector<128x128xf32>,
    %c0_45 = arith.constant 0 : index
    %c0_46 = arith.constant 0 : index
    %38 = vector.load %arg4[%c0_45, %c0_46] : memref<128x128xf32, #tpu.memory_space<vmem>>, vector<128x128xf32>
    %c6 = arith.constant 6 : index
    %c0_47 = arith.constant 0 : index
    %c0_48 = arith.constant 0 : index
    %c0_49 = arith.constant 0 : index
    %39 = vector.load %arg0[%c6, %c0_47, %c0_48, %c0_49] : memref<8x9x9x128xf32, #tpu.memory_space<vmem>>, vector<2x8x8x128xf32>
    %40 = arith.truncf %39 : vector<2x8x8x128xf32> to vector<2x8x8x128xbf16>
    %41 = vector.shape_cast %40 : vector<2x8x8x128xbf16> to vector<128x128xbf16>
    %c4_50 = arith.constant 4 : index
    %c0_51 = arith.constant 0 : index
    %c0_52 = arith.constant 0 : index
    %42 = vector.load %arg1[%c4_50, %c0_51, %c0_52] : memref<9x128x128xbf16, #tpu.memory_space<vmem>>, vector<1x128x128xbf16>
    %43 = vector.shape_cast %42 : vector<1x128x128xbf16> to vector<128x128xbf16>
    %cst_53 = arith.constant dense<0.000000e+00> : vector<128x128xf32>
    %44 = tpu.matmul %41, %43, %cst_53 {dimension_numbers = #tpu.dot_dimension_numbers<[1], [0], [0], [1], [0, 0, 1, 1], [], []>} : vector<128x128xbf16>, vector<128x128xbf16>, vector<128x128xf32> -> vector<128x128xf32>
    %45 = arith.addf %38, %44 : vector<128x128xf32>
    %c0_54 = arith.constant 0 : index
    %c0_55 = arith.constant 0 : index
    %46 = vector.load %arg4[%c0_54, %c0_55] : memref<128x128xf32, #tpu.memory_space<vmem>>, vector<128x128xf32>
    tpu.vector_store %arg4[%c0_54, %c0_55], %45 {strides = array<i32>} : memref<128x128xf32, #tpu.memory_space<vmem>>, vector<128x128xf32>,
    %c0_56 = arith.constant 0 : index
    %c0_57 = arith.constant 0 : index
    %47 = vector.load %arg4[%c0_56, %c0_57] : memref<128x128xf32, #tpu.memory_space<vmem>>, vector<128x128xf32>
    %c4_58 = arith.constant 4 : index
    %c0_59 = arith.constant 0 : index
    %c1_60 = arith.constant 1 : index
    %c0_61 = arith.constant 0 : index
    %48 = vector.load %arg0[%c4_58, %c0_59, %c1_60, %c0_61] : memref<8x9x9x128xf32, #tpu.memory_space<vmem>>, vector<2x8x8x128xf32>
    %49 = arith.truncf %48 : vector<2x8x8x128xf32> to vector<2x8x8x128xbf16>
    %50 = vector.shape_cast %49 : vector<2x8x8x128xbf16> to vector<128x128xbf16>
    %c5 = arith.constant 5 : index
    %c0_62 = arith.constant 0 : index
    %c0_63 = arith.constant 0 : index
    %51 = vector.load %arg1[%c5, %c0_62, %c0_63] : memref<9x128x128xbf16, #tpu.memory_space<vmem>>, vector<1x128x128xbf16>
    %52 = vector.shape_cast %51 : vector<1x128x128xbf16> to vector<128x128xbf16>
    %cst_64 = arith.constant dense<0.000000e+00> : vector<128x128xf32>
    %53 = tpu.matmul %50, %52, %cst_64 {dimension_numbers = #tpu.dot_dimension_numbers<[1], [0], [0], [1], [0, 0, 1, 1], [], []>} : vector<128x128xbf16>, vector<128x128xbf16>, vector<128x128xf32> -> vector<128x128xf32>
    %54 = arith.addf %47, %53 : vector<128x128xf32>
    %c0_65 = arith.constant 0 : index
    %c0_66 = arith.constant 0 : index
    %55 = vector.load %arg4[%c0_65, %c0_66] : memref<128x128xf32, #tpu.memory_space<vmem>>, vector<128x128xf32>
    tpu.vector_store %arg4[%c0_65, %c0_66], %54 {strides = array<i32>} : memref<128x128xf32, #tpu.memory_space<vmem>>, vector<128x128xf32>,
    %c0_67 = arith.constant 0 : index
    %c0_68 = arith.constant 0 : index
    %56 = vector.load %arg4[%c0_67, %c0_68] : memref<128x128xf32, #tpu.memory_space<vmem>>, vector<128x128xf32>
    %c0_69 = arith.constant 0 : index
    %c1_70 = arith.constant 1 : index
    %c0_71 = arith.constant 0 : index
    %c0_72 = arith.constant 0 : index
    %57 = vector.load %arg0[%c0_69, %c1_70, %c0_71, %c0_72] : memref<8x9x9x128xf32, #tpu.memory_space<vmem>>, vector<2x8x8x128xf32>
    %58 = arith.truncf %57 : vector<2x8x8x128xf32> to vector<2x8x8x128xbf16>
    %59 = vector.shape_cast %58 : vector<2x8x8x128xbf16> to vector<128x128xbf16>
    %c6_73 = arith.constant 6 : index
    %c0_74 = arith.constant 0 : index
    %c0_75 = arith.constant 0 : index
    %60 = vector.load %arg1[%c6_73, %c0_74, %c0_75] : memref<9x128x128xbf16, #tpu.memory_space<vmem>>, vector<1x128x128xbf16>
    %61 = vector.shape_cast %60 : vector<1x128x128xbf16> to vector<128x128xbf16>
    %cst_76 = arith.constant dense<0.000000e+00> : vector<128x128xf32>
    %62 = tpu.matmul %59, %61, %cst_76 {dimension_numbers = #tpu.dot_dimension_numbers<[1], [0], [0], [1], [0, 0, 1, 1], [], []>} : vector<128x128xbf16>, vector<128x128xbf16>, vector<128x128xf32> -> vector<128x128xf32>
    %63 = arith.addf %56, %62 : vector<128x128xf32>
    %c0_77 = arith.constant 0 : index
    %c0_78 = arith.constant 0 : index
    %64 = vector.load %arg4[%c0_77, %c0_78] : memref<128x128xf32, #tpu.memory_space<vmem>>, vector<128x128xf32>
    tpu.vector_store %arg4[%c0_77, %c0_78], %63 {strides = array<i32>} : memref<128x128xf32, #tpu.memory_space<vmem>>, vector<128x128xf32>,
    %c0_79 = arith.constant 0 : index
    %c0_80 = arith.constant 0 : index
    %65 = vector.load %arg4[%c0_79, %c0_80] : memref<128x128xf32, #tpu.memory_space<vmem>>, vector<128x128xf32>
    %c2_81 = arith.constant 2 : index
    %c1_82 = arith.constant 1 : index
    %c0_83 = arith.constant 0 : index
    %c0_84 = arith.constant 0 : index
    %66 = vector.load %arg0[%c2_81, %c1_82, %c0_83, %c0_84] : memref<8x9x9x128xf32, #tpu.memory_space<vmem>>, vector<2x8x8x128xf32>
    %67 = arith.truncf %66 : vector<2x8x8x128xf32> to vector<2x8x8x128xbf16>
    %68 = vector.shape_cast %67 : vector<2x8x8x128xbf16> to vector<128x128xbf16>
    %c7 = arith.constant 7 : index
    %c0_85 = arith.constant 0 : index
    %c0_86 = arith.constant 0 : index
    %69 = vector.load %arg1[%c7, %c0_85, %c0_86] : memref<9x128x128xbf16, #tpu.memory_space<vmem>>, vector<1x128x128xbf16>
    %70 = vector.shape_cast %69 : vector<1x128x128xbf16> to vector<128x128xbf16>
    %cst_87 = arith.constant dense<0.000000e+00> : vector<128x128xf32>
    %71 = tpu.matmul %68, %70, %cst_87 {dimension_numbers = #tpu.dot_dimension_numbers<[1], [0], [0], [1], [0, 0, 1, 1], [], []>} : vector<128x128xbf16>, vector<128x128xbf16>, vector<128x128xf32> -> vector<128x128xf32>
    %72 = arith.addf %65, %71 : vector<128x128xf32>
    %c0_88 = arith.constant 0 : index
    %c0_89 = arith.constant 0 : index
    %73 = vector.load %arg4[%c0_88, %c0_89] : memref<128x128xf32, #tpu.memory_space<vmem>>, vector<128x128xf32>
    tpu.vector_store %arg4[%c0_88, %c0_89], %72 {strides = array<i32>} : memref<128x128xf32, #tpu.memory_space<vmem>>, vector<128x128xf32>,
    %c0_90 = arith.constant 0 : index
    %c0_91 = arith.constant 0 : index
    %74 = vector.load %arg4[%c0_90, %c0_91] : memref<128x128xf32, #tpu.memory_space<vmem>>, vector<128x128xf32>
    %c0_92 = arith.constant 0 : index
    %c1_93 = arith.constant 1 : index
    %c1_94 = arith.constant 1 : index
    %c0_95 = arith.constant 0 : index
    %75 = vector.load %arg0[%c0_92, %c1_93, %c1_94, %c0_95] : memref<8x9x9x128xf32, #tpu.memory_space<vmem>>, vector<2x8x8x128xf32>
    %76 = arith.truncf %75 : vector<2x8x8x128xf32> to vector<2x8x8x128xbf16>
    %77 = vector.shape_cast %76 : vector<2x8x8x128xbf16> to vector<128x128xbf16>
    %c8 = arith.constant 8 : index
    %c0_96 = arith.constant 0 : index
    %c0_97 = arith.constant 0 : index
    %78 = vector.load %arg1[%c8, %c0_96, %c0_97] : memref<9x128x128xbf16, #tpu.memory_space<vmem>>, vector<1x128x128xbf16>
    %79 = vector.shape_cast %78 : vector<1x128x128xbf16> to vector<128x128xbf16>
    %cst_98 = arith.constant dense<0.000000e+00> : vector<128x128xf32>
    %80 = tpu.matmul %77, %79, %cst_98 {dimension_numbers = #tpu.dot_dimension_numbers<[1], [0], [0], [1], [0, 0, 1, 1], [], []>} : vector<128x128xbf16>, vector<128x128xbf16>, vector<128x128xf32> -> vector<128x128xf32>
    %81 = arith.addf %74, %80 : vector<128x128xf32>
    %c0_99 = arith.constant 0 : index
    %c0_100 = arith.constant 0 : index
    %82 = vector.load %arg4[%c0_99, %c0_100] : memref<128x128xf32, #tpu.memory_space<vmem>>, vector<128x128xf32>
    tpu.vector_store %arg4[%c0_99, %c0_100], %81 {strides = array<i32>} : memref<128x128xf32, #tpu.memory_space<vmem>>, vector<128x128xf32>,
    %c0_101 = arith.constant 0 : index
    %c0_102 = arith.constant 0 : index
    %83 = vector.load %arg4[%c0_101, %c0_102] : memref<128x128xf32, #tpu.memory_space<vmem>>, vector<128x128xf32>
    %cst_103 = arith.constant dense<0.000000e+00> : vector<128xf32>
    %84 = vector.multi_reduction <add>, %83, %cst_103 [0] : vector<128x128xf32> to vector<128xf32>
    %85 = vector.shape_cast %84 : vector<128xf32> to vector<1x128xf32>
    %cst_104 = arith.constant 1.280000e+02 : f32
    %86 = vector.broadcast %cst_104 : f32 to vector<1x128xf32>
    %87 = arith.divf %85, %86 : vector<1x128xf32>
    %88 = arith.mulf %83, %83 : vector<128x128xf32>
    %cst_105 = arith.constant dense<0.000000e+00> : vector<128xf32>
    %89 = vector.multi_reduction <add>, %88, %cst_105 [0] : vector<128x128xf32> to vector<128xf32>
    %90 = vector.shape_cast %89 : vector<128xf32> to vector<1x128xf32>
    %cst_106 = arith.constant 1.280000e+02 : f32
    %91 = vector.broadcast %cst_106 : f32 to vector<1x128xf32>
    %92 = arith.divf %90, %91 : vector<1x128xf32>
    %93 = arith.mulf %87, %87 : vector<1x128xf32>
    %94 = arith.subf %92, %93 : vector<1x128xf32>
    %cst_107 = arith.constant 0.000000e+00 : f32
    %95 = vector.broadcast %cst_107 : f32 to vector<1x128xf32>
    %96 = arith.maximumf %94, %95 : vector<1x128xf32>
    %97 = vector.broadcast %87 : vector<1x128xf32> to vector<128x128xf32>
    %98 = arith.subf %83, %97 : vector<128x128xf32>
    %cst_108 = arith.constant 9.99999974E-6 : f32
    %99 = vector.broadcast %cst_108 : f32 to vector<1x128xf32>
    %100 = arith.addf %96, %99 : vector<1x128xf32>
    %101 = math.rsqrt %100 : vector<1x128xf32>
    %102 = vector.broadcast %101 : vector<1x128xf32> to vector<128x128xf32>
    %103 = arith.mulf %98, %102 : vector<128x128xf32>
    %cst_109 = arith.constant 0.000000e+00 : f32
    %104 = vector.broadcast %cst_109 : f32 to vector<128x128xf32>
    %105 = arith.maximumf %103, %104 : vector<128x128xf32>
    %cst_110 = arith.constant 0.000000e+00 : f32
    %106 = vector.broadcast %cst_110 : f32 to vector<2x10x10x128xf32>
    %c0_111 = arith.constant 0 : index
    %c0_112 = arith.constant 0 : index
    %c0_113 = arith.constant 0 : index
    %c0_114 = arith.constant 0 : index
    %107 = vector.load %arg5[%c0_111, %c0_112, %c0_113, %c0_114] : memref<2x10x10x128xf32, #tpu.memory_space<vmem>>, vector<2x10x10x128xf32>
    tpu.vector_store %arg5[%c0_111, %c0_112, %c0_113, %c0_114], %106 {strides = array<i32>} : memref<2x10x10x128xf32, #tpu.memory_space<vmem>>, vector<2x10x10x128xf32>,
    %108 = vector.shape_cast %105 : vector<128x128xf32> to vector<2x8x8x128xf32>
    %c0_115 = arith.constant 0 : index
    %c1_116 = arith.constant 1 : index
    %c1_117 = arith.constant 1 : index
    %c0_118 = arith.constant 0 : index
    %109 = vector.load %arg5[%c0_115, %c1_116, %c1_117, %c0_118] : memref<2x10x10x128xf32, #tpu.memory_space<vmem>>, vector<2x8x8x128xf32>
    tpu.vector_store %arg5[%c0_115, %c1_116, %c1_117, %c0_118], %108 {strides = array<i32>} : memref<2x10x10x128xf32, #tpu.memory_space<vmem>>, vector<2x8x8x128xf32>,
    %cst_119 = arith.constant 0.000000e+00 : f32
    %110 = vector.broadcast %cst_119 : f32 to vector<128x128xf32>
    %c0_120 = arith.constant 0 : index
    %c0_121 = arith.constant 0 : index
    %111 = vector.load %arg4[%c0_120, %c0_121] : memref<128x128xf32, #tpu.memory_space<vmem>>, vector<128x128xf32>
    tpu.vector_store %arg4[%c0_120, %c0_121], %110 {strides = array<i32>} : memref<128x128xf32, #tpu.memory_space<vmem>>, vector<128x128xf32>,
    %c0_122 = arith.constant 0 : index
    %c0_123 = arith.constant 0 : index
    %c0_124 = arith.constant 0 : index
    %c0_125 = arith.constant 0 : index
    %112 = vector.load %arg5[%c0_122, %c0_123, %c0_124, %c0_125] : memref<2x10x10x128xf32, #tpu.memory_space<vmem>>, vector<2x8x8x128xf32>
    %c0_126 = arith.constant 0 : index
    %c0_127 = arith.constant 0 : index
    %113 = vector.load %arg4[%c0_126, %c0_127] : memref<128x128xf32, #tpu.memory_space<vmem>>, vector<128x128xf32>
    %114 = arith.truncf %112 : vector<2x8x8x128xf32> to vector<2x8x8x128xbf16>
    %115 = vector.shape_cast %114 : vector<2x8x8x128xbf16> to vector<128x128xbf16>
    %c0_128 = arith.constant 0 : index
    %c0_129 = arith.constant 0 : index
    %c0_130 = arith.constant 0 : index
    %116 = vector.load %arg2[%c0_128, %c0_129, %c0_130] : memref<9x128x128xbf16, #tpu.memory_space<vmem>>, vector<1x128x128xbf16>
    %117 = vector.shape_cast %116 : vector<1x128x128xbf16> to vector<128x128xbf16>
    %cst_131 = arith.constant dense<0.000000e+00> : vector<128x128xf32>
    %118 = tpu.matmul %115, %117, %cst_131 {dimension_numbers = #tpu.dot_dimension_numbers<[1], [0], [0], [1], [0, 0, 1, 1], [], []>} : vector<128x128xbf16>, vector<128x128xbf16>, vector<128x128xf32> -> vector<128x128xf32>
    %119 = arith.addf %113, %118 : vector<128x128xf32>
    %c0_132 = arith.constant 0 : index
    %c0_133 = arith.constant 0 : index
    %120 = vector.load %arg4[%c0_132, %c0_133] : memref<128x128xf32, #tpu.memory_space<vmem>>, vector<128x128xf32>
    tpu.vector_store %arg4[%c0_132, %c0_133], %119 {strides = array<i32>} : memref<128x128xf32, #tpu.memory_space<vmem>>, vector<128x128xf32>,
    %c0_134 = arith.constant 0 : index
    %c0_135 = arith.constant 0 : index
    %c1_136 = arith.constant 1 : index
    %c0_137 = arith.constant 0 : index
    %121 = vector.load %arg5[%c0_134, %c0_135, %c1_136, %c0_137] : memref<2x10x10x128xf32, #tpu.memory_space<vmem>>, vector<2x8x8x128xf32>
    %c0_138 = arith.constant 0 : index
    %c0_139 = arith.constant 0 : index
    %122 = vector.load %arg4[%c0_138, %c0_139] : memref<128x128xf32, #tpu.memory_space<vmem>>, vector<128x128xf32>
    %123 = arith.truncf %121 : vector<2x8x8x128xf32> to vector<2x8x8x128xbf16>
    %124 = vector.shape_cast %123 : vector<2x8x8x128xbf16> to vector<128x128xbf16>
    %c1_140 = arith.constant 1 : index
    %c0_141 = arith.constant 0 : index
    %c0_142 = arith.constant 0 : index
    %125 = vector.load %arg2[%c1_140, %c0_141, %c0_142] : memref<9x128x128xbf16, #tpu.memory_space<vmem>>, vector<1x128x128xbf16>
    %126 = vector.shape_cast %125 : vector<1x128x128xbf16> to vector<128x128xbf16>
    %cst_143 = arith.constant dense<0.000000e+00> : vector<128x128xf32>
    %127 = tpu.matmul %124, %126, %cst_143 {dimension_numbers = #tpu.dot_dimension_numbers<[1], [0], [0], [1], [0, 0, 1, 1], [], []>} : vector<128x128xbf16>, vector<128x128xbf16>, vector<128x128xf32> -> vector<128x128xf32>
    %128 = arith.addf %122, %127 : vector<128x128xf32>
    %c0_144 = arith.constant 0 : index
    %c0_145 = arith.constant 0 : index
    %129 = vector.load %arg4[%c0_144, %c0_145] : memref<128x128xf32, #tpu.memory_space<vmem>>, vector<128x128xf32>
    tpu.vector_store %arg4[%c0_144, %c0_145], %128 {strides = array<i32>} : memref<128x128xf32, #tpu.memory_space<vmem>>, vector<128x128xf32>,
    %c0_146 = arith.constant 0 : index
    %c0_147 = arith.constant 0 : index
    %c2_148 = arith.constant 2 : index
    %c0_149 = arith.constant 0 : index
    %130 = vector.load %arg5[%c0_146, %c0_147, %c2_148, %c0_149] : memref<2x10x10x128xf32, #tpu.memory_space<vmem>>, vector<2x8x8x128xf32>
    %c0_150 = arith.constant 0 : index
    %c0_151 = arith.constant 0 : index
    %131 = vector.load %arg4[%c0_150, %c0_151] : memref<128x128xf32, #tpu.memory_space<vmem>>, vector<128x128xf32>
    %132 = arith.truncf %130 : vector<2x8x8x128xf32> to vector<2x8x8x128xbf16>
    %133 = vector.shape_cast %132 : vector<2x8x8x128xbf16> to vector<128x128xbf16>
    %c2_152 = arith.constant 2 : index
    %c0_153 = arith.constant 0 : index
    %c0_154 = arith.constant 0 : index
    %134 = vector.load %arg2[%c2_152, %c0_153, %c0_154] : memref<9x128x128xbf16, #tpu.memory_space<vmem>>, vector<1x128x128xbf16>
    %135 = vector.shape_cast %134 : vector<1x128x128xbf16> to vector<128x128xbf16>
    %cst_155 = arith.constant dense<0.000000e+00> : vector<128x128xf32>
    %136 = tpu.matmul %133, %135, %cst_155 {dimension_numbers = #tpu.dot_dimension_numbers<[1], [0], [0], [1], [0, 0, 1, 1], [], []>} : vector<128x128xbf16>, vector<128x128xbf16>, vector<128x128xf32> -> vector<128x128xf32>
    %137 = arith.addf %131, %136 : vector<128x128xf32>
    %c0_156 = arith.constant 0 : index
    %c0_157 = arith.constant 0 : index
    %138 = vector.load %arg4[%c0_156, %c0_157] : memref<128x128xf32, #tpu.memory_space<vmem>>, vector<128x128xf32>
    tpu.vector_store %arg4[%c0_156, %c0_157], %137 {strides = array<i32>} : memref<128x128xf32, #tpu.memory_space<vmem>>, vector<128x128xf32>,
    %c0_158 = arith.constant 0 : index
    %c1_159 = arith.constant 1 : index
    %c0_160 = arith.constant 0 : index
    %c0_161 = arith.constant 0 : index
    %139 = vector.load %arg5[%c0_158, %c1_159, %c0_160, %c0_161] : memref<2x10x10x128xf32, #tpu.memory_space<vmem>>, vector<2x8x8x128xf32>
    %c0_162 = arith.constant 0 : index
    %c0_163 = arith.constant 0 : index
    %140 = vector.load %arg4[%c0_162, %c0_163] : memref<128x128xf32, #tpu.memory_space<vmem>>, vector<128x128xf32>
    %141 = arith.truncf %139 : vector<2x8x8x128xf32> to vector<2x8x8x128xbf16>
    %142 = vector.shape_cast %141 : vector<2x8x8x128xbf16> to vector<128x128xbf16>
    %c3_164 = arith.constant 3 : index
    %c0_165 = arith.constant 0 : index
    %c0_166 = arith.constant 0 : index
    %143 = vector.load %arg2[%c3_164, %c0_165, %c0_166] : memref<9x128x128xbf16, #tpu.memory_space<vmem>>, vector<1x128x128xbf16>
    %144 = vector.shape_cast %143 : vector<1x128x128xbf16> to vector<128x128xbf16>
    %cst_167 = arith.constant dense<0.000000e+00> : vector<128x128xf32>
    %145 = tpu.matmul %142, %144, %cst_167 {dimension_numbers = #tpu.dot_dimension_numbers<[1], [0], [0], [1], [0, 0, 1, 1], [], []>} : vector<128x128xbf16>, vector<128x128xbf16>, vector<128x128xf32> -> vector<128x128xf32>
    %146 = arith.addf %140, %145 : vector<128x128xf32>
    %c0_168 = arith.constant 0 : index
    %c0_169 = arith.constant 0 : index
    %147 = vector.load %arg4[%c0_168, %c0_169] : memref<128x128xf32, #tpu.memory_space<vmem>>, vector<128x128xf32>
    tpu.vector_store %arg4[%c0_168, %c0_169], %146 {strides = array<i32>} : memref<128x128xf32, #tpu.memory_space<vmem>>, vector<128x128xf32>,
    %c0_170 = arith.constant 0 : index
    %c1_171 = arith.constant 1 : index
    %c1_172 = arith.constant 1 : index
    %c0_173 = arith.constant 0 : index
    %148 = vector.load %arg5[%c0_170, %c1_171, %c1_172, %c0_173] : memref<2x10x10x128xf32, #tpu.memory_space<vmem>>, vector<2x8x8x128xf32>
    %c0_174 = arith.constant 0 : index
    %c0_175 = arith.constant 0 : index
    %149 = vector.load %arg4[%c0_174, %c0_175] : memref<128x128xf32, #tpu.memory_space<vmem>>, vector<128x128xf32>
    %150 = arith.truncf %148 : vector<2x8x8x128xf32> to vector<2x8x8x128xbf16>
    %151 = vector.shape_cast %150 : vector<2x8x8x128xbf16> to vector<128x128xbf16>
    %c4_176 = arith.constant 4 : index
    %c0_177 = arith.constant 0 : index
    %c0_178 = arith.constant 0 : index
    %152 = vector.load %arg2[%c4_176, %c0_177, %c0_178] : memref<9x128x128xbf16, #tpu.memory_space<vmem>>, vector<1x128x128xbf16>
    %153 = vector.shape_cast %152 : vector<1x128x128xbf16> to vector<128x128xbf16>
    %cst_179 = arith.constant dense<0.000000e+00> : vector<128x128xf32>
    %154 = tpu.matmul %151, %153, %cst_179 {dimension_numbers = #tpu.dot_dimension_numbers<[1], [0], [0], [1], [0, 0, 1, 1], [], []>} : vector<128x128xbf16>, vector<128x128xbf16>, vector<128x128xf32> -> vector<128x128xf32>
    %155 = arith.addf %149, %154 : vector<128x128xf32>
    %c0_180 = arith.constant 0 : index
    %c0_181 = arith.constant 0 : index
    %156 = vector.load %arg4[%c0_180, %c0_181] : memref<128x128xf32, #tpu.memory_space<vmem>>, vector<128x128xf32>
    tpu.vector_store %arg4[%c0_180, %c0_181], %155 {strides = array<i32>} : memref<128x128xf32, #tpu.memory_space<vmem>>, vector<128x128xf32>,
    %c0_182 = arith.constant 0 : index
    %c1_183 = arith.constant 1 : index
    %c2_184 = arith.constant 2 : index
    %c0_185 = arith.constant 0 : index
    %157 = vector.load %arg5[%c0_182, %c1_183, %c2_184, %c0_185] : memref<2x10x10x128xf32, #tpu.memory_space<vmem>>, vector<2x8x8x128xf32>
    %c0_186 = arith.constant 0 : index
    %c0_187 = arith.constant 0 : index
    %158 = vector.load %arg4[%c0_186, %c0_187] : memref<128x128xf32, #tpu.memory_space<vmem>>, vector<128x128xf32>
    %159 = arith.truncf %157 : vector<2x8x8x128xf32> to vector<2x8x8x128xbf16>
    %160 = vector.shape_cast %159 : vector<2x8x8x128xbf16> to vector<128x128xbf16>
    %c5_188 = arith.constant 5 : index
    %c0_189 = arith.constant 0 : index
    %c0_190 = arith.constant 0 : index
    %161 = vector.load %arg2[%c5_188, %c0_189, %c0_190] : memref<9x128x128xbf16, #tpu.memory_space<vmem>>, vector<1x128x128xbf16>
    %162 = vector.shape_cast %161 : vector<1x128x128xbf16> to vector<128x128xbf16>
    %cst_191 = arith.constant dense<0.000000e+00> : vector<128x128xf32>
    %163 = tpu.matmul %160, %162, %cst_191 {dimension_numbers = #tpu.dot_dimension_numbers<[1], [0], [0], [1], [0, 0, 1, 1], [], []>} : vector<128x128xbf16>, vector<128x128xbf16>, vector<128x128xf32> -> vector<128x128xf32>
    %164 = arith.addf %158, %163 : vector<128x128xf32>
    %c0_192 = arith.constant 0 : index
    %c0_193 = arith.constant 0 : index
    %165 = vector.load %arg4[%c0_192, %c0_193] : memref<128x128xf32, #tpu.memory_space<vmem>>, vector<128x128xf32>
    tpu.vector_store %arg4[%c0_192, %c0_193], %164 {strides = array<i32>} : memref<128x128xf32, #tpu.memory_space<vmem>>, vector<128x128xf32>,
    %c0_194 = arith.constant 0 : index
    %c2_195 = arith.constant 2 : index
    %c0_196 = arith.constant 0 : index
    %c0_197 = arith.constant 0 : index
    %166 = vector.load %arg5[%c0_194, %c2_195, %c0_196, %c0_197] : memref<2x10x10x128xf32, #tpu.memory_space<vmem>>, vector<2x8x8x128xf32>
    %c0_198 = arith.constant 0 : index
    %c0_199 = arith.constant 0 : index
    %167 = vector.load %arg4[%c0_198, %c0_199] : memref<128x128xf32, #tpu.memory_space<vmem>>, vector<128x128xf32>
    %168 = arith.truncf %166 : vector<2x8x8x128xf32> to vector<2x8x8x128xbf16>
    %169 = vector.shape_cast %168 : vector<2x8x8x128xbf16> to vector<128x128xbf16>
    %c6_200 = arith.constant 6 : index
    %c0_201 = arith.constant 0 : index
    %c0_202 = arith.constant 0 : index
    %170 = vector.load %arg2[%c6_200, %c0_201, %c0_202] : memref<9x128x128xbf16, #tpu.memory_space<vmem>>, vector<1x128x128xbf16>
    %171 = vector.shape_cast %170 : vector<1x128x128xbf16> to vector<128x128xbf16>
    %cst_203 = arith.constant dense<0.000000e+00> : vector<128x128xf32>
    %172 = tpu.matmul %169, %171, %cst_203 {dimension_numbers = #tpu.dot_dimension_numbers<[1], [0], [0], [1], [0, 0, 1, 1], [], []>} : vector<128x128xbf16>, vector<128x128xbf16>, vector<128x128xf32> -> vector<128x128xf32>
    %173 = arith.addf %167, %172 : vector<128x128xf32>
    %c0_204 = arith.constant 0 : index
    %c0_205 = arith.constant 0 : index
    %174 = vector.load %arg4[%c0_204, %c0_205] : memref<128x128xf32, #tpu.memory_space<vmem>>, vector<128x128xf32>
    tpu.vector_store %arg4[%c0_204, %c0_205], %173 {strides = array<i32>} : memref<128x128xf32, #tpu.memory_space<vmem>>, vector<128x128xf32>,
    %c0_206 = arith.constant 0 : index
    %c2_207 = arith.constant 2 : index
    %c1_208 = arith.constant 1 : index
    %c0_209 = arith.constant 0 : index
    %175 = vector.load %arg5[%c0_206, %c2_207, %c1_208, %c0_209] : memref<2x10x10x128xf32, #tpu.memory_space<vmem>>, vector<2x8x8x128xf32>
    %c0_210 = arith.constant 0 : index
    %c0_211 = arith.constant 0 : index
    %176 = vector.load %arg4[%c0_210, %c0_211] : memref<128x128xf32, #tpu.memory_space<vmem>>, vector<128x128xf32>
    %177 = arith.truncf %175 : vector<2x8x8x128xf32> to vector<2x8x8x128xbf16>
    %178 = vector.shape_cast %177 : vector<2x8x8x128xbf16> to vector<128x128xbf16>
    %c7_212 = arith.constant 7 : index
    %c0_213 = arith.constant 0 : index
    %c0_214 = arith.constant 0 : index
    %179 = vector.load %arg2[%c7_212, %c0_213, %c0_214] : memref<9x128x128xbf16, #tpu.memory_space<vmem>>, vector<1x128x128xbf16>
    %180 = vector.shape_cast %179 : vector<1x128x128xbf16> to vector<128x128xbf16>
    %cst_215 = arith.constant dense<0.000000e+00> : vector<128x128xf32>
    %181 = tpu.matmul %178, %180, %cst_215 {dimension_numbers = #tpu.dot_dimension_numbers<[1], [0], [0], [1], [0, 0, 1, 1], [], []>} : vector<128x128xbf16>, vector<128x128xbf16>, vector<128x128xf32> -> vector<128x128xf32>
    %182 = arith.addf %176, %181 : vector<128x128xf32>
    %c0_216 = arith.constant 0 : index
    %c0_217 = arith.constant 0 : index
    %183 = vector.load %arg4[%c0_216, %c0_217] : memref<128x128xf32, #tpu.memory_space<vmem>>, vector<128x128xf32>
    tpu.vector_store %arg4[%c0_216, %c0_217], %182 {strides = array<i32>} : memref<128x128xf32, #tpu.memory_space<vmem>>, vector<128x128xf32>,
    %c0_218 = arith.constant 0 : index
    %c2_219 = arith.constant 2 : index
    %c2_220 = arith.constant 2 : index
    %c0_221 = arith.constant 0 : index
    %184 = vector.load %arg5[%c0_218, %c2_219, %c2_220, %c0_221] : memref<2x10x10x128xf32, #tpu.memory_space<vmem>>, vector<2x8x8x128xf32>
    %c0_222 = arith.constant 0 : index
    %c0_223 = arith.constant 0 : index
    %185 = vector.load %arg4[%c0_222, %c0_223] : memref<128x128xf32, #tpu.memory_space<vmem>>, vector<128x128xf32>
    %186 = arith.truncf %184 : vector<2x8x8x128xf32> to vector<2x8x8x128xbf16>
    %187 = vector.shape_cast %186 : vector<2x8x8x128xbf16> to vector<128x128xbf16>
    %c8_224 = arith.constant 8 : index
    %c0_225 = arith.constant 0 : index
    %c0_226 = arith.constant 0 : index
    %188 = vector.load %arg2[%c8_224, %c0_225, %c0_226] : memref<9x128x128xbf16, #tpu.memory_space<vmem>>, vector<1x128x128xbf16>
    %189 = vector.shape_cast %188 : vector<1x128x128xbf16> to vector<128x128xbf16>
    %cst_227 = arith.constant dense<0.000000e+00> : vector<128x128xf32>
    %190 = tpu.matmul %187, %189, %cst_227 {dimension_numbers = #tpu.dot_dimension_numbers<[1], [0], [0], [1], [0, 0, 1, 1], [], []>} : vector<128x128xbf16>, vector<128x128xbf16>, vector<128x128xf32> -> vector<128x128xf32>
    %191 = arith.addf %185, %190 : vector<128x128xf32>
    %c0_228 = arith.constant 0 : index
    %c0_229 = arith.constant 0 : index
    %192 = vector.load %arg4[%c0_228, %c0_229] : memref<128x128xf32, #tpu.memory_space<vmem>>, vector<128x128xf32>
    tpu.vector_store %arg4[%c0_228, %c0_229], %191 {strides = array<i32>} : memref<128x128xf32, #tpu.memory_space<vmem>>, vector<128x128xf32>,
    %c0_230 = arith.constant 0 : index
    %c0_231 = arith.constant 0 : index
    %193 = vector.load %arg4[%c0_230, %c0_231] : memref<128x128xf32, #tpu.memory_space<vmem>>, vector<128x128xf32>
    %cst_232 = arith.constant dense<0.000000e+00> : vector<128xf32>
    %194 = vector.multi_reduction <add>, %193, %cst_232 [0] : vector<128x128xf32> to vector<128xf32>
    %195 = vector.shape_cast %194 : vector<128xf32> to vector<1x128xf32>
    %cst_233 = arith.constant 1.280000e+02 : f32
    %196 = vector.broadcast %cst_233 : f32 to vector<1x128xf32>
    %197 = arith.divf %195, %196 : vector<1x128xf32>
    %198 = arith.mulf %193, %193 : vector<128x128xf32>
    %cst_234 = arith.constant dense<0.000000e+00> : vector<128xf32>
    %199 = vector.multi_reduction <add>, %198, %cst_234 [0] : vector<128x128xf32> to vector<128xf32>
    %200 = vector.shape_cast %199 : vector<128xf32> to vector<1x128xf32>
    %cst_235 = arith.constant 1.280000e+02 : f32
    %201 = vector.broadcast %cst_235 : f32 to vector<1x128xf32>
    %202 = arith.divf %200, %201 : vector<1x128xf32>
    %203 = arith.mulf %197, %197 : vector<1x128xf32>
    %204 = arith.subf %202, %203 : vector<1x128xf32>
    %cst_236 = arith.constant 0.000000e+00 : f32
    %205 = vector.broadcast %cst_236 : f32 to vector<1x128xf32>
    %206 = arith.maximumf %204, %205 : vector<1x128xf32>
    %207 = vector.broadcast %197 : vector<1x128xf32> to vector<128x128xf32>
    %208 = arith.subf %193, %207 : vector<128x128xf32>
    %cst_237 = arith.constant 9.99999974E-6 : f32
    %209 = vector.broadcast %cst_237 : f32 to vector<1x128xf32>
    %210 = arith.addf %206, %209 : vector<1x128xf32>
    %211 = math.rsqrt %210 : vector<1x128xf32>
    %212 = vector.broadcast %211 : vector<1x128xf32> to vector<128x128xf32>
    %213 = arith.mulf %208, %212 : vector<128x128xf32>
    %c6_238 = arith.constant 6 : index
    %c0_239 = arith.constant 0 : index
    %c0_240 = arith.constant 0 : index
    %c0_241 = arith.constant 0 : index
    %214 = vector.load %arg0[%c6_238, %c0_239, %c0_240, %c0_241] : memref<8x9x9x128xf32, #tpu.memory_space<vmem>>, vector<2x8x8x128xf32>
    %c4_242 = arith.constant 4 : index
    %c0_243 = arith.constant 0 : index
    %c1_244 = arith.constant 1 : index
    %c0_245 = arith.constant 0 : index
    %215 = vector.load %arg0[%c4_242, %c0_243, %c1_244, %c0_245] : memref<8x9x9x128xf32, #tpu.memory_space<vmem>>, vector<2x8x8x128xf32>
    %216 = arith.addf %214, %215 : vector<2x8x8x128xf32>
    %c2_246 = arith.constant 2 : index
    %c1_247 = arith.constant 1 : index
    %c0_248 = arith.constant 0 : index
    %c0_249 = arith.constant 0 : index
    %217 = vector.load %arg0[%c2_246, %c1_247, %c0_248, %c0_249] : memref<8x9x9x128xf32, #tpu.memory_space<vmem>>, vector<2x8x8x128xf32>
    %218 = arith.addf %216, %217 : vector<2x8x8x128xf32>
    %c0_250 = arith.constant 0 : index
    %c1_251 = arith.constant 1 : index
    %c1_252 = arith.constant 1 : index
    %c0_253 = arith.constant 0 : index
    %219 = vector.load %arg0[%c0_250, %c1_251, %c1_252, %c0_253] : memref<8x9x9x128xf32, #tpu.memory_space<vmem>>, vector<2x8x8x128xf32>
    %220 = arith.addf %218, %219 : vector<2x8x8x128xf32>
    %cst_254 = arith.constant 2.500000e-01 : f32
    %221 = vector.broadcast %cst_254 : f32 to vector<2x8x8x128xf32>
    %222 = arith.mulf %221, %220 : vector<2x8x8x128xf32>
    %223 = vector.shape_cast %222 : vector<2x8x8x128xf32> to vector<128x128xf32>
    %224 = arith.addf %213, %223 : vector<128x128xf32>
    %cst_255 = arith.constant 0.000000e+00 : f32
    %225 = vector.broadcast %cst_255 : f32 to vector<128x128xf32>
    %226 = arith.maximumf %224, %225 : vector<128x128xf32>
    %227 = vector.shape_cast %226 : vector<128x128xf32> to vector<2x8x8x128xf32>
    %c0_256 = arith.constant 0 : index
    %c0_257 = arith.constant 0 : index
    %c0_258 = arith.constant 0 : index
    %c0_259 = arith.constant 0 : index
    %228 = vector.load %arg3[%c0_256, %c0_257, %c0_258, %c0_259] : memref<2x8x8x128xf32, #tpu.memory_space<vmem>>, vector<2x8x8x128xf32>
    tpu.vector_store %arg3[%c0_256, %c0_257, %c0_258, %c0_259], %227 {strides = array<i32>} : memref<2x8x8x128xf32, #tpu.memory_space<vmem>>, vector<2x8x8x128xf32>,
    return
  }
}

</mosaic_0001>

<llo_original>
// kernel: basic_block_forward.1
$region0: #{basic_block_forward.1}
  #allocation0 [shape = 'u32[]', space=smem, size = 0x4, offset = 0x4, fixed_abs, tag = 'smem constant byte address 0x4 - core index']
  #allocation1 [shape = 'u32[144,128]{1,0:T(1,128)}', space=vmem, size = 0x12000, scoped, tag = 'internal scratch']
  #allocation2 [shape = 'f32[128,128]{1,0:T(8,128)}', space=vmem, size = 0x10000, scoped, tag = 'scratch operand']
  #allocation3 [shape = 'f32[2,10,10,128]{3,2,1,0:T(8,128)}', space=vmem, size = 0x28000, scoped, tag = 'scratch operand']
  %s0 = inlined_call_operand.vmem [shape: f32[8,9,9,128], index: 0, kind: input, shape index: {}]
  %s1 = inlined_call_operand.vmem [shape: bf16[9,128,128], index: 1, kind: input, shape index: {}]
  %s2 = inlined_call_operand.vmem [shape: bf16[9,128,128], index: 2, kind: input, shape index: {}]
  %s3 = inlined_call_operand.vmem [shape: f32[2,8,8,128], index: 3, kind: output, shape index: {}]
  %s4 = sld [smem:[#allocation0]]
  $region22: #{basic_block_forward.1} parent=0
    _
  %s6 = ssub.s32 1, %s4
  %s7 = scalar_select 0, %s6, %s4
  // Predicated region
  $region2: #{basic_block_forward.1} parent=0 // pred_check
    _
  $region3: #{basic_block_forward.1} parent=0 // pred_check_branch
    %9 = sbr.rel (0) target = $region5
  $region4: #{basic_block_forward.1} parent=0 // pred_region
    _
  $region5: #{basic_block_forward.1} parent=0 // pred_fallthru
    _
  // Predicated region
  $region6: #{basic_block_forward.1} parent=0 // pred_check
    _
  $region7: #{basic_block_forward.1} parent=0 // pred_check_branch
    %11 = sbr.rel (0) target = $region9
  $region8: #{basic_block_forward.1} parent=0 // pred_region
    _
  $region9: #{basic_block_forward.1} parent=0 // pred_fallthru
    _
  // Predicated region
  $region10: #{basic_block_forward.1} parent=0 // pred_check
    _
  $region11: #{basic_block_forward.1} parent=0 // pred_check_branch
    %13 = sbr.rel (0) target = $region13
  $region12: #{basic_block_forward.1} parent=0 // pred_region
    _
  $region13: #{basic_block_forward.1} parent=0 // pred_fallthru
    _
  %15 = vst [vmem:[#allocation2] sm:$0xff] 0.0
  %16 = vst [vmem:[#allocation2 + $0x8] sm:$0xff] 0.0
  %17 = vst [vmem:[#allocation2 + $0x10] sm:$0xff] 0.0
  %18 = vst [vmem:[#allocation2 + $0x18] sm:$0xff] 0.0
  %19 = vst [vmem:[#allocation2 + $0x20] sm:$0xff] 0.0
  %20 = vst [vmem:[#allocation2 + $0x28] sm:$0xff] 0.0
  %21 = vst [vmem:[#allocation2 + $0x30] sm:$0xff] 0.0
  %22 = vst [vmem:[#allocation2 + $0x38] sm:$0xff] 0.0
  %23 = vst [vmem:[#allocation2 + $0x40] sm:$0xff] 0.0
  %24 = vst [vmem:[#allocation2 + $0x48] sm:$0xff] 0.0
  %25 = vst [vmem:[#allocation2 + $0x50] sm:$0xff] 0.0
  %26 = vst [vmem:[#allocation2 + $0x58] sm:$0xff] 0.0
  %27 = vst [vmem:[#allocation2 + $0x60] sm:$0xff] 0.0
  %28 = vst [vmem:[#allocation2 + $0x68] sm:$0xff] 0.0
  %29 = vst [vmem:[#allocation2 + $0x70] sm:$0xff] 0.0
  %30 = vst [vmem:[#allocation2 + $0x78] sm:$0xff] 0.0
  %v31 = vld [vmem:[#allocation2] sm:$0xff]
  %v32 = vld [vmem:[#allocation2 + $0x8] sm:$0xff]
  %v33 = vld [vmem:[#allocation2 + $0x10] sm:$0xff]
  %v34 = vld [vmem:[#allocation2 + $0x18] sm:$0xff]
  %v35 = vld [vmem:[#allocation2 + $0x20] sm:$0xff]
  %v36 = vld [vmem:[#allocation2 + $0x28] sm:$0xff]
  %v37 = vld [vmem:[#allocation2 + $0x30] sm:$0xff]
  %v38 = vld [vmem:[#allocation2 + $0x38] sm:$0xff]
  %v39 = vld [vmem:[#allocation2 + $0x40] sm:$0xff]
  %v40 = vld [vmem:[#allocation2 + $0x48] sm:$0xff]
  %v41 = vld [vmem:[#allocation2 + $0x50] sm:$0xff]
  %v42 = vld [vmem:[#allocation2 + $0x58] sm:$0xff]
  %v43 = vld [vmem:[#allocation2 + $0x60] sm:$0xff]
  %v44 = vld [vmem:[#allocation2 + $0x68] sm:$0xff]
  %v45 = vld [vmem:[#allocation2 + $0x70] sm:$0xff]
  %v46 = vld [vmem:[#allocation2 + $0x78] sm:$0xff]
  %v47 = vld [vmem:[%s0] sm:$0xff]
  %v48 = vld [vmem:[%s0 + $0x10] sm:$0xff]
  %v49 = vld [vmem:[%s0 + $0x20] sm:$0xff]
  %v50 = vld [vmem:[%s0 + $0x30] sm:$0xff]
  %v51 = vld [vmem:[%s0 + $0x40] sm:$0xff]
  %v52 = vld [vmem:[%s0 + $0x50] sm:$0xff]
  %v53 = vld [vmem:[%s0 + $0x60] sm:$0xff]
  %v54 = vld [vmem:[%s0 + $0x70] sm:$0xff]
  %v55 = vld [vmem:[%s0 + $0x90] sm:$0xff]
  %v56 = vld [vmem:[%s0 + $0xa0] sm:$0xff]
  %v57 = vld [vmem:[%s0 + $0xb0] sm:$0xff]
  %v58 = vld [vmem:[%s0 + $0xc0] sm:$0xff]
  %v59 = vld [vmem:[%s0 + $0xd0] sm:$0xff]
  %v60 = vld [vmem:[%s0 + $0xe0] sm:$0xff]
  %v61 = vld [vmem:[%s0 + $0xf0] sm:$0xff]
  %v62 = vld [vmem:[%s0 + $0x100] sm:$0xff]
  %v63 = vpack.c.bf16 %v47, %v47
  %v64 = vpack.c.bf16 %v48, %v48
  %v65 = vpack.c.bf16 %v49, %v49
  %v66 = vpack.c.bf16 %v50, %v50
  %v67 = vpack.c.bf16 %v51, %v51
  %v68 = vpack.c.bf16 %v52, %v52
  %v69 = vpack.c.bf16 %v53, %v53
  %v70 = vpack.c.bf16 %v54, %v54
  %v71 = vpack.c.bf16 %v55, %v55
  %v72 = vpack.c.bf16 %v56, %v56
  %v73 = vpack.c.bf16 %v57, %v57
  %v74 = vpack.c.bf16 %v58, %v58
  %v75 = vpack.c.bf16 %v59, %v59
  %v76 = vpack.c.bf16 %v60, %v60
  %v77 = vpack.c.bf16 %v61, %v61
  %v78 = vpack.c.bf16 %v62, %v62
  %v79 = vld [vmem:[%s1] sm:$0xf]
  %v80 = vld [vmem:[%s1 + $0x4] sm:$0xf]
  %v81 = vld [vmem:[%s1 + $0x8] sm:$0xf]
  %v82 = vld [vmem:[%s1 + $0xc] sm:$0xf]
  %v83 = vld [vmem:[%s1 + $0x10] sm:$0xf]
  %v84 = vld [vmem:[%s1 + $0x14] sm:$0xf]
  %v85 = vld [vmem:[%s1 + $0x18] sm:$0xf]
  %v86 = vld [vmem:[%s1 + $0x1c] sm:$0xf]
  %v87 = vld [vmem:[%s1 + $0x20] sm:$0xf]
  %v88 = vld [vmem:[%s1 + $0x24] sm:$0xf]
  %v89 = vld [vmem:[%s1 + $0x28] sm:$0xf]
  %v90 = vld [vmem:[%s1 + $0x2c] sm:$0xf]
  %v91 = vld [vmem:[%s1 + $0x30] sm:$0xf]
  %v92 = vld [vmem:[%s1 + $0x34] sm:$0xf]
  %v93 = vld [vmem:[%s1 + $0x38] sm:$0xf]
  %v94 = vld [vmem:[%s1 + $0x3c] sm:$0xf]
  %v111 = vunpack.c.l.b16 %v63
  %v112 = vunpack.c.l.b16 %v64
  %v113 = vunpack.c.l.b16 %v65
  %v114 = vunpack.c.l.b16 %v66
  %v115 = vunpack.c.l.b16 %v67
  %v116 = vunpack.c.l.b16 %v68
  %v117 = vunpack.c.l.b16 %v69
  %v118 = vunpack.c.l.b16 %v70
  %v119 = vunpack.c.l.b16 %v71
  %v120 = vunpack.c.l.b16 %v72
  %v121 = vunpack.c.l.b16 %v73
  %v122 = vunpack.c.l.b16 %v74
  %v123 = vunpack.c.l.b16 %v75
  %v124 = vunpack.c.l.b16 %v76
  %v125 = vunpack.c.l.b16 %v77
  %v126 = vunpack.c.l.b16 %v78
  %v127 = vpack.c.b16 %v112, %v111
  %v128 = vpack.c.b16 %v114, %v113
  %v129 = vpack.c.b16 %v116, %v115
  %v130 = vpack.c.b16 %v118, %v117
  %v131 = vpack.c.b16 %v120, %v119
  %v132 = vpack.c.b16 %v122, %v121
  %v133 = vpack.c.b16 %v124, %v123
  %v134 = vpack.c.b16 %v126, %v125
  %v159 = vunpack.c.l.b16 %v79
  %v160 = vunpack.c.l.b16 %v80
  %v161 = vunpack.c.l.b16 %v81
  %v162 = vunpack.c.l.b16 %v82
  %v163 = vunpack.c.l.b16 %v83
  %v164 = vunpack.c.l.b16 %v84
  %v165 = vunpack.c.l.b16 %v85
  %v166 = vunpack.c.l.b16 %v86
  %v167 = vunpack.c.l.b16 %v87
  %v168 = vunpack.c.l.b16 %v88
  %v169 = vunpack.c.l.b16 %v89
  %v170 = vunpack.c.l.b16 %v90
  %v171 = vunpack.c.l.b16 %v91
  %v172 = vunpack.c.l.b16 %v92
  %v173 = vunpack.c.l.b16 %v93
  %v174 = vunpack.c.l.b16 %v94
  %v175 = vpack.c.b16 %v160, %v159
  %v176 = vpack.c.b16 %v162, %v161
  %v177 = vpack.c.b16 %v164, %v163
  %v178 = vpack.c.b16 %v166, %v165
  %v179 = vpack.c.b16 %v168, %v167
  %v180 = vpack.c.b16 %v170, %v169
  %v181 = vpack.c.b16 %v172, %v171
  %v182 = vpack.c.b16 %v174, %v173
  %191 = vmatprep.subr.bf16.mxu0 0
  %192 = vmatpush1.bf16.msra.mxu0 %v182
  %193 = vmatprep.subr.bf16.mxu0 0
  %194 = vmatpush1.bf16.msra.mxu0 %v181
  %195 = vmatprep.subr.bf16.mxu0 0
  %196 = vmatpush1.bf16.msra.mxu0 %v180
  %197 = vmatprep.subr.bf16.mxu0 0
  %198 = vmatpush1.bf16.msra.mxu0 %v179
  %199 = vmatprep.subr.bf16.mxu0 0
  %200 = vmatpush1.bf16.msra.mxu0 %v178
  %201 = vmatprep.subr.bf16.mxu0 0
  %202 = vmatpush1.bf16.msra.mxu0 %v177
  %203 = vmatprep.subr.bf16.mxu0 0
  %204 = vmatpush1.bf16.msra.mxu0 %v176
  %205 = vmatprep.subr.bf16.mxu0 0
  %206 = vmatpush1.bf16.msra.mxu0 %v175
  %207 = vmatprep.subr.bf16.mxu0 0
  %208 = vmatpush2.bf16.msra.mxu0 0
  %209 = vmatprep.subr.bf16.mxu0 0
  %210 = vmatpush2.bf16.msra.mxu0 0
  %211 = vmatprep.subr.bf16.mxu0 0
  %212 = vmatpush2.bf16.msra.mxu0 0
  %213 = vmatprep.subr.bf16.mxu0 0
  %214 = vmatpush2.bf16.msra.mxu0 0
  %215 = vmatprep.subr.bf16.mxu0 0
  %216 = vmatpush2.bf16.msra.mxu0 0
  %217 = vmatprep.subr.bf16.mxu0 0
  %218 = vmatpush2.bf16.msra.mxu0 0
  %219 = vmatprep.subr.bf16.mxu0 0
  %220 = vmatpush2.bf16.msra.mxu0 0
  %221 = vmatprep.subr.bf16.mxu0 0
  %222 = vmatpush2.bf16.msra.mxu0 0
  %223 = vmatprep.mubr.bf16.mxu0 0
  %224 = vmatmul.mubr.bf16.gmra.mxu0 %v127
  %v225 = vpop.f32.mrf.mxu0
  %v226 = vadd.f32 0.0, %v225
  %v227 = vpop.f32.mrf.mxu0
  %v228 = vpop.f32.mrf.mxu0
  %v229 = vadd.f32 0.0, %v228
  %v230 = vpop.f32.mrf.mxu0
  %231 = vmatprep.mubr.bf16.mxu0 0
  %232 = vmatmul.mubr.bf16.gmra.mxu0 %v128
  %v233 = vpop.f32.mrf.mxu0
  %v234 = vadd.f32 0.0, %v233
  %v235 = vpop.f32.mrf.mxu0
  %v236 = vpop.f32.mrf.mxu0
  %v237 = vadd.f32 0.0, %v236
  %v238 = vpop.f32.mrf.mxu0
  %239 = vmatprep.mubr.bf16.mxu0 0
  %240 = vmatmul.mubr.bf16.gmra.mxu0 %v129
  %v241 = vpop.f32.mrf.mxu0
  %v242 = vadd.f32 0.0, %v241
  %v243 = vpop.f32.mrf.mxu0
  %v244 = vpop.f32.mrf.mxu0
  %v245 = vadd.f32 0.0, %v244
  %v246 = vpop.f32.mrf.mxu0
  %247 = vmatprep.mubr.bf16.mxu0 0
  %248 = vmatmul.mubr.bf16.gmra.mxu0 %v130
  %v249 = vpop.f32.mrf.mxu0
  %v250 = vadd.f32 0.0, %v249
  %v251 = vpop.f32.mrf.mxu0
  %v252 = vpop.f32.mrf.mxu0
  %v253 = vadd.f32 0.0, %v252
  %v254 = vpop.f32.mrf.mxu0
  %255 = vmatprep.mubr.bf16.mxu0 0
  %256 = vmatmul.mubr.bf16.gmra.mxu0 %v131
  %v257 = vpop.f32.mrf.mxu0
  %v258 = vadd.f32 0.0, %v257
  %v259 = vpop.f32.mrf.mxu0
  %v260 = vpop.f32.mrf.mxu0
  %v261 = vadd.f32 0.0, %v260
  %v262 = vpop.f32.mrf.mxu0
  %263 = vmatprep.mubr.bf16.mxu0 0
  %264 = vmatmul.mubr.bf16.gmra.mxu0 %v132
  %v265 = vpop.f32.mrf.mxu0
  %v266 = vadd.f32 0.0, %v265
  %v267 = vpop.f32.mrf.mxu0
  %v268 = vpop.f32.mrf.mxu0
  %v269 = vadd.f32 0.0, %v268
  %v270 = vpop.f32.mrf.mxu0
  %271 = vmatprep.mubr.bf16.mxu0 0
  %272 = vmatmul.mubr.bf16.gmra.mxu0 %v133
  %v273 = vpop.f32.mrf.mxu0
  %v274 = vadd.f32 0.0, %v273
  %v275 = vpop.f32.mrf.mxu0
  %v276 = vpop.f32.mrf.mxu0
  %v277 = vadd.f32 0.0, %v276
  %v278 = vpop.f32.mrf.mxu0
  %279 = vmatprep.mubr.bf16.mxu0 0
  %280 = vmatmul.mubr.bf16.gmra.mxu0 %v134
  %v281 = vpop.f32.mrf.mxu0
  %v282 = vadd.f32 0.0, %v281
  %v283 = vpop.f32.mrf.mxu0
  %v284 = vpop.f32.mrf.mxu0
  %v285 = vadd.f32 0.0, %v284
  %v286 = vpop.f32.mrf.mxu0
  %287 = vdwg.mxu0
  %v288 = vadd.f32 %v31, %v226
  %v289 = vadd.f32 %v32, %v229
  %v290 = vadd.f32 %v33, %v234
  %v291 = vadd.f32 %v34, %v237
  %v292 = vadd.f32 %v35, %v242
  %v293 = vadd.f32 %v36, %v245
  %v294 = vadd.f32 %v37, %v250
  %v295 = vadd.f32 %v38, %v253
  %v296 = vadd.f32 %v39, %v258
  %v297 = vadd.f32 %v40, %v261
  %v298 = vadd.f32 %v41, %v266
  %v299 = vadd.f32 %v42, %v269
  %v300 = vadd.f32 %v43, %v274
  %v301 = vadd.f32 %v44, %v277
  %v302 = vadd.f32 %v45, %v282
  %v303 = vadd.f32 %v46, %v285
  %304 = vst [vmem:[#allocation2] sm:$0xff] %v288
  %305 = vst [vmem:[#allocation2 + $0x8] sm:$0xff] %v289
  %306 = vst [vmem:[#allocation2 + $0x10] sm:$0xff] %v290
  %307 = vst [vmem:[#allocation2 + $0x18] sm:$0xff] %v291
  %308 = vst [vmem:[#allocation2 + $0x20] sm:$0xff] %v292
  %309 = vst [vmem:[#allocation2 + $0x28] sm:$0xff] %v293
  %310 = vst [vmem:[#allocation2 + $0x30] sm:$0xff] %v294
  %311 = vst [vmem:[#allocation2 + $0x38] sm:$0xff] %v295
  %312 = vst [vmem:[#allocation2 + $0x40] sm:$0xff] %v296
  %313 = vst [vmem:[#allocation2 + $0x48] sm:$0xff] %v297
  %314 = vst [vmem:[#allocation2 + $0x50] sm:$0xff] %v298
  %315 = vst [vmem:[#allocation2 + $0x58] sm:$0xff] %v299
  %316 = vst [vmem:[#allocation2 + $0x60] sm:$0xff] %v300
  %317 = vst [vmem:[#allocation2 + $0x68] sm:$0xff] %v301
  %318 = vst [vmem:[#allocation2 + $0x70] sm:$0xff] %v302
  %319 = vst [vmem:[#allocation2 + $0x78] sm:$0xff] %v303
  %v320 = vld [vmem:[#allocation2] sm:$0xff]
  %v321 = vld [vmem:[#allocation2 + $0x8] sm:$0xff]
  %v322 = vld [vmem:[#allocation2 + $0x10] sm:$0xff]
  %v323 = vld [vmem:[#allocation2 + $0x18] sm:$0xff]
  %v324 = vld [vmem:[#allocation2 + $0x20] sm:$0xff]
  %v325 = vld [vmem:[#allocation2 + $0x28] sm:$0xff]
  %v326 = vld [vmem:[#allocation2 + $0x30] sm:$0xff]
  %v327 = vld [vmem:[#allocation2 + $0x38] sm:$0xff]
  %v328 = vld [vmem:[#allocation2 + $0x40] sm:$0xff]
  %v329 = vld [vmem:[#allocation2 + $0x48] sm:$0xff]
  %v330 = vld [vmem:[#allocation2 + $0x50] sm:$0xff]
  %v331 = vld [vmem:[#allocation2 + $0x58] sm:$0xff]
  %v332 = vld [vmem:[#allocation2 + $0x60] sm:$0xff]
  %v333 = vld [vmem:[#allocation2 + $0x68] sm:$0xff]
  %v334 = vld [vmem:[#allocation2 + $0x70] sm:$0xff]
  %v335 = vld [vmem:[#allocation2 + $0x78] sm:$0xff]
  %s336 = scalar_lea.vmem %s0, 288
  %v337 = vld [vmem:[%s336] sm:$0xff]
  %v338 = vld [vmem:[%s336 + $0x10] sm:$0xff]
  %v339 = vld [vmem:[%s336 + $0x20] sm:$0xff]
  %v340 = vld [vmem:[%s336 + $0x30] sm:$0xff]
  %v341 = vld [vmem:[%s336 + $0x40] sm:$0xff]
  %v342 = vld [vmem:[%s336 + $0x50] sm:$0xff]
  %v343 = vld [vmem:[%s336 + $0x60] sm:$0xff]
  %v344 = vld [vmem:[%s336 + $0x70] sm:$0xff]
  %v345 = vld [vmem:[%s336 + $0x90] sm:$0xff]
  %v346 = vld [vmem:[%s336 + $0xa0] sm:$0xff]
  %v347 = vld [vmem:[%s336 + $0xb0] sm:$0xff]
  %v348 = vld [vmem:[%s336 + $0xc0] sm:$0xff]
  %v349 = vld [vmem:[%s336 + $0xd0] sm:$0xff]
  %v350 = vld [vmem:[%s336 + $0xe0] sm:$0xff]
  %v351 = vld [vmem:[%s336 + $0xf0] sm:$0xff]
  %v352 = vld [vmem:[%s336 + $0x100] sm:$0xff]
  %v353 = vpack.c.bf16 %v337, %v337
  %v354 = vpack.c.bf16 %v338, %v338
  %v355 = vpack.c.bf16 %v339, %v339
  %v356 = vpack.c.bf16 %v340, %v340
  %v357 = vpack.c.bf16 %v341, %v341
  %v358 = vpack.c.bf16 %v342, %v342
  %v359 = vpack.c.bf16 %v343, %v343
  %v360 = vpack.c.bf16 %v344, %v344
  %v361 = vpack.c.bf16 %v345, %v345
  %v362 = vpack.c.bf16 %v346, %v346
  %v363 = vpack.c.bf16 %v347, %v347
  %v364 = vpack.c.bf16 %v348, %v348
  %v365 = vpack.c.bf16 %v349, %v349
  %v366 = vpack.c.bf16 %v350, %v350
  %v367 = vpack.c.bf16 %v351, %v351
  %v368 = vpack.c.bf16 %v352, %v352
  %s369 = scalar_lea.vmem %s1, 64
  %v370 = vld [vmem:[%s369] sm:$0xf]
  %v371 = vld [vmem:[%s369 + $0x4] sm:$0xf]
  %v372 = vld [vmem:[%s369 + $0x8] sm:$0xf]
  %v373 = vld [vmem:[%s369 + $0xc] sm:$0xf]
  %v374 = vld [vmem:[%s369 + $0x10] sm:$0xf]
  %v375 = vld [vmem:[%s369 + $0x14] sm:$0xf]
  %v376 = vld [vmem:[%s369 + $0x18] sm:$0xf]
  %v377 = vld [vmem:[%s369 + $0x1c] sm:$0xf]
  %v378 = vld [vmem:[%s369 + $0x20] sm:$0xf]
  %v379 = vld [vmem:[%s369 + $0x24] sm:$0xf]
  %v380 = vld [vmem:[%s369 + $0x28] sm:$0xf]
  %v381 = vld [vmem:[%s369 + $0x2c] sm:$0xf]
  %v382 = vld [vmem:[%s369 + $0x30] sm:$0xf]
  %v383 = vld [vmem:[%s369 + $0x34] sm:$0xf]
  %v384 = vld [vmem:[%s369 + $0x38] sm:$0xf]
  %v385 = vld [vmem:[%s369 + $0x3c] sm:$0xf]
  %v402 = vunpack.c.l.b16 %v353
  %v403 = vunpack.c.l.b16 %v354
  %v404 = vunpack.c.l.b16 %v355
  %v405 = vunpack.c.l.b16 %v356
  %v406 = vunpack.c.l.b16 %v357
  %v407 = vunpack.c.l.b16 %v358
  %v408 = vunpack.c.l.b16 %v359
  %v409 = vunpack.c.l.b16 %v360
  %v410 = vunpack.c.l.b16 %v361
  %v411 = vunpack.c.l.b16 %v362
  %v412 = vunpack.c.l.b16 %v363
  %v413 = vunpack.c.l.b16 %v364
  %v414 = vunpack.c.l.b16 %v365
  %v415 = vunpack.c.l.b16 %v366
  %v416 = vunpack.c.l.b16 %v367
  %v417 = vunpack.c.l.b16 %v368
  %v418 = vpack.c.b16 %v403, %v402
  %v419 = vpack.c.b16 %v405, %v404
  %v420 = vpack.c.b16 %v407, %v406
  %v421 = vpack.c.b16 %v409, %v408
  %v422 = vpack.c.b16 %v411, %v410
  %v423 = vpack.c.b16 %v413, %v412
  %v424 = vpack.c.b16 %v415, %v414
  %v425 = vpack.c.b16 %v417, %v416
  %v450 = vunpack.c.l.b16 %v370
  %v451 = vunpack.c.l.b16 %v371
  %v452 = vunpack.c.l.b16 %v372
  %v453 = vunpack.c.l.b16 %v373
  %v454 = vunpack.c.l.b16 %v374
  %v455 = vunpack.c.l.b16 %v375
  %v456 = vunpack.c.l.b16 %v376
  %v457 = vunpack.c.l.b16 %v377
  %v458 = vunpack.c.l.b16 %v378
  %v459 = vunpack.c.l.b16 %v379
  %v460 = vunpack.c.l.b16 %v380
  %v461 = vunpack.c.l.b16 %v381
  %v462 = vunpack.c.l.b16 %v382
  %v463 = vunpack.c.l.b16 %v383
  %v464 = vunpack.c.l.b16 %v384
  %v465 = vunpack.c.l.b16 %v385
  %v466 = vpack.c.b16 %v451, %v450
  %v467 = vpack.c.b16 %v453, %v452
  %v468 = vpack.c.b16 %v455, %v454
  %v469 = vpack.c.b16 %v457, %v456
  %v470 = vpack.c.b16 %v459, %v458
  %v471 = vpack.c.b16 %v461, %v460
  %v472 = vpack.c.b16 %v463, %v462
  %v473 = vpack.c.b16 %v465, %v464
  %482 = vmatprep.subr.bf16.mxu0 0
  %483 = vmatpush1.bf16.msra.mxu0 %v473
  %484 = vmatprep.subr.bf16.mxu0 0
  %485 = vmatpush1.bf16.msra.mxu0 %v472
  %486 = vmatprep.subr.bf16.mxu0 0
  %487 = vmatpush1.bf16.msra.mxu0 %v471
  %488 = vmatprep.subr.bf16.mxu0 0
  %489 = vmatpush1.bf16.msra.mxu0 %v470
  %490 = vmatprep.subr.bf16.mxu0 0
  %491 = vmatpush1.bf16.msra.mxu0 %v469
  %492 = vmatprep.subr.bf16.mxu0 0
  %493 = vmatpush1.bf16.msra.mxu0 %v468
  %494 = vmatprep.subr.bf16.mxu0 0
  %495 = vmatpush1.bf16.msra.mxu0 %v467
  %496 = vmatprep.subr.bf16.mxu0 0
  %497 = vmatpush1.bf16.msra.mxu0 %v466
  %498 = vmatprep.subr.bf16.mxu0 0
  %499 = vmatpush2.bf16.msra.mxu0 0
  %500 = vmatprep.subr.bf16.mxu0 0
  %501 = vmatpush2.bf16.msra.mxu0 0
  %502 = vmatprep.subr.bf16.mxu0 0
  %503 = vmatpush2.bf16.msra.mxu0 0
  %504 = vmatprep.subr.bf16.mxu0 0
  %505 = vmatpush2.bf16.msra.mxu0 0
  %506 = vmatprep.subr.bf16.mxu0 0
  %507 = vmatpush2.bf16.msra.mxu0 0
  %508 = vmatprep.subr.bf16.mxu0 0
  %509 = vmatpush2.bf16.msra.mxu0 0
  %510 = vmatprep.subr.bf16.mxu0 0
  %511 = vmatpush2.bf16.msra.mxu0 0
  %512 = vmatprep.subr.bf16.mxu0 0
  %513 = vmatpush2.bf16.msra.mxu0 0
  %514 = vmatprep.mubr.bf16.mxu0 0
  %515 = vmatmul.mubr.bf16.gmra.mxu0 %v418
  %v516 = vpop.f32.mrf.mxu0
  %v517 = vadd.f32 0.0, %v516
  %v518 = vpop.f32.mrf.mxu0
  %v519 = vpop.f32.mrf.mxu0
  %v520 = vadd.f32 0.0, %v519
  %v521 = vpop.f32.mrf.mxu0
  %522 = vmatprep.mubr.bf16.mxu0 0
  %523 = vmatmul.mubr.bf16.gmra.mxu0 %v419
  %v524 = vpop.f32.mrf.mxu0
  %v525 = vadd.f32 0.0, %v524
  %v526 = vpop.f32.mrf.mxu0
  %v527 = vpop.f32.mrf.mxu0
  %v528 = vadd.f32 0.0, %v527
  %v529 = vpop.f32.mrf.mxu0
  %530 = vmatprep.mubr.bf16.mxu0 0
  %531 = vmatmul.mubr.bf16.gmra.mxu0 %v420
  %v532 = vpop.f32.mrf.mxu0
  %v533 = vadd.f32 0.0, %v532
  %v534 = vpop.f32.mrf.mxu0
  %v535 = vpop.f32.mrf.mxu0
  %v536 = vadd.f32 0.0, %v535
  %v537 = vpop.f32.mrf.mxu0
  %538 = vmatprep.mubr.bf16.mxu0 0
  %539 = vmatmul.mubr.bf16.gmra.mxu0 %v421
  %v540 = vpop.f32.mrf.mxu0
  %v541 = vadd.f32 0.0, %v540
  %v542 = vpop.f32.mrf.mxu0
  %v543 = vpop.f32.mrf.mxu0
  %v544 = vadd.f32 0.0, %v543
  %v545 = vpop.f32.mrf.mxu0
  %546 = vmatprep.mubr.bf16.mxu0 0
  %547 = vmatmul.mubr.bf16.gmra.mxu0 %v422
  %v548 = vpop.f32.mrf.mxu0
  %v549 = vadd.f32 0.0, %v548
  %v550 = vpop.f32.mrf.mxu0
  %v551 = vpop.f32.mrf.mxu0
  %v552 = vadd.f32 0.0, %v551
  %v553 = vpop.f32.mrf.mxu0
  %554 = vmatprep.mubr.bf16.mxu0 0
  %555 = vmatmul.mubr.bf16.gmra.mxu0 %v423
  %v556 = vpop.f32.mrf.mxu0
  %v557 = vadd.f32 0.0, %v556
  %v558 = vpop.f32.mrf.mxu0
  %v559 = vpop.f32.mrf.mxu0
  %v560 = vadd.f32 0.0, %v559
  %v561 = vpop.f32.mrf.mxu0
  %562 = vmatprep.mubr.bf16.mxu0 0
  %563 = vmatmul.mubr.bf16.gmra.mxu0 %v424
  %v564 = vpop.f32.mrf.mxu0
  %v565 = vadd.f32 0.0, %v564
  %v566 = vpop.f32.mrf.mxu0
  %v567 = vpop.f32.mrf.mxu0
  %v568 = vadd.f32 0.0, %v567
  %v569 = vpop.f32.mrf.mxu0
  %570 = vmatprep.mubr.bf16.mxu0 0
  %571 = vmatmul.mubr.bf16.gmra.mxu0 %v425
  %v572 = vpop.f32.mrf.mxu0
  %v573 = vadd.f32 0.0, %v572
  %v574 = vpop.f32.mrf.mxu0
  %v575 = vpop.f32.mrf.mxu0
  %v576 = vadd.f32 0.0, %v575
  %v577 = vpop.f32.mrf.mxu0
  %578 = vdwg.mxu0
  %v579 = vadd.f32 %v320, %v517
  %v580 = vadd.f32 %v321, %v520
  %v581 = vadd.f32 %v322, %v525
  %v582 = vadd.f32 %v323, %v528
  %v583 = vadd.f32 %v324, %v533
  %v584 = vadd.f32 %v325, %v536
  %v585 = vadd.f32 %v326, %v541
  %v586 = vadd.f32 %v327, %v544
  %v587 = vadd.f32 %v328, %v549
  %v588 = vadd.f32 %v329, %v552
  %v589 = vadd.f32 %v330, %v557
  %v590 = vadd.f32 %v331, %v560
  %v591 = vadd.f32 %v332, %v565
  %v592 = vadd.f32 %v333, %v568
  %v593 = vadd.f32 %v334, %v573
  %v594 = vadd.f32 %v335, %v576
  %595 = vst [vmem:[#allocation2] sm:$0xff] %v579
  %596 = vst [vmem:[#allocation2 + $0x8] sm:$0xff] %v580
  %597 = vst [vmem:[#allocation2 + $0x10] sm:$0xff] %v581
  %598 = vst [vmem:[#allocation2 + $0x18] sm:$0xff] %v582
  %599 = vst [vmem:[#allocation2 + $0x20] sm:$0xff] %v583
  %600 = vst [vmem:[#allocation2 + $0x28] sm:$0xff] %v584
  %601 = vst [vmem:[#allocation2 + $0x30] sm:$0xff] %v585
  %602 = vst [vmem:[#allocation2 + $0x38] sm:$0xff] %v586
  %603 = vst [vmem:[#allocation2 + $0x40] sm:$0xff] %v587
  %604 = vst [vmem:[#allocation2 + $0x48] sm:$0xff] %v588
  %605 = vst [vmem:[#allocation2 + $0x50] sm:$0xff] %v589
  %606 = vst [vmem:[#allocation2 + $0x58] sm:$0xff] %v590
  %607 = vst [vmem:[#allocation2 + $0x60] sm:$0xff] %v591
  %608 = vst [vmem:[#allocation2 + $0x68] sm:$0xff] %v592
  %609 = vst [vmem:[#allocation2 + $0x70] sm:$0xff] %v593
  %610 = vst [vmem:[#allocation2 + $0x78] sm:$0xff] %v594
  %v611 = vld [vmem:[#allocation2] sm:$0xff]
  %v612 = vld [vmem:[#allocation2 + $0x8] sm:$0xff]
  %v613 = vld [vmem:[#allocation2 + $0x10] sm:$0xff]
  %v614 = vld [vmem:[#allocation2 + $0x18] sm:$0xff]
  %v615 = vld [vmem:[#allocation2 + $0x20] sm:$0xff]
  %v616 = vld [vmem:[#allocation2 + $0x28] sm:$0xff]
  %v617 = vld [vmem:[#allocation2 + $0x30] sm:$0xff]
  %v618 = vld [vmem:[#allocation2 + $0x38] sm:$0xff]
  %v619 = vld [vmem:[#allocation2 + $0x40] sm:$0xff]
  %v620 = vld [vmem:[#allocation2 + $0x48] sm:$0xff]
  %v621 = vld [vmem:[#allocation2 + $0x50] sm:$0xff]
  %v622 = vld [vmem:[#allocation2 + $0x58] sm:$0xff]
  %v623 = vld [vmem:[#allocation2 + $0x60] sm:$0xff]
  %v624 = vld [vmem:[#allocation2 + $0x68] sm:$0xff]
  %v625 = vld [vmem:[#allocation2 + $0x70] sm:$0xff]
  %v626 = vld [vmem:[#allocation2 + $0x78] sm:$0xff]
  %v627 = vld [vmem:[%s0 + $0x1] sm:$0xff]
  %v628 = vld [vmem:[%s0 + $0x11] sm:$0xff]
  %v629 = vld [vmem:[%s0 + $0x21] sm:$0xff]
  %v630 = vld [vmem:[%s0 + $0x31] sm:$0xff]
  %v631 = vld [vmem:[%s0 + $0x41] sm:$0xff]
  %v632 = vld [vmem:[%s0 + $0x51] sm:$0xff]
  %v633 = vld [vmem:[%s0 + $0x61] sm:$0xff]
  %v634 = vld [vmem:[%s0 + $0x71] sm:$0xff]
  %v635 = vld [vmem:[%s0 + $0x91] sm:$0xff]
  %v636 = vld [vmem:[%s0 + $0xa1] sm:$0xff]
  %v637 = vld [vmem:[%s0 + $0xb1] sm:$0xff]
  %v638 = vld [vmem:[%s0 + $0xc1] sm:$0xff]
  %v639 = vld [vmem:[%s0 + $0xd1] sm:$0xff]
  %v640 = vld [vmem:[%s0 + $0xe1] sm:$0xff]
  %v641 = vld [vmem:[%s0 + $0xf1] sm:$0xff]
  %v642 = vld [vmem:[%s0 + $0x101] sm:$0xff]
  %v643 = vpack.c.bf16 %v627, %v627
  %v644 = vpack.c.bf16 %v628, %v628
  %v645 = vpack.c.bf16 %v629, %v629
  %v646 = vpack.c.bf16 %v630, %v630
  %v647 = vpack.c.bf16 %v631, %v631
  %v648 = vpack.c.bf16 %v632, %v632
  %v649 = vpack.c.bf16 %v633, %v633
  %v650 = vpack.c.bf16 %v634, %v634
  %v651 = vpack.c.bf16 %v635, %v635
  %v652 = vpack.c.bf16 %v636, %v636
  %v653 = vpack.c.bf16 %v637, %v637
  %v654 = vpack.c.bf16 %v638, %v638
  %v655 = vpack.c.bf16 %v639, %v639
  %v656 = vpack.c.bf16 %v640, %v640
  %v657 = vpack.c.bf16 %v641, %v641
  %v658 = vpack.c.bf16 %v642, %v642
  %s659 = scalar_lea.vmem %s1, 128
  %v660 = vld [vmem:[%s659] sm:$0xf]
  %v661 = vld [vmem:[%s659 + $0x4] sm:$0xf]
  %v662 = vld [vmem:[%s659 + $0x8] sm:$0xf]
  %v663 = vld [vmem:[%s659 + $0xc] sm:$0xf]
  %v664 = vld [vmem:[%s659 + $0x10] sm:$0xf]
  %v665 = vld [vmem:[%s659 + $0x14] sm:$0xf]
  %v666 = vld [vmem:[%s659 + $0x18] sm:$0xf]
  %v667 = vld [vmem:[%s659 + $0x1c] sm:$0xf]
  %v668 = vld [vmem:[%s659 + $0x20] sm:$0xf]
  %v669 = vld [vmem:[%s659 + $0x24] sm:$0xf]
  %v670 = vld [vmem:[%s659 + $0x28] sm:$0xf]
  %v671 = vld [vmem:[%s659 + $0x2c] sm:$0xf]
  %v672 = vld [vmem:[%s659 + $0x30] sm:$0xf]
  %v673 = vld [vmem:[%s659 + $0x34] sm:$0xf]
  %v674 = vld [vmem:[%s659 + $0x38] sm:$0xf]
  %v675 = vld [vmem:[%s659 + $0x3c] sm:$0xf]
  %v692 = vunpack.c.l.b16 %v643
  %v693 = vunpack.c.l.b16 %v644
  %v694 = vunpack.c.l.b16 %v645
  %v695 = vunpack.c.l.b16 %v646
  %v696 = vunpack.c.l.b16 %v647
  %v697 = vunpack.c.l.b16 %v648
  %v698 = vunpack.c.l.b16 %v649
  %v699 = vunpack.c.l.b16 %v650
  %v700 = vunpack.c.l.b16 %v651
  %v701 = vunpack.c.l.b16 %v652
  %v702 = vunpack.c.l.b16 %v653
  %v703 = vunpack.c.l.b16 %v654
  %v704 = vunpack.c.l.b16 %v655
  %v705 = vunpack.c.l.b16 %v656
  %v706 = vunpack.c.l.b16 %v657
  %v707 = vunpack.c.l.b16 %v658
  %v708 = vpack.c.b16 %v693, %v692
  %v709 = vpack.c.b16 %v695, %v694
  %v710 = vpack.c.b16 %v697, %v696
  %v711 = vpack.c.b16 %v699, %v698
  %v712 = vpack.c.b16 %v701, %v700
  %v713 = vpack.c.b16 %v703, %v702
  %v714 = vpack.c.b16 %v705, %v704
  %v715 = vpack.c.b16 %v707, %v706
  %v740 = vunpack.c.l.b16 %v660
  %v741 = vunpack.c.l.b16 %v661
  %v742 = vunpack.c.l.b16 %v662
  %v743 = vunpack.c.l.b16 %v663
  %v744 = vunpack.c.l.b16 %v664
  %v745 = vunpack.c.l.b16 %v665
  %v746 = vunpack.c.l.b16 %v666
  %v747 = vunpack.c.l.b16 %v667
  %v748 = vunpack.c.l.b16 %v668
  %v749 = vunpack.c.l.b16 %v669
  %v750 = vunpack.c.l.b16 %v670
  %v751 = vunpack.c.l.b16 %v671
  %v752 = vunpack.c.l.b16 %v672
  %v753 = vunpack.c.l.b16 %v673
  %v754 = vunpack.c.l.b16 %v674
  %v755 = vunpack.c.l.b16 %v675
  %v756 = vpack.c.b16 %v741, %v740
  %v757 = vpack.c.b16 %v743, %v742
  %v758 = vpack.c.b16 %v745, %v744
  %v759 = vpack.c.b16 %v747, %v746
  %v760 = vpack.c.b16 %v749, %v748
  %v761 = vpack.c.b16 %v751, %v750
  %v762 = vpack.c.b16 %v753, %v752
  %v763 = vpack.c.b16 %v755, %v754
  %772 = vmatprep.subr.bf16.mxu0 0
  %773 = vmatpush1.bf16.msra.mxu0 %v763
  %774 = vmatprep.subr.bf16.mxu0 0
  %775 = vmatpush1.bf16.msra.mxu0 %v762
  %776 = vmatprep.subr.bf16.mxu0 0
  %777 = vmatpush1.bf16.msra.mxu0 %v761
  %778 = vmatprep.subr.bf16.mxu0 0
  %779 = vmatpush1.bf16.msra.mxu0 %v760
  %780 = vmatprep.subr.bf16.mxu0 0
  %781 = vmatpush1.bf16.msra.mxu0 %v759
  %782 = vmatprep.subr.bf16.mxu0 0
  %783 = vmatpush1.bf16.msra.mxu0 %v758
  %784 = vmatprep.subr.bf16.mxu0 0
  %785 = vmatpush1.bf16.msra.mxu0 %v757
  %786 = vmatprep.subr.bf16.mxu0 0
  %787 = vmatpush1.bf16.msra.mxu0 %v756
  %788 = vmatprep.subr.bf16.mxu0 0
  %789 = vmatpush2.bf16.msra.mxu0 0
  %790 = vmatprep.subr.bf16.mxu0 0
  %791 = vmatpush2.bf16.msra.mxu0 0
  %792 = vmatprep.subr.bf16.mxu0 0
  %793 = vmatpush2.bf16.msra.mxu0 0
  %794 = vmatprep.subr.bf16.mxu0 0
  %795 = vmatpush2.bf16.msra.mxu0 0
  %796 = vmatprep.subr.bf16.mxu0 0
  %797 = vmatpush2.bf16.msra.mxu0 0
  %798 = vmatprep.subr.bf16.mxu0 0
  %799 = vmatpush2.bf16.msra.mxu0 0
  %800 = vmatprep.subr.bf16.mxu0 0
  %801 = vmatpush2.bf16.msra.mxu0 0
  %802 = vmatprep.subr.bf16.mxu0 0
  %803 = vmatpush2.bf16.msra.mxu0 0
  %804 = vmatprep.mubr.bf16.mxu0 0
  %805 = vmatmul.mubr.bf16.gmra.mxu0 %v708
  %v806 = vpop.f32.mrf.mxu0
  %v807 = vadd.f32 0.0, %v806
  %v808 = vpop.f32.mrf.mxu0
  %v809 = vpop.f32.mrf.mxu0
  %v810 = vadd.f32 0.0, %v809
  %v811 = vpop.f32.mrf.mxu0
  %812 = vmatprep.mubr.bf16.mxu0 0
  %813 = vmatmul.mubr.bf16.gmra.mxu0 %v709
  %v814 = vpop.f32.mrf.mxu0
  %v815 = vadd.f32 0.0, %v814
  %v816 = vpop.f32.mrf.mxu0
  %v817 = vpop.f32.mrf.mxu0
  %v818 = vadd.f32 0.0, %v817
  %v819 = vpop.f32.mrf.mxu0
  %820 = vmatprep.mubr.bf16.mxu0 0
  %821 = vmatmul.mubr.bf16.gmra.mxu0 %v710
  %v822 = vpop.f32.mrf.mxu0
  %v823 = vadd.f32 0.0, %v822
  %v824 = vpop.f32.mrf.mxu0
  %v825 = vpop.f32.mrf.mxu0
  %v826 = vadd.f32 0.0, %v825
  %v827 = vpop.f32.mrf.mxu0
  %828 = vmatprep.mubr.bf16.mxu0 0
  %829 = vmatmul.mubr.bf16.gmra.mxu0 %v711
  %v830 = vpop.f32.mrf.mxu0
  %v831 = vadd.f32 0.0, %v830
  %v832 = vpop.f32.mrf.mxu0
  %v833 = vpop.f32.mrf.mxu0
  %v834 = vadd.f32 0.0, %v833
  %v835 = vpop.f32.mrf.mxu0
  %836 = vmatprep.mubr.bf16.mxu0 0
  %837 = vmatmul.mubr.bf16.gmra.mxu0 %v712
  %v838 = vpop.f32.mrf.mxu0
  %v839 = vadd.f32 0.0, %v838
  %v840 = vpop.f32.mrf.mxu0
  %v841 = vpop.f32.mrf.mxu0
  %v842 = vadd.f32 0.0, %v841
  %v843 = vpop.f32.mrf.mxu0
  %844 = vmatprep.mubr.bf16.mxu0 0
  %845 = vmatmul.mubr.bf16.gmra.mxu0 %v713
  %v846 = vpop.f32.mrf.mxu0
  %v847 = vadd.f32 0.0, %v846
  %v848 = vpop.f32.mrf.mxu0
  %v849 = vpop.f32.mrf.mxu0
  %v850 = vadd.f32 0.0, %v849
  %v851 = vpop.f32.mrf.mxu0
  %852 = vmatprep.mubr.bf16.mxu0 0
  %853 = vmatmul.mubr.bf16.gmra.mxu0 %v714
  %v854 = vpop.f32.mrf.mxu0
  %v855 = vadd.f32 0.0, %v854
  %v856 = vpop.f32.mrf.mxu0
  %v857 = vpop.f32.mrf.mxu0
  %v858 = vadd.f32 0.0, %v857
  %v859 = vpop.f32.mrf.mxu0
  %860 = vmatprep.mubr.bf16.mxu0 0
  %861 = vmatmul.mubr.bf16.gmra.mxu0 %v715
  %v862 = vpop.f32.mrf.mxu0
  %v863 = vadd.f32 0.0, %v862
  %v864 = vpop.f32.mrf.mxu0
  %v865 = vpop.f32.mrf.mxu0
  %v866 = vadd.f32 0.0, %v865
  %v867 = vpop.f32.mrf.mxu0
  %868 = vdwg.mxu0
  %v869 = vadd.f32 %v611, %v807
  %v870 = vadd.f32 %v612, %v810
  %v871 = vadd.f32 %v613, %v815
  %v872 = vadd.f32 %v614, %v818
  %v873 = vadd.f32 %v615, %v823
  %v874 = vadd.f32 %v616, %v826
  %v875 = vadd.f32 %v617, %v831
  %v876 = vadd.f32 %v618, %v834
  %v877 = vadd.f32 %v619, %v839
  %v878 = vadd.f32 %v620, %v842
  %v879 = vadd.f32 %v621, %v847
  %v880 = vadd.f32 %v622, %v850
  %v881 = vadd.f32 %v623, %v855
  %v882 = vadd.f32 %v624, %v858
  %v883 = vadd.f32 %v625, %v863
  %v884 = vadd.f32 %v626, %v866
  %885 = vst [vmem:[#allocation2] sm:$0xff] %v869
  %886 = vst [vmem:[#allocation2 + $0x8] sm:$0xff] %v870
  %887 = vst [vmem:[#allocation2 + $0x10] sm:$0xff] %v871
  %888 = vst [vmem:[#allocation2 + $0x18] sm:$0xff] %v872
  %889 = vst [vmem:[#allocation2 + $0x20] sm:$0xff] %v873
  %890 = vst [vmem:[#allocation2 + $0x28] sm:$0xff] %v874
  %891 = vst [vmem:[#allocation2 + $0x30] sm:$0xff] %v875
  %892 = vst [vmem:[#allocation2 + $0x38] sm:$0xff] %v876
  %893 = vst [vmem:[#allocation2 + $0x40] sm:$0xff] %v877
  %894 = vst [vmem:[#allocation2 + $0x48] sm:$0xff] %v878
  %895 = vst [vmem:[#allocation2 + $0x50] sm:$0xff] %v879
  %896 = vst [vmem:[#allocation2 + $0x58] sm:$0xff] %v880
  %897 = vst [vmem:[#allocation2 + $0x60] sm:$0xff] %v881
  %898 = vst [vmem:[#allocation2 + $0x68] sm:$0xff] %v882
  %899 = vst [vmem:[#allocation2 + $0x70] sm:$0xff] %v883
  %900 = vst [vmem:[#allocation2 + $0x78] sm:$0xff] %v884
  %v901 = vld [vmem:[#allocation2] sm:$0xff]
  %v902 = vld [vmem:[#allocation2 + $0x8] sm:$0xff]
  %v903 = vld [vmem:[#allocation2 + $0x10] sm:$0xff]
  %v904 = vld [vmem:[#allocation2 + $0x18] sm:$0xff]
  %v905 = vld [vmem:[#allocation2 + $0x20] sm:$0xff]
  %v906 = vld [vmem:[#allocation2 + $0x28] sm:$0xff]
  %v907 = vld [vmem:[#allocation2 + $0x30] sm:$0xff]
  %v908 = vld [vmem:[#allocation2 + $0x38] sm:$0xff]
  %v909 = vld [vmem:[#allocation2 + $0x40] sm:$0xff]
  %v910 = vld [vmem:[#allocation2 + $0x48] sm:$0xff]
  %v911 = vld [vmem:[#allocation2 + $0x50] sm:$0xff]
  %v912 = vld [vmem:[#allocation2 + $0x58] sm:$0xff]
  %v913 = vld [vmem:[#allocation2 + $0x60] sm:$0xff]
  %v914 = vld [vmem:[#allocation2 + $0x68] sm:$0xff]
  %v915 = vld [vmem:[#allocation2 + $0x70] sm:$0xff]
  %v916 = vld [vmem:[#allocation2 + $0x78] sm:$0xff]
  %s917 = scalar_lea.vmem %s0, 576
  %v918 = vld [vmem:[%s917] sm:$0xff]
  %v919 = vld [vmem:[%s917 + $0x10] sm:$0xff]
  %v920 = vld [vmem:[%s917 + $0x20] sm:$0xff]
  %v921 = vld [vmem:[%s917 + $0x30] sm:$0xff]
  %v922 = vld [vmem:[%s917 + $0x40] sm:$0xff]
  %v923 = vld [vmem:[%s917 + $0x50] sm:$0xff]
  %v924 = vld [vmem:[%s917 + $0x60] sm:$0xff]
  %v925 = vld [vmem:[%s917 + $0x70] sm:$0xff]
  %v926 = vld [vmem:[%s917 + $0x90] sm:$0xff]
  %v927 = vld [vmem:[%s917 + $0xa0] sm:$0xff]
  %v928 = vld [vmem:[%s917 + $0xb0] sm:$0xff]
  %v929 = vld [vmem:[%s917 + $0xc0] sm:$0xff]
  %v930 = vld [vmem:[%s917 + $0xd0] sm:$0xff]
  %v931 = vld [vmem:[%s917 + $0xe0] sm:$0xff]
  %v932 = vld [vmem:[%s917 + $0xf0] sm:$0xff]
  %v933 = vld [vmem:[%s917 + $0x100] sm:$0xff]
  %v934 = vpack.c.bf16 %v918, %v918
  %v935 = vpack.c.bf16 %v919, %v919
  %v936 = vpack.c.bf16 %v920, %v920
  %v937 = vpack.c.bf16 %v921, %v921
  %v938 = vpack.c.bf16 %v922, %v922
  %v939 = vpack.c.bf16 %v923, %v923
  %v940 = vpack.c.bf16 %v924, %v924
  %v941 = vpack.c.bf16 %v925, %v925
  %v942 = vpack.c.bf16 %v926, %v926
  %v943 = vpack.c.bf16 %v927, %v927
  %v944 = vpack.c.bf16 %v928, %v928
  %v945 = vpack.c.bf16 %v929, %v929
  %v946 = vpack.c.bf16 %v930, %v930
  %v947 = vpack.c.bf16 %v931, %v931
  %v948 = vpack.c.bf16 %v932, %v932
  %v949 = vpack.c.bf16 %v933, %v933
  %s950 = scalar_lea.vmem %s1, 192
  %v951 = vld [vmem:[%s950] sm:$0xf]
  %v952 = vld [vmem:[%s950 + $0x4] sm:$0xf]
  %v953 = vld [vmem:[%s950 + $0x8] sm:$0xf]
  %v954 = vld [vmem:[%s950 + $0xc] sm:$0xf]
  %v955 = vld [vmem:[%s950 + $0x10] sm:$0xf]
  %v956 = vld [vmem:[%s950 + $0x14] sm:$0xf]
  %v957 = vld [vmem:[%s950 + $0x18] sm:$0xf]
  %v958 = vld [vmem:[%s950 + $0x1c] sm:$0xf]
  %v959 = vld [vmem:[%s950 + $0x20] sm:$0xf]
  %v960 = vld [vmem:[%s950 + $0x24] sm:$0xf]
  %v961 = vld [vmem:[%s950 + $0x28] sm:$0xf]
  %v962 = vld [vmem:[%s950 + $0x2c] sm:$0xf]
  %v963 = vld [vmem:[%s950 + $0x30] sm:$0xf]
  %v964 = vld [vmem:[%s950 + $0x34] sm:$0xf]
  %v965 = vld [vmem:[%s950 + $0x38] sm:$0xf]
  %v966 = vld [vmem:[%s950 + $0x3c] sm:$0xf]
  %v983 = vunpack.c.l.b16 %v934
  %v984 = vunpack.c.l.b16 %v935
  %v985 = vunpack.c.l.b16 %v936
  %v986 = vunpack.c.l.b16 %v937
  %v987 = vunpack.c.l.b16 %v938
  %v988 = vunpack.c.l.b16 %v939
  %v989 = vunpack.c.l.b16 %v940
  %v990 = vunpack.c.l.b16 %v941
  %v991 = vunpack.c.l.b16 %v942
  %v992 = vunpack.c.l.b16 %v943
  %v993 = vunpack.c.l.b16 %v944
  %v994 = vunpack.c.l.b16 %v945
  %v995 = vunpack.c.l.b16 %v946
  %v996 = vunpack.c.l.b16 %v947
  %v997 = vunpack.c.l.b16 %v948
  %v998 = vunpack.c.l.b16 %v949
  %v999 = vpack.c.b16 %v984, %v983
  %v1000 = vpack.c.b16 %v986, %v985
  %v1001 = vpack.c.b16 %v988, %v987
  %v1002 = vpack.c.b16 %v990, %v989
  %v1003 = vpack.c.b16 %v992, %v991
  %v1004 = vpack.c.b16 %v994, %v993
  %v1005 = vpack.c.b16 %v996, %v995
  %v1006 = vpack.c.b16 %v998, %v997
  %v1031 = vunpack.c.l.b16 %v951
  %v1032 = vunpack.c.l.b16 %v952
  %v1033 = vunpack.c.l.b16 %v953
  %v1034 = vunpack.c.l.b16 %v954
  %v1035 = vunpack.c.l.b16 %v955
  %v1036 = vunpack.c.l.b16 %v956
  %v1037 = vunpack.c.l.b16 %v957
  %v1038 = vunpack.c.l.b16 %v958
  %v1039 = vunpack.c.l.b16 %v959
  %v1040 = vunpack.c.l.b16 %v960
  %v1041 = vunpack.c.l.b16 %v961
  %v1042 = vunpack.c.l.b16 %v962
  %v1043 = vunpack.c.l.b16 %v963
  %v1044 = vunpack.c.l.b16 %v964
  %v1045 = vunpack.c.l.b16 %v965
  %v1046 = vunpack.c.l.b16 %v966
  %v1047 = vpack.c.b16 %v1032, %v1031
  %v1048 = vpack.c.b16 %v1034, %v1033
  %v1049 = vpack.c.b16 %v1036, %v1035
  %v1050 = vpack.c.b16 %v1038, %v1037
  %v1051 = vpack.c.b16 %v1040, %v1039
  %v1052 = vpack.c.b16 %v1042, %v1041
  %v1053 = vpack.c.b16 %v1044, %v1043
  %v1054 = vpack.c.b16 %v1046, %v1045
  %1063 = vmatprep.subr.bf16.mxu0 0
  %1064 = vmatpush1.bf16.msra.mxu0 %v1054
  %1065 = vmatprep.subr.bf16.mxu0 0
  %1066 = vmatpush1.bf16.msra.mxu0 %v1053
  %1067 = vmatprep.subr.bf16.mxu0 0
  %1068 = vmatpush1.bf16.msra.mxu0 %v1052
  %1069 = vmatprep.subr.bf16.mxu0 0
  %1070 = vmatpush1.bf16.msra.mxu0 %v1051
  %1071 = vmatprep.subr.bf16.mxu0 0
  %1072 = vmatpush1.bf16.msra.mxu0 %v1050
  %1073 = vmatprep.subr.bf16.mxu0 0
  %1074 = vmatpush1.bf16.msra.mxu0 %v1049
  %1075 = vmatprep.subr.bf16.mxu0 0
  %1076 = vmatpush1.bf16.msra.mxu0 %v1048
  %1077 = vmatprep.subr.bf16.mxu0 0
  %1078 = vmatpush1.bf16.msra.mxu0 %v1047
  %1079 = vmatprep.subr.bf16.mxu0 0
  %1080 = vmatpush2.bf16.msra.mxu0 0
  %1081 = vmatprep.subr.bf16.mxu0 0
  %1082 = vmatpush2.bf16.msra.mxu0 0
  %1083 = vmatprep.subr.bf16.mxu0 0
  %1084 = vmatpush2.bf16.msra.mxu0 0
  %1085 = vmatprep.subr.bf16.mxu0 0
  %1086 = vmatpush2.bf16.msra.mxu0 0
  %1087 = vmatprep.subr.bf16.mxu0 0
  %1088 = vmatpush2.bf16.msra.mxu0 0
  %1089 = vmatprep.subr.bf16.mxu0 0
  %1090 = vmatpush2.bf16.msra.mxu0 0
  %1091 = vmatprep.subr.bf16.mxu0 0
  %1092 = vmatpush2.bf16.msra.mxu0 0
  %1093 = vmatprep.subr.bf16.mxu0 0
  %1094 = vmatpush2.bf16.msra.mxu0 0
  %1095 = vmatprep.mubr.bf16.mxu0 0
  %1096 = vmatmul.mubr.bf16.gmra.mxu0 %v999
  %v1097 = vpop.f32.mrf.mxu0
  %v1098 = vadd.f32 0.0, %v1097
  %v1099 = vpop.f32.mrf.mxu0
  %v1100 = vpop.f32.mrf.mxu0
  %v1101 = vadd.f32 0.0, %v1100
  %v1102 = vpop.f32.mrf.mxu0
  %1103 = vmatprep.mubr.bf16.mxu0 0
  %1104 = vmatmul.mubr.bf16.gmra.mxu0 %v1000
  %v1105 = vpop.f32.mrf.mxu0
  %v1106 = vadd.f32 0.0, %v1105
  %v1107 = vpop.f32.mrf.mxu0
  %v1108 = vpop.f32.mrf.mxu0
  %v1109 = vadd.f32 0.0, %v1108
  %v1110 = vpop.f32.mrf.mxu0
  %1111 = vmatprep.mubr.bf16.mxu0 0
  %1112 = vmatmul.mubr.bf16.gmra.mxu0 %v1001
  %v1113 = vpop.f32.mrf.mxu0
  %v1114 = vadd.f32 0.0, %v1113
  %v1115 = vpop.f32.mrf.mxu0
  %v1116 = vpop.f32.mrf.mxu0
  %v1117 = vadd.f32 0.0, %v1116
  %v1118 = vpop.f32.mrf.mxu0
  %1119 = vmatprep.mubr.bf16.mxu0 0
  %1120 = vmatmul.mubr.bf16.gmra.mxu0 %v1002
  %v1121 = vpop.f32.mrf.mxu0
  %v1122 = vadd.f32 0.0, %v1121
  %v1123 = vpop.f32.mrf.mxu0
  %v1124 = vpop.f32.mrf.mxu0
  %v1125 = vadd.f32 0.0, %v1124
  %v1126 = vpop.f32.mrf.mxu0
  %1127 = vmatprep.mubr.bf16.mxu0 0
  %1128 = vmatmul.mubr.bf16.gmra.mxu0 %v1003
  %v1129 = vpop.f32.mrf.mxu0
  %v1130 = vadd.f32 0.0, %v1129
  %v1131 = vpop.f32.mrf.mxu0
  %v1132 = vpop.f32.mrf.mxu0
  %v1133 = vadd.f32 0.0, %v1132
  %v1134 = vpop.f32.mrf.mxu0
  %1135 = vmatprep.mubr.bf16.mxu0 0
  %1136 = vmatmul.mubr.bf16.gmra.mxu0 %v1004
  %v1137 = vpop.f32.mrf.mxu0
  %v1138 = vadd.f32 0.0, %v1137
  %v1139 = vpop.f32.mrf.mxu0
  %v1140 = vpop.f32.mrf.mxu0
  %v1141 = vadd.f32 0.0, %v1140
  %v1142 = vpop.f32.mrf.mxu0
  %1143 = vmatprep.mubr.bf16.mxu0 0
  %1144 = vmatmul.mubr.bf16.gmra.mxu0 %v1005
  %v1145 = vpop.f32.mrf.mxu0
  %v1146 = vadd.f32 0.0, %v1145
  %v1147 = vpop.f32.mrf.mxu0
  %v1148 = vpop.f32.mrf.mxu0
  %v1149 = vadd.f32 0.0, %v1148
  %v1150 = vpop.f32.mrf.mxu0
  %1151 = vmatprep.mubr.bf16.mxu0 0
  %1152 = vmatmul.mubr.bf16.gmra.mxu0 %v1006
  %v1153 = vpop.f32.mrf.mxu0
  %v1154 = vadd.f32 0.0, %v1153
  %v1155 = vpop.f32.mrf.mxu0
  %v1156 = vpop.f32.mrf.mxu0
  %v1157 = vadd.f32 0.0, %v1156
  %v1158 = vpop.f32.mrf.mxu0
  %1159 = vdwg.mxu0
  %v1160 = vadd.f32 %v901, %v1098
  %v1161 = vadd.f32 %v902, %v1101
  %v1162 = vadd.f32 %v903, %v1106
  %v1163 = vadd.f32 %v904, %v1109
  %v1164 = vadd.f32 %v905, %v1114
  %v1165 = vadd.f32 %v906, %v1117
  %v1166 = vadd.f32 %v907, %v1122
  %v1167 = vadd.f32 %v908, %v1125
  %v1168 = vadd.f32 %v909, %v1130
  %v1169 = vadd.f32 %v910, %v1133
  %v1170 = vadd.f32 %v911, %v1138
  %v1171 = vadd.f32 %v912, %v1141
  %v1172 = vadd.f32 %v913, %v1146
  %v1173 = vadd.f32 %v914, %v1149
  %v1174 = vadd.f32 %v915, %v1154
  %v1175 = vadd.f32 %v916, %v1157
  %1176 = vst [vmem:[#allocation2] sm:$0xff] %v1160
  %1177 = vst [vmem:[#allocation2 + $0x8] sm:$0xff] %v1161
  %1178 = vst [vmem:[#allocation2 + $0x10] sm:$0xff] %v1162
  %1179 = vst [vmem:[#allocation2 + $0x18] sm:$0xff] %v1163
  %1180 = vst [vmem:[#allocation2 + $0x20] sm:$0xff] %v1164
  %1181 = vst [vmem:[#allocation2 + $0x28] sm:$0xff] %v1165
  %1182 = vst [vmem:[#allocation2 + $0x30] sm:$0xff] %v1166
  %1183 = vst [vmem:[#allocation2 + $0x38] sm:$0xff] %v1167
  %1184 = vst [vmem:[#allocation2 + $0x40] sm:$0xff] %v1168
  %1185 = vst [vmem:[#allocation2 + $0x48] sm:$0xff] %v1169
  %1186 = vst [vmem:[#allocation2 + $0x50] sm:$0xff] %v1170
  %1187 = vst [vmem:[#allocation2 + $0x58] sm:$0xff] %v1171
  %1188 = vst [vmem:[#allocation2 + $0x60] sm:$0xff] %v1172
  %1189 = vst [vmem:[#allocation2 + $0x68] sm:$0xff] %v1173
  %1190 = vst [vmem:[#allocation2 + $0x70] sm:$0xff] %v1174
  %1191 = vst [vmem:[#allocation2 + $0x78] sm:$0xff] %v1175
  %v1192 = vld [vmem:[#allocation2] sm:$0xff]
  %v1193 = vld [vmem:[#allocation2 + $0x8] sm:$0xff]
  %v1194 = vld [vmem:[#allocation2 + $0x10] sm:$0xff]
  %v1195 = vld [vmem:[#allocation2 + $0x18] sm:$0xff]
  %v1196 = vld [vmem:[#allocation2 + $0x20] sm:$0xff]
  %v1197 = vld [vmem:[#allocation2 + $0x28] sm:$0xff]
  %v1198 = vld [vmem:[#allocation2 + $0x30] sm:$0xff]
  %v1199 = vld [vmem:[#allocation2 + $0x38] sm:$0xff]
  %v1200 = vld [vmem:[#allocation2 + $0x40] sm:$0xff]
  %v1201 = vld [vmem:[#allocation2 + $0x48] sm:$0xff]
  %v1202 = vld [vmem:[#allocation2 + $0x50] sm:$0xff]
  %v1203 = vld [vmem:[#allocation2 + $0x58] sm:$0xff]
  %v1204 = vld [vmem:[#allocation2 + $0x60] sm:$0xff]
  %v1205 = vld [vmem:[#allocation2 + $0x68] sm:$0xff]
  %v1206 = vld [vmem:[#allocation2 + $0x70] sm:$0xff]
  %v1207 = vld [vmem:[#allocation2 + $0x78] sm:$0xff]
  %s1208 = scalar_lea.vmem %s0, 864
  %v1209 = vld [vmem:[%s1208] sm:$0xff]
  %v1210 = vld [vmem:[%s1208 + $0x10] sm:$0xff]
  %v1211 = vld [vmem:[%s1208 + $0x20] sm:$0xff]
  %v1212 = vld [vmem:[%s1208 + $0x30] sm:$0xff]
  %v1213 = vld [vmem:[%s1208 + $0x40] sm:$0xff]
  %v1214 = vld [vmem:[%s1208 + $0x50] sm:$0xff]
  %v1215 = vld [vmem:[%s1208 + $0x60] sm:$0xff]
  %v1216 = vld [vmem:[%s1208 + $0x70] sm:$0xff]
  %v1217 = vld [vmem:[%s1208 + $0x90] sm:$0xff]
  %v1218 = vld [vmem:[%s1208 + $0xa0] sm:$0xff]
  %v1219 = vld [vmem:[%s1208 + $0xb0] sm:$0xff]
  %v1220 = vld [vmem:[%s1208 + $0xc0] sm:$0xff]
  %v1221 = vld [vmem:[%s1208 + $0xd0] sm:$0xff]
  %v1222 = vld [vmem:[%s1208 + $0xe0] sm:$0xff]
  %v1223 = vld [vmem:[%s1208 + $0xf0] sm:$0xff]
  %v1224 = vld [vmem:[%s1208 + $0x100] sm:$0xff]
  %v1225 = vpack.c.bf16 %v1209, %v1209
  %v1226 = vpack.c.bf16 %v1210, %v1210
  %v1227 = vpack.c.bf16 %v1211, %v1211
  %v1228 = vpack.c.bf16 %v1212, %v1212
  %v1229 = vpack.c.bf16 %v1213, %v1213
  %v1230 = vpack.c.bf16 %v1214, %v1214
  %v1231 = vpack.c.bf16 %v1215, %v1215
  %v1232 = vpack.c.bf16 %v1216, %v1216
  %v1233 = vpack.c.bf16 %v1217, %v1217
  %v1234 = vpack.c.bf16 %v1218, %v1218
  %v1235 = vpack.c.bf16 %v1219, %v1219
  %v1236 = vpack.c.bf16 %v1220, %v1220
  %v1237 = vpack.c.bf16 %v1221, %v1221
  %v1238 = vpack.c.bf16 %v1222, %v1222
  %v1239 = vpack.c.bf16 %v1223, %v1223
  %v1240 = vpack.c.bf16 %v1224, %v1224
  %s1241 = scalar_lea.vmem %s1, 256
  %v1242 = vld [vmem:[%s1241] sm:$0xf]
  %v1243 = vld [vmem:[%s1241 + $0x4] sm:$0xf]
  %v1244 = vld [vmem:[%s1241 + $0x8] sm:$0xf]
  %v1245 = vld [vmem:[%s1241 + $0xc] sm:$0xf]
  %v1246 = vld [vmem:[%s1241 + $0x10] sm:$0xf]
  %v1247 = vld [vmem:[%s1241 + $0x14] sm:$0xf]
  %v1248 = vld [vmem:[%s1241 + $0x18] sm:$0xf]
  %v1249 = vld [vmem:[%s1241 + $0x1c] sm:$0xf]
  %v1250 = vld [vmem:[%s1241 + $0x20] sm:$0xf]
  %v1251 = vld [vmem:[%s1241 + $0x24] sm:$0xf]
  %v1252 = vld [vmem:[%s1241 + $0x28] sm:$0xf]
  %v1253 = vld [vmem:[%s1241 + $0x2c] sm:$0xf]
  %v1254 = vld [vmem:[%s1241 + $0x30] sm:$0xf]
  %v1255 = vld [vmem:[%s1241 + $0x34] sm:$0xf]
  %v1256 = vld [vmem:[%s1241 + $0x38] sm:$0xf]
  %v1257 = vld [vmem:[%s1241 + $0x3c] sm:$0xf]
  %v1274 = vunpack.c.l.b16 %v1225
  %v1275 = vunpack.c.l.b16 %v1226
  %v1276 = vunpack.c.l.b16 %v1227
  %v1277 = vunpack.c.l.b16 %v1228
  %v1278 = vunpack.c.l.b16 %v1229
  %v1279 = vunpack.c.l.b16 %v1230
  %v1280 = vunpack.c.l.b16 %v1231
  %v1281 = vunpack.c.l.b16 %v1232
  %v1282 = vunpack.c.l.b16 %v1233
  %v1283 = vunpack.c.l.b16 %v1234
  %v1284 = vunpack.c.l.b16 %v1235
  %v1285 = vunpack.c.l.b16 %v1236
  %v1286 = vunpack.c.l.b16 %v1237
  %v1287 = vunpack.c.l.b16 %v1238
  %v1288 = vunpack.c.l.b16 %v1239
  %v1289 = vunpack.c.l.b16 %v1240
  %v1290 = vpack.c.b16 %v1275, %v1274
  %v1291 = vpack.c.b16 %v1277, %v1276
  %v1292 = vpack.c.b16 %v1279, %v1278
  %v1293 = vpack.c.b16 %v1281, %v1280
  %v1294 = vpack.c.b16 %v1283, %v1282
  %v1295 = vpack.c.b16 %v1285, %v1284
  %v1296 = vpack.c.b16 %v1287, %v1286
  %v1297 = vpack.c.b16 %v1289, %v1288
  %v1322 = vunpack.c.l.b16 %v1242
  %v1323 = vunpack.c.l.b16 %v1243
  %v1324 = vunpack.c.l.b16 %v1244
  %v1325 = vunpack.c.l.b16 %v1245
  %v1326 = vunpack.c.l.b16 %v1246
  %v1327 = vunpack.c.l.b16 %v1247
  %v1328 = vunpack.c.l.b16 %v1248
  %v1329 = vunpack.c.l.b16 %v1249
  %v1330 = vunpack.c.l.b16 %v1250
  %v1331 = vunpack.c.l.b16 %v1251
  %v1332 = vunpack.c.l.b16 %v1252
  %v1333 = vunpack.c.l.b16 %v1253
  %v1334 = vunpack.c.l.b16 %v1254
  %v1335 = vunpack.c.l.b16 %v1255
  %v1336 = vunpack.c.l.b16 %v1256
  %v1337 = vunpack.c.l.b16 %v1257
  %v1338 = vpack.c.b16 %v1323, %v1322
  %v1339 = vpack.c.b16 %v1325, %v1324
  %v1340 = vpack.c.b16 %v1327, %v1326
  %v1341 = vpack.c.b16 %v1329, %v1328
  %v1342 = vpack.c.b16 %v1331, %v1330
  %v1343 = vpack.c.b16 %v1333, %v1332
  %v1344 = vpack.c.b16 %v1335, %v1334
  %v1345 = vpack.c.b16 %v1337, %v1336
  %1354 = vmatprep.subr.bf16.mxu0 0
  %1355 = vmatpush1.bf16.msra.mxu0 %v1345
  %1356 = vmatprep.subr.bf16.mxu0 0
  %1357 = vmatpush1.bf16.msra.mxu0 %v1344
  %1358 = vmatprep.subr.bf16.mxu0 0
  %1359 = vmatpush1.bf16.msra.mxu0 %v1343
  %1360 = vmatprep.subr.bf16.mxu0 0
  %1361 = vmatpush1.bf16.msra.mxu0 %v1342
  %1362 = vmatprep.subr.bf16.mxu0 0
  %1363 = vmatpush1.bf16.msra.mxu0 %v1341
  %1364 = vmatprep.subr.bf16.mxu0 0
  %1365 = vmatpush1.bf16.msra.mxu0 %v1340
  %1366 = vmatprep.subr.bf16.mxu0 0
  %1367 = vmatpush1.bf16.msra.mxu0 %v1339
  %1368 = vmatprep.subr.bf16.mxu0 0
  %1369 = vmatpush1.bf16.msra.mxu0 %v1338
  %1370 = vmatprep.subr.bf16.mxu0 0
  %1371 = vmatpush2.bf16.msra.mxu0 0
  %1372 = vmatprep.subr.bf16.mxu0 0
  %1373 = vmatpush2.bf16.msra.mxu0 0
  %1374 = vmatprep.subr.bf16.mxu0 0
  %1375 = vmatpush2.bf16.msra.mxu0 0
  %1376 = vmatprep.subr.bf16.mxu0 0
  %1377 = vmatpush2.bf16.msra.mxu0 0
  %1378 = vmatprep.subr.bf16.mxu0 0
  %1379 = vmatpush2.bf16.msra.mxu0 0
  %1380 = vmatprep.subr.bf16.mxu0 0
  %1381 = vmatpush2.bf16.msra.mxu0 0
  %1382 = vmatprep.subr.bf16.mxu0 0
  %1383 = vmatpush2.bf16.msra.mxu0 0
  %1384 = vmatprep.subr.bf16.mxu0 0
  %1385 = vmatpush2.bf16.msra.mxu0 0
  %1386 = vmatprep.mubr.bf16.mxu0 0
  %1387 = vmatmul.mubr.bf16.gmra.mxu0 %v1290
  %v1388 = vpop.f32.mrf.mxu0
  %v1389 = vadd.f32 0.0, %v1388
  %v1390 = vpop.f32.mrf.mxu0
  %v1391 = vpop.f32.mrf.mxu0
  %v1392 = vadd.f32 0.0, %v1391
  %v1393 = vpop.f32.mrf.mxu0
  %1394 = vmatprep.mubr.bf16.mxu0 0
  %1395 = vmatmul.mubr.bf16.gmra.mxu0 %v1291
  %v1396 = vpop.f32.mrf.mxu0
  %v1397 = vadd.f32 0.0, %v1396
  %v1398 = vpop.f32.mrf.mxu0
  %v1399 = vpop.f32.mrf.mxu0
  %v1400 = vadd.f32 0.0, %v1399
  %v1401 = vpop.f32.mrf.mxu0
  %1402 = vmatprep.mubr.bf16.mxu0 0
  %1403 = vmatmul.mubr.bf16.gmra.mxu0 %v1292
  %v1404 = vpop.f32.mrf.mxu0
  %v1405 = vadd.f32 0.0, %v1404
  %v1406 = vpop.f32.mrf.mxu0
  %v1407 = vpop.f32.mrf.mxu0
  %v1408 = vadd.f32 0.0, %v1407
  %v1409 = vpop.f32.mrf.mxu0
  %1410 = vmatprep.mubr.bf16.mxu0 0
  %1411 = vmatmul.mubr.bf16.gmra.mxu0 %v1293
  %v1412 = vpop.f32.mrf.mxu0
  %v1413 = vadd.f32 0.0, %v1412
  %v1414 = vpop.f32.mrf.mxu0
  %v1415 = vpop.f32.mrf.mxu0
  %v1416 = vadd.f32 0.0, %v1415
  %v1417 = vpop.f32.mrf.mxu0
  %1418 = vmatprep.mubr.bf16.mxu0 0
  %1419 = vmatmul.mubr.bf16.gmra.mxu0 %v1294
  %v1420 = vpop.f32.mrf.mxu0
  %v1421 = vadd.f32 0.0, %v1420
  %v1422 = vpop.f32.mrf.mxu0
  %v1423 = vpop.f32.mrf.mxu0
  %v1424 = vadd.f32 0.0, %v1423
  %v1425 = vpop.f32.mrf.mxu0
  %1426 = vmatprep.mubr.bf16.mxu0 0
  %1427 = vmatmul.mubr.bf16.gmra.mxu0 %v1295
  %v1428 = vpop.f32.mrf.mxu0
  %v1429 = vadd.f32 0.0, %v1428
  %v1430 = vpop.f32.mrf.mxu0
  %v1431 = vpop.f32.mrf.mxu0
  %v1432 = vadd.f32 0.0, %v1431
  %v1433 = vpop.f32.mrf.mxu0
  %1434 = vmatprep.mubr.bf16.mxu0 0
  %1435 = vmatmul.mubr.bf16.gmra.mxu0 %v1296
  %v1436 = vpop.f32.mrf.mxu0
  %v1437 = vadd.f32 0.0, %v1436
  %v1438 = vpop.f32.mrf.mxu0
  %v1439 = vpop.f32.mrf.mxu0
  %v1440 = vadd.f32 0.0, %v1439
  %v1441 = vpop.f32.mrf.mxu0
  %1442 = vmatprep.mubr.bf16.mxu0 0
  %1443 = vmatmul.mubr.bf16.gmra.mxu0 %v1297
  %v1444 = vpop.f32.mrf.mxu0
  %v1445 = vadd.f32 0.0, %v1444
  %v1446 = vpop.f32.mrf.mxu0
  %v1447 = vpop.f32.mrf.mxu0
  %v1448 = vadd.f32 0.0, %v1447
  %v1449 = vpop.f32.mrf.mxu0
  %1450 = vdwg.mxu0
  %v1451 = vadd.f32 %v1192, %v1389
  %v1452 = vadd.f32 %v1193, %v1392
  %v1453 = vadd.f32 %v1194, %v1397
  %v1454 = vadd.f32 %v1195, %v1400
  %v1455 = vadd.f32 %v1196, %v1405
  %v1456 = vadd.f32 %v1197, %v1408
  %v1457 = vadd.f32 %v1198, %v1413
  %v1458 = vadd.f32 %v1199, %v1416
  %v1459 = vadd.f32 %v1200, %v1421
  %v1460 = vadd.f32 %v1201, %v1424
  %v1461 = vadd.f32 %v1202, %v1429
  %v1462 = vadd.f32 %v1203, %v1432
  %v1463 = vadd.f32 %v1204, %v1437
  %v1464 = vadd.f32 %v1205, %v1440
  %v1465 = vadd.f32 %v1206, %v1445
  %v1466 = vadd.f32 %v1207, %v1448
  %1467 = vst [vmem:[#allocation2] sm:$0xff] %v1451
  %1468 = vst [vmem:[#allocation2 + $0x8] sm:$0xff] %v1452
  %1469 = vst [vmem:[#allocation2 + $0x10] sm:$0xff] %v1453
  %1470 = vst [vmem:[#allocation2 + $0x18] sm:$0xff] %v1454
  %1471 = vst [vmem:[#allocation2 + $0x20] sm:$0xff] %v1455
  %1472 = vst [vmem:[#allocation2 + $0x28] sm:$0xff] %v1456
  %1473 = vst [vmem:[#allocation2 + $0x30] sm:$0xff] %v1457
  %1474 = vst [vmem:[#allocation2 + $0x38] sm:$0xff] %v1458
  %1475 = vst [vmem:[#allocation2 + $0x40] sm:$0xff] %v1459
  %1476 = vst [vmem:[#allocation2 + $0x48] sm:$0xff] %v1460
  %1477 = vst [vmem:[#allocation2 + $0x50] sm:$0xff] %v1461
  %1478 = vst [vmem:[#allocation2 + $0x58] sm:$0xff] %v1462
  %1479 = vst [vmem:[#allocation2 + $0x60] sm:$0xff] %v1463
  %1480 = vst [vmem:[#allocation2 + $0x68] sm:$0xff] %v1464
  %1481 = vst [vmem:[#allocation2 + $0x70] sm:$0xff] %v1465
  %1482 = vst [vmem:[#allocation2 + $0x78] sm:$0xff] %v1466
  %v1483 = vld [vmem:[#allocation2] sm:$0xff]
  %v1484 = vld [vmem:[#allocation2 + $0x8] sm:$0xff]
  %v1485 = vld [vmem:[#allocation2 + $0x10] sm:$0xff]
  %v1486 = vld [vmem:[#allocation2 + $0x18] sm:$0xff]
  %v1487 = vld [vmem:[#allocation2 + $0x20] sm:$0xff]
  %v1488 = vld [vmem:[#allocation2 + $0x28] sm:$0xff]
  %v1489 = vld [vmem:[#allocation2 + $0x30] sm:$0xff]
  %v1490 = vld [vmem:[#allocation2 + $0x38] sm:$0xff]
  %v1491 = vld [vmem:[#allocation2 + $0x40] sm:$0xff]
  %v1492 = vld [vmem:[#allocation2 + $0x48] sm:$0xff]
  %v1493 = vld [vmem:[#allocation2 + $0x50] sm:$0xff]
  %v1494 = vld [vmem:[#allocation2 + $0x58] sm:$0xff]
  %v1495 = vld [vmem:[#allocation2 + $0x60] sm:$0xff]
  %v1496 = vld [vmem:[#allocation2 + $0x68] sm:$0xff]
  %v1497 = vld [vmem:[#allocation2 + $0x70] sm:$0xff]
  %v1498 = vld [vmem:[#allocation2 + $0x78] sm:$0xff]
  %v1499 = vld [vmem:[%s917 + $0x1] sm:$0xff]
  %v1500 = vld [vmem:[%s917 + $0x11] sm:$0xff]
  %v1501 = vld [vmem:[%s917 + $0x21] sm:$0xff]
  %v1502 = vld [vmem:[%s917 + $0x31] sm:$0xff]
  %v1503 = vld [vmem:[%s917 + $0x41] sm:$0xff]
  %v1504 = vld [vmem:[%s917 + $0x51] sm:$0xff]
  %v1505 = vld [vmem:[%s917 + $0x61] sm:$0xff]
  %v1506 = vld [vmem:[%s917 + $0x71] sm:$0xff]
  %v1507 = vld [vmem:[%s917 + $0x91] sm:$0xff]
  %v1508 = vld [vmem:[%s917 + $0xa1] sm:$0xff]
  %v1509 = vld [vmem:[%s917 + $0xb1] sm:$0xff]
  %v1510 = vld [vmem:[%s917 + $0xc1] sm:$0xff]
  %v1511 = vld [vmem:[%s917 + $0xd1] sm:$0xff]
  %v1512 = vld [vmem:[%s917 + $0xe1] sm:$0xff]
  %v1513 = vld [vmem:[%s917 + $0xf1] sm:$0xff]
  %v1514 = vld [vmem:[%s917 + $0x101] sm:$0xff]
  %v1515 = vpack.c.bf16 %v1499, %v1499
  %v1516 = vpack.c.bf16 %v1500, %v1500
  %v1517 = vpack.c.bf16 %v1501, %v1501
  %v1518 = vpack.c.bf16 %v1502, %v1502
  %v1519 = vpack.c.bf16 %v1503, %v1503
  %v1520 = vpack.c.bf16 %v1504, %v1504
  %v1521 = vpack.c.bf16 %v1505, %v1505
  %v1522 = vpack.c.bf16 %v1506, %v1506
  %v1523 = vpack.c.bf16 %v1507, %v1507
  %v1524 = vpack.c.bf16 %v1508, %v1508
  %v1525 = vpack.c.bf16 %v1509, %v1509
  %v1526 = vpack.c.bf16 %v1510, %v1510
  %v1527 = vpack.c.bf16 %v1511, %v1511
  %v1528 = vpack.c.bf16 %v1512, %v1512
  %v1529 = vpack.c.bf16 %v1513, %v1513
  %v1530 = vpack.c.bf16 %v1514, %v1514
  %s1531 = scalar_lea.vmem %s1, 320
  %v1532 = vld [vmem:[%s1531] sm:$0xf]
  %v1533 = vld [vmem:[%s1531 + $0x4] sm:$0xf]
  %v1534 = vld [vmem:[%s1531 + $0x8] sm:$0xf]
  %v1535 = vld [vmem:[%s1531 + $0xc] sm:$0xf]
  %v1536 = vld [vmem:[%s1531 + $0x10] sm:$0xf]
  %v1537 = vld [vmem:[%s1531 + $0x14] sm:$0xf]
  %v1538 = vld [vmem:[%s1531 + $0x18] sm:$0xf]
  %v1539 = vld [vmem:[%s1531 + $0x1c] sm:$0xf]
  %v1540 = vld [vmem:[%s1531 + $0x20] sm:$0xf]
  %v1541 = vld [vmem:[%s1531 + $0x24] sm:$0xf]
  %v1542 = vld [vmem:[%s1531 + $0x28] sm:$0xf]
  %v1543 = vld [vmem:[%s1531 + $0x2c] sm:$0xf]
  %v1544 = vld [vmem:[%s1531 + $0x30] sm:$0xf]
  %v1545 = vld [vmem:[%s1531 + $0x34] sm:$0xf]
  %v1546 = vld [vmem:[%s1531 + $0x38] sm:$0xf]
  %v1547 = vld [vmem:[%s1531 + $0x3c] sm:$0xf]
  %v1564 = vunpack.c.l.b16 %v1515
  %v1565 = vunpack.c.l.b16 %v1516
  %v1566 = vunpack.c.l.b16 %v1517
  %v1567 = vunpack.c.l.b16 %v1518
  %v1568 = vunpack.c.l.b16 %v1519
  %v1569 = vunpack.c.l.b16 %v1520
  %v1570 = vunpack.c.l.b16 %v1521
  %v1571 = vunpack.c.l.b16 %v1522
  %v1572 = vunpack.c.l.b16 %v1523
  %v1573 = vunpack.c.l.b16 %v1524
  %v1574 = vunpack.c.l.b16 %v1525
  %v1575 = vunpack.c.l.b16 %v1526
  %v1576 = vunpack.c.l.b16 %v1527
  %v1577 = vunpack.c.l.b16 %v1528
  %v1578 = vunpack.c.l.b16 %v1529
  %v1579 = vunpack.c.l.b16 %v1530
  %v1580 = vpack.c.b16 %v1565, %v1564
  %v1581 = vpack.c.b16 %v1567, %v1566
  %v1582 = vpack.c.b16 %v1569, %v1568
  %v1583 = vpack.c.b16 %v1571, %v1570
  %v1584 = vpack.c.b16 %v1573, %v1572
  %v1585 = vpack.c.b16 %v1575, %v1574
  %v1586 = vpack.c.b16 %v1577, %v1576
  %v1587 = vpack.c.b16 %v1579, %v1578
  %v1612 = vunpack.c.l.b16 %v1532
  %v1613 = vunpack.c.l.b16 %v1533
  %v1614 = vunpack.c.l.b16 %v1534
  %v1615 = vunpack.c.l.b16 %v1535
  %v1616 = vunpack.c.l.b16 %v1536
  %v1617 = vunpack.c.l.b16 %v1537
  %v1618 = vunpack.c.l.b16 %v1538
  %v1619 = vunpack.c.l.b16 %v1539
  %v1620 = vunpack.c.l.b16 %v1540
  %v1621 = vunpack.c.l.b16 %v1541
  %v1622 = vunpack.c.l.b16 %v1542
  %v1623 = vunpack.c.l.b16 %v1543
  %v1624 = vunpack.c.l.b16 %v1544
  %v1625 = vunpack.c.l.b16 %v1545
  %v1626 = vunpack.c.l.b16 %v1546
  %v1627 = vunpack.c.l.b16 %v1547
  %v1628 = vpack.c.b16 %v1613, %v1612
  %v1629 = vpack.c.b16 %v1615, %v1614
  %v1630 = vpack.c.b16 %v1617, %v1616
  %v1631 = vpack.c.b16 %v1619, %v1618
  %v1632 = vpack.c.b16 %v1621, %v1620
  %v1633 = vpack.c.b16 %v1623, %v1622
  %v1634 = vpack.c.b16 %v1625, %v1624
  %v1635 = vpack.c.b16 %v1627, %v1626
  %1644 = vmatprep.subr.bf16.mxu0 0
  %1645 = vmatpush1.bf16.msra.mxu0 %v1635
  %1646 = vmatprep.subr.bf16.mxu0 0
  %1647 = vmatpush1.bf16.msra.mxu0 %v1634
  %1648 = vmatprep.subr.bf16.mxu0 0
  %1649 = vmatpush1.bf16.msra.mxu0 %v1633
  %1650 = vmatprep.subr.bf16.mxu0 0
  %1651 = vmatpush1.bf16.msra.mxu0 %v1632
  %1652 = vmatprep.subr.bf16.mxu0 0
  %1653 = vmatpush1.bf16.msra.mxu0 %v1631
  %1654 = vmatprep.subr.bf16.mxu0 0
  %1655 = vmatpush1.bf16.msra.mxu0 %v1630
  %1656 = vmatprep.subr.bf16.mxu0 0
  %1657 = vmatpush1.bf16.msra.mxu0 %v1629
  %1658 = vmatprep.subr.bf16.mxu0 0
  %1659 = vmatpush1.bf16.msra.mxu0 %v1628
  %1660 = vmatprep.subr.bf16.mxu0 0
  %1661 = vmatpush2.bf16.msra.mxu0 0
  %1662 = vmatprep.subr.bf16.mxu0 0
  %1663 = vmatpush2.bf16.msra.mxu0 0
  %1664 = vmatprep.subr.bf16.mxu0 0
  %1665 = vmatpush2.bf16.msra.mxu0 0
  %1666 = vmatprep.subr.bf16.mxu0 0
  %1667 = vmatpush2.bf16.msra.mxu0 0
  %1668 = vmatprep.subr.bf16.mxu0 0
  %1669 = vmatpush2.bf16.msra.mxu0 0
  %1670 = vmatprep.subr.bf16.mxu0 0
  %1671 = vmatpush2.bf16.msra.mxu0 0
  %1672 = vmatprep.subr.bf16.mxu0 0
  %1673 = vmatpush2.bf16.msra.mxu0 0
  %1674 = vmatprep.subr.bf16.mxu0 0
  %1675 = vmatpush2.bf16.msra.mxu0 0
  %1676 = vmatprep.mubr.bf16.mxu0 0
  %1677 = vmatmul.mubr.bf16.gmra.mxu0 %v1580
  %v1678 = vpop.f32.mrf.mxu0
  %v1679 = vadd.f32 0.0, %v1678
  %v1680 = vpop.f32.mrf.mxu0
  %v1681 = vpop.f32.mrf.mxu0
  %v1682 = vadd.f32 0.0, %v1681
  %v1683 = vpop.f32.mrf.mxu0
  %1684 = vmatprep.mubr.bf16.mxu0 0
  %1685 = vmatmul.mubr.bf16.gmra.mxu0 %v1581
  %v1686 = vpop.f32.mrf.mxu0
  %v1687 = vadd.f32 0.0, %v1686
  %v1688 = vpop.f32.mrf.mxu0
  %v1689 = vpop.f32.mrf.mxu0
  %v1690 = vadd.f32 0.0, %v1689
  %v1691 = vpop.f32.mrf.mxu0
  %1692 = vmatprep.mubr.bf16.mxu0 0
  %1693 = vmatmul.mubr.bf16.gmra.mxu0 %v1582
  %v1694 = vpop.f32.mrf.mxu0
  %v1695 = vadd.f32 0.0, %v1694
  %v1696 = vpop.f32.mrf.mxu0
  %v1697 = vpop.f32.mrf.mxu0
  %v1698 = vadd.f32 0.0, %v1697
  %v1699 = vpop.f32.mrf.mxu0
  %1700 = vmatprep.mubr.bf16.mxu0 0
  %1701 = vmatmul.mubr.bf16.gmra.mxu0 %v1583
  %v1702 = vpop.f32.mrf.mxu0
  %v1703 = vadd.f32 0.0, %v1702
  %v1704 = vpop.f32.mrf.mxu0
  %v1705 = vpop.f32.mrf.mxu0
  %v1706 = vadd.f32 0.0, %v1705
  %v1707 = vpop.f32.mrf.mxu0
  %1708 = vmatprep.mubr.bf16.mxu0 0
  %1709 = vmatmul.mubr.bf16.gmra.mxu0 %v1584
  %v1710 = vpop.f32.mrf.mxu0
  %v1711 = vadd.f32 0.0, %v1710
  %v1712 = vpop.f32.mrf.mxu0
  %v1713 = vpop.f32.mrf.mxu0
  %v1714 = vadd.f32 0.0, %v1713
  %v1715 = vpop.f32.mrf.mxu0
  %1716 = vmatprep.mubr.bf16.mxu0 0
  %1717 = vmatmul.mubr.bf16.gmra.mxu0 %v1585
  %v1718 = vpop.f32.mrf.mxu0
  %v1719 = vadd.f32 0.0, %v1718
  %v1720 = vpop.f32.mrf.mxu0
  %v1721 = vpop.f32.mrf.mxu0
  %v1722 = vadd.f32 0.0, %v1721
  %v1723 = vpop.f32.mrf.mxu0
  %1724 = vmatprep.mubr.bf16.mxu0 0
  %1725 = vmatmul.mubr.bf16.gmra.mxu0 %v1586
  %v1726 = vpop.f32.mrf.mxu0
  %v1727 = vadd.f32 0.0, %v1726
  %v1728 = vpop.f32.mrf.mxu0
  %v1729 = vpop.f32.mrf.mxu0
  %v1730 = vadd.f32 0.0, %v1729
  %v1731 = vpop.f32.mrf.mxu0
  %1732 = vmatprep.mubr.bf16.mxu0 0
  %1733 = vmatmul.mubr.bf16.gmra.mxu0 %v1587
  %v1734 = vpop.f32.mrf.mxu0
  %v1735 = vadd.f32 0.0, %v1734
  %v1736 = vpop.f32.mrf.mxu0
  %v1737 = vpop.f32.mrf.mxu0
  %v1738 = vadd.f32 0.0, %v1737
  %v1739 = vpop.f32.mrf.mxu0
  %1740 = vdwg.mxu0
  %v1741 = vadd.f32 %v1483, %v1679
  %v1742 = vadd.f32 %v1484, %v1682
  %v1743 = vadd.f32 %v1485, %v1687
  %v1744 = vadd.f32 %v1486, %v1690
  %v1745 = vadd.f32 %v1487, %v1695
  %v1746 = vadd.f32 %v1488, %v1698
  %v1747 = vadd.f32 %v1489, %v1703
  %v1748 = vadd.f32 %v1490, %v1706
  %v1749 = vadd.f32 %v1491, %v1711
  %v1750 = vadd.f32 %v1492, %v1714
  %v1751 = vadd.f32 %v1493, %v1719
  %v1752 = vadd.f32 %v1494, %v1722
  %v1753 = vadd.f32 %v1495, %v1727
  %v1754 = vadd.f32 %v1496, %v1730
  %v1755 = vadd.f32 %v1497, %v1735
  %v1756 = vadd.f32 %v1498, %v1738
  %1757 = vst [vmem:[#allocation2] sm:$0xff] %v1741
  %1758 = vst [vmem:[#allocation2 + $0x8] sm:$0xff] %v1742
  %1759 = vst [vmem:[#allocation2 + $0x10] sm:$0xff] %v1743
  %1760 = vst [vmem:[#allocation2 + $0x18] sm:$0xff] %v1744
  %1761 = vst [vmem:[#allocation2 + $0x20] sm:$0xff] %v1745
  %1762 = vst [vmem:[#allocation2 + $0x28] sm:$0xff] %v1746
  %1763 = vst [vmem:[#allocation2 + $0x30] sm:$0xff] %v1747
  %1764 = vst [vmem:[#allocation2 + $0x38] sm:$0xff] %v1748
  %1765 = vst [vmem:[#allocation2 + $0x40] sm:$0xff] %v1749
  %1766 = vst [vmem:[#allocation2 + $0x48] sm:$0xff] %v1750
  %1767 = vst [vmem:[#allocation2 + $0x50] sm:$0xff] %v1751
  %1768 = vst [vmem:[#allocation2 + $0x58] sm:$0xff] %v1752
  %1769 = vst [vmem:[#allocation2 + $0x60] sm:$0xff] %v1753
  %1770 = vst [vmem:[#allocation2 + $0x68] sm:$0xff] %v1754
  %1771 = vst [vmem:[#allocation2 + $0x70] sm:$0xff] %v1755
  %1772 = vst [vmem:[#allocation2 + $0x78] sm:$0xff] %v1756
  %v1773 = vld [vmem:[#allocation2] sm:$0xff]
  %v1774 = vld [vmem:[#allocation2 + $0x8] sm:$0xff]
  %v1775 = vld [vmem:[#allocation2 + $0x10] sm:$0xff]
  %v1776 = vld [vmem:[#allocation2 + $0x18] sm:$0xff]
  %v1777 = vld [vmem:[#allocation2 + $0x20] sm:$0xff]
  %v1778 = vld [vmem:[#allocation2 + $0x28] sm:$0xff]
  %v1779 = vld [vmem:[#allocation2 + $0x30] sm:$0xff]
  %v1780 = vld [vmem:[#allocation2 + $0x38] sm:$0xff]
  %v1781 = vld [vmem:[#allocation2 + $0x40] sm:$0xff]
  %v1782 = vld [vmem:[#allocation2 + $0x48] sm:$0xff]
  %v1783 = vld [vmem:[#allocation2 + $0x50] sm:$0xff]
  %v1784 = vld [vmem:[#allocation2 + $0x58] sm:$0xff]
  %v1785 = vld [vmem:[#allocation2 + $0x60] sm:$0xff]
  %v1786 = vld [vmem:[#allocation2 + $0x68] sm:$0xff]
  %v1787 = vld [vmem:[#allocation2 + $0x70] sm:$0xff]
  %v1788 = vld [vmem:[#allocation2 + $0x78] sm:$0xff]
  %s1789 = scalar_lea.vmem %s0, 16
  %v1790 = vld [vmem:[%s1789] sm:$0xff]
  %v1791 = vld [vmem:[%s1789 + $0x10] sm:$0xff]
  %v1792 = vld [vmem:[%s1789 + $0x20] sm:$0xff]
  %v1793 = vld [vmem:[%s1789 + $0x30] sm:$0xff]
  %v1794 = vld [vmem:[%s1789 + $0x40] sm:$0xff]
  %v1795 = vld [vmem:[%s1789 + $0x50] sm:$0xff]
  %v1796 = vld [vmem:[%s1789 + $0x60] sm:$0xff]
  %v1797 = vld [vmem:[%s1789 + $0x70] sm:$0xff]
  %v1798 = vld [vmem:[%s1789 + $0x90] sm:$0xff]
  %v1799 = vld [vmem:[%s1789 + $0xa0] sm:$0xff]
  %v1800 = vld [vmem:[%s1789 + $0xb0] sm:$0xff]
  %v1801 = vld [vmem:[%s1789 + $0xc0] sm:$0xff]
  %v1802 = vld [vmem:[%s1789 + $0xd0] sm:$0xff]
  %v1803 = vld [vmem:[%s1789 + $0xe0] sm:$0xff]
  %v1804 = vld [vmem:[%s1789 + $0xf0] sm:$0xff]
  %v1805 = vld [vmem:[%s1789 + $0x100] sm:$0xff]
  %v1806 = vpack.c.bf16 %v1790, %v1790
  %v1807 = vpack.c.bf16 %v1791, %v1791
  %v1808 = vpack.c.bf16 %v1792, %v1792
  %v1809 = vpack.c.bf16 %v1793, %v1793
  %v1810 = vpack.c.bf16 %v1794, %v1794
  %v1811 = vpack.c.bf16 %v1795, %v1795
  %v1812 = vpack.c.bf16 %v1796, %v1796
  %v1813 = vpack.c.bf16 %v1797, %v1797
  %v1814 = vpack.c.bf16 %v1798, %v1798
  %v1815 = vpack.c.bf16 %v1799, %v1799
  %v1816 = vpack.c.bf16 %v1800, %v1800
  %v1817 = vpack.c.bf16 %v1801, %v1801
  %v1818 = vpack.c.bf16 %v1802, %v1802
  %v1819 = vpack.c.bf16 %v1803, %v1803
  %v1820 = vpack.c.bf16 %v1804, %v1804
  %v1821 = vpack.c.bf16 %v1805, %v1805
  %s1822 = scalar_lea.vmem %s1, 384
  %v1823 = vld [vmem:[%s1822] sm:$0xf]
  %v1824 = vld [vmem:[%s1822 + $0x4] sm:$0xf]
  %v1825 = vld [vmem:[%s1822 + $0x8] sm:$0xf]
  %v1826 = vld [vmem:[%s1822 + $0xc] sm:$0xf]
  %v1827 = vld [vmem:[%s1822 + $0x10] sm:$0xf]
  %v1828 = vld [vmem:[%s1822 + $0x14] sm:$0xf]
  %v1829 = vld [vmem:[%s1822 + $0x18] sm:$0xf]
  %v1830 = vld [vmem:[%s1822 + $0x1c] sm:$0xf]
  %v1831 = vld [vmem:[%s1822 + $0x20] sm:$0xf]
  %v1832 = vld [vmem:[%s1822 + $0x24] sm:$0xf]
  %v1833 = vld [vmem:[%s1822 + $0x28] sm:$0xf]
  %v1834 = vld [vmem:[%s1822 + $0x2c] sm:$0xf]
  %v1835 = vld [vmem:[%s1822 + $0x30] sm:$0xf]
  %v1836 = vld [vmem:[%s1822 + $0x34] sm:$0xf]
  %v1837 = vld [vmem:[%s1822 + $0x38] sm:$0xf]
  %v1838 = vld [vmem:[%s1822 + $0x3c] sm:$0xf]
  %v1855 = vunpack.c.l.b16 %v1806
  %v1856 = vunpack.c.l.b16 %v1807
  %v1857 = vunpack.c.l.b16 %v1808
  %v1858 = vunpack.c.l.b16 %v1809
  %v1859 = vunpack.c.l.b16 %v1810
  %v1860 = vunpack.c.l.b16 %v1811
  %v1861 = vunpack.c.l.b16 %v1812
  %v1862 = vunpack.c.l.b16 %v1813
  %v1863 = vunpack.c.l.b16 %v1814
  %v1864 = vunpack.c.l.b16 %v1815
  %v1865 = vunpack.c.l.b16 %v1816
  %v1866 = vunpack.c.l.b16 %v1817
  %v1867 = vunpack.c.l.b16 %v1818
  %v1868 = vunpack.c.l.b16 %v1819
  %v1869 = vunpack.c.l.b16 %v1820
  %v1870 = vunpack.c.l.b16 %v1821
  %v1871 = vpack.c.b16 %v1856, %v1855
  %v1872 = vpack.c.b16 %v1858, %v1857
  %v1873 = vpack.c.b16 %v1860, %v1859
  %v1874 = vpack.c.b16 %v1862, %v1861
  %v1875 = vpack.c.b16 %v1864, %v1863
  %v1876 = vpack.c.b16 %v1866, %v1865
  %v1877 = vpack.c.b16 %v1868, %v1867
  %v1878 = vpack.c.b16 %v1870, %v1869
  %v1903 = vunpack.c.l.b16 %v1823
  %v1904 = vunpack.c.l.b16 %v1824
  %v1905 = vunpack.c.l.b16 %v1825
  %v1906 = vunpack.c.l.b16 %v1826
  %v1907 = vunpack.c.l.b16 %v1827
  %v1908 = vunpack.c.l.b16 %v1828
  %v1909 = vunpack.c.l.b16 %v1829
  %v1910 = vunpack.c.l.b16 %v1830
  %v1911 = vunpack.c.l.b16 %v1831
  %v1912 = vunpack.c.l.b16 %v1832
  %v1913 = vunpack.c.l.b16 %v1833
  %v1914 = vunpack.c.l.b16 %v1834
  %v1915 = vunpack.c.l.b16 %v1835
  %v1916 = vunpack.c.l.b16 %v1836
  %v1917 = vunpack.c.l.b16 %v1837
  %v1918 = vunpack.c.l.b16 %v1838
  %v1919 = vpack.c.b16 %v1904, %v1903
  %v1920 = vpack.c.b16 %v1906, %v1905
  %v1921 = vpack.c.b16 %v1908, %v1907
  %v1922 = vpack.c.b16 %v1910, %v1909
  %v1923 = vpack.c.b16 %v1912, %v1911
  %v1924 = vpack.c.b16 %v1914, %v1913
  %v1925 = vpack.c.b16 %v1916, %v1915
  %v1926 = vpack.c.b16 %v1918, %v1917
  %1935 = vmatprep.subr.bf16.mxu0 0
  %1936 = vmatpush1.bf16.msra.mxu0 %v1926
  %1937 = vmatprep.subr.bf16.mxu0 0
  %1938 = vmatpush1.bf16.msra.mxu0 %v1925
  %1939 = vmatprep.subr.bf16.mxu0 0
  %1940 = vmatpush1.bf16.msra.mxu0 %v1924
  %1941 = vmatprep.subr.bf16.mxu0 0
  %1942 = vmatpush1.bf16.msra.mxu0 %v1923
  %1943 = vmatprep.subr.bf16.mxu0 0
  %1944 = vmatpush1.bf16.msra.mxu0 %v1922
  %1945 = vmatprep.subr.bf16.mxu0 0
  %1946 = vmatpush1.bf16.msra.mxu0 %v1921
  %1947 = vmatprep.subr.bf16.mxu0 0
  %1948 = vmatpush1.bf16.msra.mxu0 %v1920
  %1949 = vmatprep.subr.bf16.mxu0 0
  %1950 = vmatpush1.bf16.msra.mxu0 %v1919
  %1951 = vmatprep.subr.bf16.mxu0 0
  %1952 = vmatpush2.bf16.msra.mxu0 0
  %1953 = vmatprep.subr.bf16.mxu0 0
  %1954 = vmatpush2.bf16.msra.mxu0 0
  %1955 = vmatprep.subr.bf16.mxu0 0
  %1956 = vmatpush2.bf16.msra.mxu0 0
  %1957 = vmatprep.subr.bf16.mxu0 0
  %1958 = vmatpush2.bf16.msra.mxu0 0
  %1959 = vmatprep.subr.bf16.mxu0 0
  %1960 = vmatpush2.bf16.msra.mxu0 0
  %1961 = vmatprep.subr.bf16.mxu0 0
  %1962 = vmatpush2.bf16.msra.mxu0 0
  %1963 = vmatprep.subr.bf16.mxu0 0
  %1964 = vmatpush2.bf16.msra.mxu0 0
  %1965 = vmatprep.subr.bf16.mxu0 0
  %1966 = vmatpush2.bf16.msra.mxu0 0
  %1967 = vmatprep.mubr.bf16.mxu0 0
  %1968 = vmatmul.mubr.bf16.gmra.mxu0 %v1871
  %v1969 = vpop.f32.mrf.mxu0
  %v1970 = vadd.f32 0.0, %v1969
  %v1971 = vpop.f32.mrf.mxu0
  %v1972 = vpop.f32.mrf.mxu0
  %v1973 = vadd.f32 0.0, %v1972
  %v1974 = vpop.f32.mrf.mxu0
  %1975 = vmatprep.mubr.bf16.mxu0 0
  %1976 = vmatmul.mubr.bf16.gmra.mxu0 %v1872
  %v1977 = vpop.f32.mrf.mxu0
  %v1978 = vadd.f32 0.0, %v1977
  %v1979 = vpop.f32.mrf.mxu0
  %v1980 = vpop.f32.mrf.mxu0
  %v1981 = vadd.f32 0.0, %v1980
  %v1982 = vpop.f32.mrf.mxu0
  %1983 = vmatprep.mubr.bf16.mxu0 0
  %1984 = vmatmul.mubr.bf16.gmra.mxu0 %v1873
  %v1985 = vpop.f32.mrf.mxu0
  %v1986 = vadd.f32 0.0, %v1985
  %v1987 = vpop.f32.mrf.mxu0
  %v1988 = vpop.f32.mrf.mxu0
  %v1989 = vadd.f32 0.0, %v1988
  %v1990 = vpop.f32.mrf.mxu0
  %1991 = vmatprep.mubr.bf16.mxu0 0
  %1992 = vmatmul.mubr.bf16.gmra.mxu0 %v1874
  %v1993 = vpop.f32.mrf.mxu0
  %v1994 = vadd.f32 0.0, %v1993
  %v1995 = vpop.f32.mrf.mxu0
  %v1996 = vpop.f32.mrf.mxu0
  %v1997 = vadd.f32 0.0, %v1996
  %v1998 = vpop.f32.mrf.mxu0
  %1999 = vmatprep.mubr.bf16.mxu0 0
  %2000 = vmatmul.mubr.bf16.gmra.mxu0 %v1875
  %v2001 = vpop.f32.mrf.mxu0
  %v2002 = vadd.f32 0.0, %v2001
  %v2003 = vpop.f32.mrf.mxu0
  %v2004 = vpop.f32.mrf.mxu0
  %v2005 = vadd.f32 0.0, %v2004
  %v2006 = vpop.f32.mrf.mxu0
  %2007 = vmatprep.mubr.bf16.mxu0 0
  %2008 = vmatmul.mubr.bf16.gmra.mxu0 %v1876
  %v2009 = vpop.f32.mrf.mxu0
  %v2010 = vadd.f32 0.0, %v2009
  %v2011 = vpop.f32.mrf.mxu0
  %v2012 = vpop.f32.mrf.mxu0
  %v2013 = vadd.f32 0.0, %v2012
  %v2014 = vpop.f32.mrf.mxu0
  %2015 = vmatprep.mubr.bf16.mxu0 0
  %2016 = vmatmul.mubr.bf16.gmra.mxu0 %v1877
  %v2017 = vpop.f32.mrf.mxu0
  %v2018 = vadd.f32 0.0, %v2017
  %v2019 = vpop.f32.mrf.mxu0
  %v2020 = vpop.f32.mrf.mxu0
  %v2021 = vadd.f32 0.0, %v2020
  %v2022 = vpop.f32.mrf.mxu0
  %2023 = vmatprep.mubr.bf16.mxu0 0
  %2024 = vmatmul.mubr.bf16.gmra.mxu0 %v1878
  %v2025 = vpop.f32.mrf.mxu0
  %v2026 = vadd.f32 0.0, %v2025
  %v2027 = vpop.f32.mrf.mxu0
  %v2028 = vpop.f32.mrf.mxu0
  %v2029 = vadd.f32 0.0, %v2028
  %v2030 = vpop.f32.mrf.mxu0
  %2031 = vdwg.mxu0
  %v2032 = vadd.f32 %v1773, %v1970
  %v2033 = vadd.f32 %v1774, %v1973
  %v2034 = vadd.f32 %v1775, %v1978
  %v2035 = vadd.f32 %v1776, %v1981
  %v2036 = vadd.f32 %v1777, %v1986
  %v2037 = vadd.f32 %v1778, %v1989
  %v2038 = vadd.f32 %v1779, %v1994
  %v2039 = vadd.f32 %v1780, %v1997
  %v2040 = vadd.f32 %v1781, %v2002
  %v2041 = vadd.f32 %v1782, %v2005
  %v2042 = vadd.f32 %v1783, %v2010
  %v2043 = vadd.f32 %v1784, %v2013
  %v2044 = vadd.f32 %v1785, %v2018
  %v2045 = vadd.f32 %v1786, %v2021
  %v2046 = vadd.f32 %v1787, %v2026
  %v2047 = vadd.f32 %v1788, %v2029
  %2048 = vst [vmem:[#allocation2] sm:$0xff] %v2032
  %2049 = vst [vmem:[#allocation2 + $0x8] sm:$0xff] %v2033
  %2050 = vst [vmem:[#allocation2 + $0x10] sm:$0xff] %v2034
  %2051 = vst [vmem:[#allocation2 + $0x18] sm:$0xff] %v2035
  %2052 = vst [vmem:[#allocation2 + $0x20] sm:$0xff] %v2036
  %2053 = vst [vmem:[#allocation2 + $0x28] sm:$0xff] %v2037
  %2054 = vst [vmem:[#allocation2 + $0x30] sm:$0xff] %v2038
  %2055 = vst [vmem:[#allocation2 + $0x38] sm:$0xff] %v2039
  %2056 = vst [vmem:[#allocation2 + $0x40] sm:$0xff] %v2040
  %2057 = vst [vmem:[#allocation2 + $0x48] sm:$0xff] %v2041
  %2058 = vst [vmem:[#allocation2 + $0x50] sm:$0xff] %v2042
  %2059 = vst [vmem:[#allocation2 + $0x58] sm:$0xff] %v2043
  %2060 = vst [vmem:[#allocation2 + $0x60] sm:$0xff] %v2044
  %2061 = vst [vmem:[#allocation2 + $0x68] sm:$0xff] %v2045
  %2062 = vst [vmem:[#allocation2 + $0x70] sm:$0xff] %v2046
  %2063 = vst [vmem:[#allocation2 + $0x78] sm:$0xff] %v2047
  %v2064 = vld [vmem:[#allocation2] sm:$0xff]
  %v2065 = vld [vmem:[#allocation2 + $0x8] sm:$0xff]
  %v2066 = vld [vmem:[#allocation2 + $0x10] sm:$0xff]
  %v2067 = vld [vmem:[#allocation2 + $0x18] sm:$0xff]
  %v2068 = vld [vmem:[#allocation2 + $0x20] sm:$0xff]
  %v2069 = vld [vmem:[#allocation2 + $0x28] sm:$0xff]
  %v2070 = vld [vmem:[#allocation2 + $0x30] sm:$0xff]
  %v2071 = vld [vmem:[#allocation2 + $0x38] sm:$0xff]
  %v2072 = vld [vmem:[#allocation2 + $0x40] sm:$0xff]
  %v2073 = vld [vmem:[#allocation2 + $0x48] sm:$0xff]
  %v2074 = vld [vmem:[#allocation2 + $0x50] sm:$0xff]
  %v2075 = vld [vmem:[#allocation2 + $0x58] sm:$0xff]
  %v2076 = vld [vmem:[#allocation2 + $0x60] sm:$0xff]
  %v2077 = vld [vmem:[#allocation2 + $0x68] sm:$0xff]
  %v2078 = vld [vmem:[#allocation2 + $0x70] sm:$0xff]
  %v2079 = vld [vmem:[#allocation2 + $0x78] sm:$0xff]
  %s2080 = scalar_lea.vmem %s0, 304
  %v2081 = vld [vmem:[%s2080] sm:$0xff]
  %v2082 = vld [vmem:[%s2080 + $0x10] sm:$0xff]
  %v2083 = vld [vmem:[%s2080 + $0x20] sm:$0xff]
  %v2084 = vld [vmem:[%s2080 + $0x30] sm:$0xff]
  %v2085 = vld [vmem:[%s2080 + $0x40] sm:$0xff]
  %v2086 = vld [vmem:[%s2080 + $0x50] sm:$0xff]
  %v2087 = vld [vmem:[%s2080 + $0x60] sm:$0xff]
  %v2088 = vld [vmem:[%s2080 + $0x70] sm:$0xff]
  %v2089 = vld [vmem:[%s2080 + $0x90] sm:$0xff]
  %v2090 = vld [vmem:[%s2080 + $0xa0] sm:$0xff]
  %v2091 = vld [vmem:[%s2080 + $0xb0] sm:$0xff]
  %v2092 = vld [vmem:[%s2080 + $0xc0] sm:$0xff]
  %v2093 = vld [vmem:[%s2080 + $0xd0] sm:$0xff]
  %v2094 = vld [vmem:[%s2080 + $0xe0] sm:$0xff]
  %v2095 = vld [vmem:[%s2080 + $0xf0] sm:$0xff]
  %v2096 = vld [vmem:[%s2080 + $0x100] sm:$0xff]
  %v2097 = vpack.c.bf16 %v2081, %v2081
  %v2098 = vpack.c.bf16 %v2082, %v2082
  %v2099 = vpack.c.bf16 %v2083, %v2083
  %v2100 = vpack.c.bf16 %v2084, %v2084
  %v2101 = vpack.c.bf16 %v2085, %v2085
  %v2102 = vpack.c.bf16 %v2086, %v2086
  %v2103 = vpack.c.bf16 %v2087, %v2087
  %v2104 = vpack.c.bf16 %v2088, %v2088
  %v2105 = vpack.c.bf16 %v2089, %v2089
  %v2106 = vpack.c.bf16 %v2090, %v2090
  %v2107 = vpack.c.bf16 %v2091, %v2091
  %v2108 = vpack.c.bf16 %v2092, %v2092
  %v2109 = vpack.c.bf16 %v2093, %v2093
  %v2110 = vpack.c.bf16 %v2094, %v2094
  %v2111 = vpack.c.bf16 %v2095, %v2095
  %v2112 = vpack.c.bf16 %v2096, %v2096
  %s2113 = scalar_lea.vmem %s1, 448
  %v2114 = vld [vmem:[%s2113] sm:$0xf]
  %v2115 = vld [vmem:[%s2113 + $0x4] sm:$0xf]
  %v2116 = vld [vmem:[%s2113 + $0x8] sm:$0xf]
  %v2117 = vld [vmem:[%s2113 + $0xc] sm:$0xf]
  %v2118 = vld [vmem:[%s2113 + $0x10] sm:$0xf]
  %v2119 = vld [vmem:[%s2113 + $0x14] sm:$0xf]
  %v2120 = vld [vmem:[%s2113 + $0x18] sm:$0xf]
  %v2121 = vld [vmem:[%s2113 + $0x1c] sm:$0xf]
  %v2122 = vld [vmem:[%s2113 + $0x20] sm:$0xf]
  %v2123 = vld [vmem:[%s2113 + $0x24] sm:$0xf]
  %v2124 = vld [vmem:[%s2113 + $0x28] sm:$0xf]
  %v2125 = vld [vmem:[%s2113 + $0x2c] sm:$0xf]
  %v2126 = vld [vmem:[%s2113 + $0x30] sm:$0xf]
  %v2127 = vld [vmem:[%s2113 + $0x34] sm:$0xf]
  %v2128 = vld [vmem:[%s2113 + $0x38] sm:$0xf]
  %v2129 = vld [vmem:[%s2113 + $0x3c] sm:$0xf]
  %v2146 = vunpack.c.l.b16 %v2097
  %v2147 = vunpack.c.l.b16 %v2098
  %v2148 = vunpack.c.l.b16 %v2099
  %v2149 = vunpack.c.l.b16 %v2100
  %v2150 = vunpack.c.l.b16 %v2101
  %v2151 = vunpack.c.l.b16 %v2102
  %v2152 = vunpack.c.l.b16 %v2103
  %v2153 = vunpack.c.l.b16 %v2104
  %v2154 = vunpack.c.l.b16 %v2105
  %v2155 = vunpack.c.l.b16 %v2106
  %v2156 = vunpack.c.l.b16 %v2107
  %v2157 = vunpack.c.l.b16 %v2108
  %v2158 = vunpack.c.l.b16 %v2109
  %v2159 = vunpack.c.l.b16 %v2110
  %v2160 = vunpack.c.l.b16 %v2111
  %v2161 = vunpack.c.l.b16 %v2112
  %v2162 = vpack.c.b16 %v2147, %v2146
  %v2163 = vpack.c.b16 %v2149, %v2148
  %v2164 = vpack.c.b16 %v2151, %v2150
  %v2165 = vpack.c.b16 %v2153, %v2152
  %v2166 = vpack.c.b16 %v2155, %v2154
  %v2167 = vpack.c.b16 %v2157, %v2156
  %v2168 = vpack.c.b16 %v2159, %v2158
  %v2169 = vpack.c.b16 %v2161, %v2160
  %v2194 = vunpack.c.l.b16 %v2114
  %v2195 = vunpack.c.l.b16 %v2115
  %v2196 = vunpack.c.l.b16 %v2116
  %v2197 = vunpack.c.l.b16 %v2117
  %v2198 = vunpack.c.l.b16 %v2118
  %v2199 = vunpack.c.l.b16 %v2119
  %v2200 = vunpack.c.l.b16 %v2120
  %v2201 = vunpack.c.l.b16 %v2121
  %v2202 = vunpack.c.l.b16 %v2122
  %v2203 = vunpack.c.l.b16 %v2123
  %v2204 = vunpack.c.l.b16 %v2124
  %v2205 = vunpack.c.l.b16 %v2125
  %v2206 = vunpack.c.l.b16 %v2126
  %v2207 = vunpack.c.l.b16 %v2127
  %v2208 = vunpack.c.l.b16 %v2128
  %v2209 = vunpack.c.l.b16 %v2129
  %v2210 = vpack.c.b16 %v2195, %v2194
  %v2211 = vpack.c.b16 %v2197, %v2196
  %v2212 = vpack.c.b16 %v2199, %v2198
  %v2213 = vpack.c.b16 %v2201, %v2200
  %v2214 = vpack.c.b16 %v2203, %v2202
  %v2215 = vpack.c.b16 %v2205, %v2204
  %v2216 = vpack.c.b16 %v2207, %v2206
  %v2217 = vpack.c.b16 %v2209, %v2208
  %2226 = vmatprep.subr.bf16.mxu0 0
  %2227 = vmatpush1.bf16.msra.mxu0 %v2217
  %2228 = vmatprep.subr.bf16.mxu0 0
  %2229 = vmatpush1.bf16.msra.mxu0 %v2216
  %2230 = vmatprep.subr.bf16.mxu0 0
  %2231 = vmatpush1.bf16.msra.mxu0 %v2215
  %2232 = vmatprep.subr.bf16.mxu0 0
  %2233 = vmatpush1.bf16.msra.mxu0 %v2214
  %2234 = vmatprep.subr.bf16.mxu0 0
  %2235 = vmatpush1.bf16.msra.mxu0 %v2213
  %2236 = vmatprep.subr.bf16.mxu0 0
  %2237 = vmatpush1.bf16.msra.mxu0 %v2212
  %2238 = vmatprep.subr.bf16.mxu0 0
  %2239 = vmatpush1.bf16.msra.mxu0 %v2211
  %2240 = vmatprep.subr.bf16.mxu0 0
  %2241 = vmatpush1.bf16.msra.mxu0 %v2210
  %2242 = vmatprep.subr.bf16.mxu0 0
  %2243 = vmatpush2.bf16.msra.mxu0 0
  %2244 = vmatprep.subr.bf16.mxu0 0
  %2245 = vmatpush2.bf16.msra.mxu0 0
  %2246 = vmatprep.subr.bf16.mxu0 0
  %2247 = vmatpush2.bf16.msra.mxu0 0
  %2248 = vmatprep.subr.bf16.mxu0 0
  %2249 = vmatpush2.bf16.msra.mxu0 0
  %2250 = vmatprep.subr.bf16.mxu0 0
  %2251 = vmatpush2.bf16.msra.mxu0 0
  %2252 = vmatprep.subr.bf16.mxu0 0
  %2253 = vmatpush2.bf16.msra.mxu0 0
  %2254 = vmatprep.subr.bf16.mxu0 0
  %2255 = vmatpush2.bf16.msra.mxu0 0
  %2256 = vmatprep.subr.bf16.mxu0 0
  %2257 = vmatpush2.bf16.msra.mxu0 0
  %2258 = vmatprep.mubr.bf16.mxu0 0
  %2259 = vmatmul.mubr.bf16.gmra.mxu0 %v2162
  %v2260 = vpop.f32.mrf.mxu0
  %v2261 = vadd.f32 0.0, %v2260
  %v2262 = vpop.f32.mrf.mxu0
  %v2263 = vpop.f32.mrf.mxu0
  %v2264 = vadd.f32 0.0, %v2263
  %v2265 = vpop.f32.mrf.mxu0
  %2266 = vmatprep.mubr.bf16.mxu0 0
  %2267 = vmatmul.mubr.bf16.gmra.mxu0 %v2163
  %v2268 = vpop.f32.mrf.mxu0
  %v2269 = vadd.f32 0.0, %v2268
  %v2270 = vpop.f32.mrf.mxu0
  %v2271 = vpop.f32.mrf.mxu0
  %v2272 = vadd.f32 0.0, %v2271
  %v2273 = vpop.f32.mrf.mxu0
  %2274 = vmatprep.mubr.bf16.mxu0 0
  %2275 = vmatmul.mubr.bf16.gmra.mxu0 %v2164
  %v2276 = vpop.f32.mrf.mxu0
  %v2277 = vadd.f32 0.0, %v2276
  %v2278 = vpop.f32.mrf.mxu0
  %v2279 = vpop.f32.mrf.mxu0
  %v2280 = vadd.f32 0.0, %v2279
  %v2281 = vpop.f32.mrf.mxu0
  %2282 = vmatprep.mubr.bf16.mxu0 0
  %2283 = vmatmul.mubr.bf16.gmra.mxu0 %v2165
  %v2284 = vpop.f32.mrf.mxu0
  %v2285 = vadd.f32 0.0, %v2284
  %v2286 = vpop.f32.mrf.mxu0
  %v2287 = vpop.f32.mrf.mxu0
  %v2288 = vadd.f32 0.0, %v2287
  %v2289 = vpop.f32.mrf.mxu0
  %2290 = vmatprep.mubr.bf16.mxu0 0
  %2291 = vmatmul.mubr.bf16.gmra.mxu0 %v2166
  %v2292 = vpop.f32.mrf.mxu0
  %v2293 = vadd.f32 0.0, %v2292
  %v2294 = vpop.f32.mrf.mxu0
  %v2295 = vpop.f32.mrf.mxu0
  %v2296 = vadd.f32 0.0, %v2295
  %v2297 = vpop.f32.mrf.mxu0
  %2298 = vmatprep.mubr.bf16.mxu0 0
  %2299 = vmatmul.mubr.bf16.gmra.mxu0 %v2167
  %v2300 = vpop.f32.mrf.mxu0
  %v2301 = vadd.f32 0.0, %v2300
  %v2302 = vpop.f32.mrf.mxu0
  %v2303 = vpop.f32.mrf.mxu0
  %v2304 = vadd.f32 0.0, %v2303
  %v2305 = vpop.f32.mrf.mxu0
  %2306 = vmatprep.mubr.bf16.mxu0 0
  %2307 = vmatmul.mubr.bf16.gmra.mxu0 %v2168
  %v2308 = vpop.f32.mrf.mxu0
  %v2309 = vadd.f32 0.0, %v2308
  %v2310 = vpop.f32.mrf.mxu0
  %v2311 = vpop.f32.mrf.mxu0
  %v2312 = vadd.f32 0.0, %v2311
  %v2313 = vpop.f32.mrf.mxu0
  %2314 = vmatprep.mubr.bf16.mxu0 0
  %2315 = vmatmul.mubr.bf16.gmra.mxu0 %v2169
  %v2316 = vpop.f32.mrf.mxu0
  %v2317 = vadd.f32 0.0, %v2316
  %v2318 = vpop.f32.mrf.mxu0
  %v2319 = vpop.f32.mrf.mxu0
  %v2320 = vadd.f32 0.0, %v2319
  %v2321 = vpop.f32.mrf.mxu0
  %2322 = vdwg.mxu0
  %v2323 = vadd.f32 %v2064, %v2261
  %v2324 = vadd.f32 %v2065, %v2264
  %v2325 = vadd.f32 %v2066, %v2269
  %v2326 = vadd.f32 %v2067, %v2272
  %v2327 = vadd.f32 %v2068, %v2277
  %v2328 = vadd.f32 %v2069, %v2280
  %v2329 = vadd.f32 %v2070, %v2285
  %v2330 = vadd.f32 %v2071, %v2288
  %v2331 = vadd.f32 %v2072, %v2293
  %v2332 = vadd.f32 %v2073, %v2296
  %v2333 = vadd.f32 %v2074, %v2301
  %v2334 = vadd.f32 %v2075, %v2304
  %v2335 = vadd.f32 %v2076, %v2309
  %v2336 = vadd.f32 %v2077, %v2312
  %v2337 = vadd.f32 %v2078, %v2317
  %v2338 = vadd.f32 %v2079, %v2320
  %2339 = vst [vmem:[#allocation2] sm:$0xff] %v2323
  %2340 = vst [vmem:[#allocation2 + $0x8] sm:$0xff] %v2324
  %2341 = vst [vmem:[#allocation2 + $0x10] sm:$0xff] %v2325
  %2342 = vst [vmem:[#allocation2 + $0x18] sm:$0xff] %v2326
  %2343 = vst [vmem:[#allocation2 + $0x20] sm:$0xff] %v2327
  %2344 = vst [vmem:[#allocation2 + $0x28] sm:$0xff] %v2328
  %2345 = vst [vmem:[#allocation2 + $0x30] sm:$0xff] %v2329
  %2346 = vst [vmem:[#allocation2 + $0x38] sm:$0xff] %v2330
  %2347 = vst [vmem:[#allocation2 + $0x40] sm:$0xff] %v2331
  %2348 = vst [vmem:[#allocation2 + $0x48] sm:$0xff] %v2332
  %2349 = vst [vmem:[#allocation2 + $0x50] sm:$0xff] %v2333
  %2350 = vst [vmem:[#allocation2 + $0x58] sm:$0xff] %v2334
  %2351 = vst [vmem:[#allocation2 + $0x60] sm:$0xff] %v2335
  %2352 = vst [vmem:[#allocation2 + $0x68] sm:$0xff] %v2336
  %2353 = vst [vmem:[#allocation2 + $0x70] sm:$0xff] %v2337
  %2354 = vst [vmem:[#allocation2 + $0x78] sm:$0xff] %v2338
  %v2355 = vld [vmem:[#allocation2] sm:$0xff]
  %v2356 = vld [vmem:[#allocation2 + $0x8] sm:$0xff]
  %v2357 = vld [vmem:[#allocation2 + $0x10] sm:$0xff]
  %v2358 = vld [vmem:[#allocation2 + $0x18] sm:$0xff]
  %v2359 = vld [vmem:[#allocation2 + $0x20] sm:$0xff]
  %v2360 = vld [vmem:[#allocation2 + $0x28] sm:$0xff]
  %v2361 = vld [vmem:[#allocation2 + $0x30] sm:$0xff]
  %v2362 = vld [vmem:[#allocation2 + $0x38] sm:$0xff]
  %v2363 = vld [vmem:[#allocation2 + $0x40] sm:$0xff]
  %v2364 = vld [vmem:[#allocation2 + $0x48] sm:$0xff]
  %v2365 = vld [vmem:[#allocation2 + $0x50] sm:$0xff]
  %v2366 = vld [vmem:[#allocation2 + $0x58] sm:$0xff]
  %v2367 = vld [vmem:[#allocation2 + $0x60] sm:$0xff]
  %v2368 = vld [vmem:[#allocation2 + $0x68] sm:$0xff]
  %v2369 = vld [vmem:[#allocation2 + $0x70] sm:$0xff]
  %v2370 = vld [vmem:[#allocation2 + $0x78] sm:$0xff]
  %v2371 = vld [vmem:[%s1789 + $0x1] sm:$0xff]
  %v2372 = vld [vmem:[%s1789 + $0x11] sm:$0xff]
  %v2373 = vld [vmem:[%s1789 + $0x21] sm:$0xff]
  %v2374 = vld [vmem:[%s1789 + $0x31] sm:$0xff]
  %v2375 = vld [vmem:[%s1789 + $0x41] sm:$0xff]
  %v2376 = vld [vmem:[%s1789 + $0x51] sm:$0xff]
  %v2377 = vld [vmem:[%s1789 + $0x61] sm:$0xff]
  %v2378 = vld [vmem:[%s1789 + $0x71] sm:$0xff]
  %v2379 = vld [vmem:[%s1789 + $0x91] sm:$0xff]
  %v2380 = vld [vmem:[%s1789 + $0xa1] sm:$0xff]
  %v2381 = vld [vmem:[%s1789 + $0xb1] sm:$0xff]
  %v2382 = vld [vmem:[%s1789 + $0xc1] sm:$0xff]
  %v2383 = vld [vmem:[%s1789 + $0xd1] sm:$0xff]
  %v2384 = vld [vmem:[%s1789 + $0xe1] sm:$0xff]
  %v2385 = vld [vmem:[%s1789 + $0xf1] sm:$0xff]
  %v2386 = vld [vmem:[%s1789 + $0x101] sm:$0xff]
  %v2387 = vpack.c.bf16 %v2371, %v2371
  %v2388 = vpack.c.bf16 %v2372, %v2372
  %v2389 = vpack.c.bf16 %v2373, %v2373
  %v2390 = vpack.c.bf16 %v2374, %v2374
  %v2391 = vpack.c.bf16 %v2375, %v2375
  %v2392 = vpack.c.bf16 %v2376, %v2376
  %v2393 = vpack.c.bf16 %v2377, %v2377
  %v2394 = vpack.c.bf16 %v2378, %v2378
  %v2395 = vpack.c.bf16 %v2379, %v2379
  %v2396 = vpack.c.bf16 %v2380, %v2380
  %v2397 = vpack.c.bf16 %v2381, %v2381
  %v2398 = vpack.c.bf16 %v2382, %v2382
  %v2399 = vpack.c.bf16 %v2383, %v2383
  %v2400 = vpack.c.bf16 %v2384, %v2384
  %v2401 = vpack.c.bf16 %v2385, %v2385
  %v2402 = vpack.c.bf16 %v2386, %v2386
  %s2403 = scalar_lea.vmem %s1, 512
  %v2404 = vld [vmem:[%s2403] sm:$0xf]
  %v2405 = vld [vmem:[%s2403 + $0x4] sm:$0xf]
  %v2406 = vld [vmem:[%s2403 + $0x8] sm:$0xf]
  %v2407 = vld [vmem:[%s2403 + $0xc] sm:$0xf]
  %v2408 = vld [vmem:[%s2403 + $0x10] sm:$0xf]
  %v2409 = vld [vmem:[%s2403 + $0x14] sm:$0xf]
  %v2410 = vld [vmem:[%s2403 + $0x18] sm:$0xf]
  %v2411 = vld [vmem:[%s2403 + $0x1c] sm:$0xf]
  %v2412 = vld [vmem:[%s2403 + $0x20] sm:$0xf]
  %v2413 = vld [vmem:[%s2403 + $0x24] sm:$0xf]
  %v2414 = vld [vmem:[%s2403 + $0x28] sm:$0xf]
  %v2415 = vld [vmem:[%s2403 + $0x2c] sm:$0xf]
  %v2416 = vld [vmem:[%s2403 + $0x30] sm:$0xf]
  %v2417 = vld [vmem:[%s2403 + $0x34] sm:$0xf]
  %v2418 = vld [vmem:[%s2403 + $0x38] sm:$0xf]
  %v2419 = vld [vmem:[%s2403 + $0x3c] sm:$0xf]
  %v2436 = vunpack.c.l.b16 %v2387
  %v2437 = vunpack.c.l.b16 %v2388
  %v2438 = vunpack.c.l.b16 %v2389
  %v2439 = vunpack.c.l.b16 %v2390
  %v2440 = vunpack.c.l.b16 %v2391
  %v2441 = vunpack.c.l.b16 %v2392
  %v2442 = vunpack.c.l.b16 %v2393
  %v2443 = vunpack.c.l.b16 %v2394
  %v2444 = vunpack.c.l.b16 %v2395
  %v2445 = vunpack.c.l.b16 %v2396
  %v2446 = vunpack.c.l.b16 %v2397
  %v2447 = vunpack.c.l.b16 %v2398
  %v2448 = vunpack.c.l.b16 %v2399
  %v2449 = vunpack.c.l.b16 %v2400
  %v2450 = vunpack.c.l.b16 %v2401
  %v2451 = vunpack.c.l.b16 %v2402
  %v2452 = vpack.c.b16 %v2437, %v2436
  %v2453 = vpack.c.b16 %v2439, %v2438
  %v2454 = vpack.c.b16 %v2441, %v2440
  %v2455 = vpack.c.b16 %v2443, %v2442
  %v2456 = vpack.c.b16 %v2445, %v2444
  %v2457 = vpack.c.b16 %v2447, %v2446
  %v2458 = vpack.c.b16 %v2449, %v2448
  %v2459 = vpack.c.b16 %v2451, %v2450
  %v2484 = vunpack.c.l.b16 %v2404
  %v2485 = vunpack.c.l.b16 %v2405
  %v2486 = vunpack.c.l.b16 %v2406
  %v2487 = vunpack.c.l.b16 %v2407
  %v2488 = vunpack.c.l.b16 %v2408
  %v2489 = vunpack.c.l.b16 %v2409
  %v2490 = vunpack.c.l.b16 %v2410
  %v2491 = vunpack.c.l.b16 %v2411
  %v2492 = vunpack.c.l.b16 %v2412
  %v2493 = vunpack.c.l.b16 %v2413
  %v2494 = vunpack.c.l.b16 %v2414
  %v2495 = vunpack.c.l.b16 %v2415
  %v2496 = vunpack.c.l.b16 %v2416
  %v2497 = vunpack.c.l.b16 %v2417
  %v2498 = vunpack.c.l.b16 %v2418
  %v2499 = vunpack.c.l.b16 %v2419
  %v2500 = vpack.c.b16 %v2485, %v2484
  %v2501 = vpack.c.b16 %v2487, %v2486
  %v2502 = vpack.c.b16 %v2489, %v2488
  %v2503 = vpack.c.b16 %v2491, %v2490
  %v2504 = vpack.c.b16 %v2493, %v2492
  %v2505 = vpack.c.b16 %v2495, %v2494
  %v2506 = vpack.c.b16 %v2497, %v2496
  %v2507 = vpack.c.b16 %v2499, %v2498
  %2516 = vmatprep.subr.bf16.mxu0 0
  %2517 = vmatpush1.bf16.msra.mxu0 %v2507
  %2518 = vmatprep.subr.bf16.mxu0 0
  %2519 = vmatpush1.bf16.msra.mxu0 %v2506
  %2520 = vmatprep.subr.bf16.mxu0 0
  %2521 = vmatpush1.bf16.msra.mxu0 %v2505
  %2522 = vmatprep.subr.bf16.mxu0 0
  %2523 = vmatpush1.bf16.msra.mxu0 %v2504
  %2524 = vmatprep.subr.bf16.mxu0 0
  %2525 = vmatpush1.bf16.msra.mxu0 %v2503
  %2526 = vmatprep.subr.bf16.mxu0 0
  %2527 = vmatpush1.bf16.msra.mxu0 %v2502
  %2528 = vmatprep.subr.bf16.mxu0 0
  %2529 = vmatpush1.bf16.msra.mxu0 %v2501
  %2530 = vmatprep.subr.bf16.mxu0 0
  %2531 = vmatpush1.bf16.msra.mxu0 %v2500
  %2532 = vmatprep.subr.bf16.mxu0 0
  %2533 = vmatpush2.bf16.msra.mxu0 0
  %2534 = vmatprep.subr.bf16.mxu0 0
  %2535 = vmatpush2.bf16.msra.mxu0 0
  %2536 = vmatprep.subr.bf16.mxu0 0
  %2537 = vmatpush2.bf16.msra.mxu0 0
  %2538 = vmatprep.subr.bf16.mxu0 0
  %2539 = vmatpush2.bf16.msra.mxu0 0
  %2540 = vmatprep.subr.bf16.mxu0 0
  %2541 = vmatpush2.bf16.msra.mxu0 0
  %2542 = vmatprep.subr.bf16.mxu0 0
  %2543 = vmatpush2.bf16.msra.mxu0 0
  %2544 = vmatprep.subr.bf16.mxu0 0
  %2545 = vmatpush2.bf16.msra.mxu0 0
  %2546 = vmatprep.subr.bf16.mxu0 0
  %2547 = vmatpush2.bf16.msra.mxu0 0
  %2548 = vmatprep.mubr.bf16.mxu0 0
  %2549 = vmatmul.mubr.bf16.gmra.mxu0 %v2452
  %v2550 = vpop.f32.mrf.mxu0
  %v2551 = vadd.f32 0.0, %v2550
  %v2552 = vpop.f32.mrf.mxu0
  %v2553 = vpop.f32.mrf.mxu0
  %v2554 = vadd.f32 0.0, %v2553
  %v2555 = vpop.f32.mrf.mxu0
  %2556 = vmatprep.mubr.bf16.mxu0 0
  %2557 = vmatmul.mubr.bf16.gmra.mxu0 %v2453
  %v2558 = vpop.f32.mrf.mxu0
  %v2559 = vadd.f32 0.0, %v2558
  %v2560 = vpop.f32.mrf.mxu0
  %v2561 = vpop.f32.mrf.mxu0
  %v2562 = vadd.f32 0.0, %v2561
  %v2563 = vpop.f32.mrf.mxu0
  %2564 = vmatprep.mubr.bf16.mxu0 0
  %2565 = vmatmul.mubr.bf16.gmra.mxu0 %v2454
  %v2566 = vpop.f32.mrf.mxu0
  %v2567 = vadd.f32 0.0, %v2566
  %v2568 = vpop.f32.mrf.mxu0
  %v2569 = vpop.f32.mrf.mxu0
  %v2570 = vadd.f32 0.0, %v2569
  %v2571 = vpop.f32.mrf.mxu0
  %2572 = vmatprep.mubr.bf16.mxu0 0
  %2573 = vmatmul.mubr.bf16.gmra.mxu0 %v2455
  %v2574 = vpop.f32.mrf.mxu0
  %v2575 = vadd.f32 0.0, %v2574
  %v2576 = vpop.f32.mrf.mxu0
  %v2577 = vpop.f32.mrf.mxu0
  %v2578 = vadd.f32 0.0, %v2577
  %v2579 = vpop.f32.mrf.mxu0
  %2580 = vmatprep.mubr.bf16.mxu0 0
  %2581 = vmatmul.mubr.bf16.gmra.mxu0 %v2456
  %v2582 = vpop.f32.mrf.mxu0
  %v2583 = vadd.f32 0.0, %v2582
  %v2584 = vpop.f32.mrf.mxu0
  %v2585 = vpop.f32.mrf.mxu0
  %v2586 = vadd.f32 0.0, %v2585
  %v2587 = vpop.f32.mrf.mxu0
  %2588 = vmatprep.mubr.bf16.mxu0 0
  %2589 = vmatmul.mubr.bf16.gmra.mxu0 %v2457
  %v2590 = vpop.f32.mrf.mxu0
  %v2591 = vadd.f32 0.0, %v2590
  %v2592 = vpop.f32.mrf.mxu0
  %v2593 = vpop.f32.mrf.mxu0
  %v2594 = vadd.f32 0.0, %v2593
  %v2595 = vpop.f32.mrf.mxu0
  %2596 = vmatprep.mubr.bf16.mxu0 0
  %2597 = vmatmul.mubr.bf16.gmra.mxu0 %v2458
  %v2598 = vpop.f32.mrf.mxu0
  %v2599 = vadd.f32 0.0, %v2598
  %v2600 = vpop.f32.mrf.mxu0
  %v2601 = vpop.f32.mrf.mxu0
  %v2602 = vadd.f32 0.0, %v2601
  %v2603 = vpop.f32.mrf.mxu0
  %2604 = vmatprep.mubr.bf16.mxu0 0
  %2605 = vmatmul.mubr.bf16.gmra.mxu0 %v2459
  %v2606 = vpop.f32.mrf.mxu0
  %v2607 = vadd.f32 0.0, %v2606
  %v2608 = vpop.f32.mrf.mxu0
  %v2609 = vpop.f32.mrf.mxu0
  %v2610 = vadd.f32 0.0, %v2609
  %v2611 = vpop.f32.mrf.mxu0
  %2612 = vdwg.mxu0
  %v2613 = vadd.f32 %v2355, %v2551
  %v2614 = vadd.f32 %v2356, %v2554
  %v2615 = vadd.f32 %v2357, %v2559
  %v2616 = vadd.f32 %v2358, %v2562
  %v2617 = vadd.f32 %v2359, %v2567
  %v2618 = vadd.f32 %v2360, %v2570
  %v2619 = vadd.f32 %v2361, %v2575
  %v2620 = vadd.f32 %v2362, %v2578
  %v2621 = vadd.f32 %v2363, %v2583
  %v2622 = vadd.f32 %v2364, %v2586
  %v2623 = vadd.f32 %v2365, %v2591
  %v2624 = vadd.f32 %v2366, %v2594
  %v2625 = vadd.f32 %v2367, %v2599
  %v2626 = vadd.f32 %v2368, %v2602
  %v2627 = vadd.f32 %v2369, %v2607
  %v2628 = vadd.f32 %v2370, %v2610
  %2629 = vst [vmem:[#allocation2] sm:$0xff] %v2613
  %2630 = vst [vmem:[#allocation2 + $0x8] sm:$0xff] %v2614
  %2631 = vst [vmem:[#allocation2 + $0x10] sm:$0xff] %v2615
  %2632 = vst [vmem:[#allocation2 + $0x18] sm:$0xff] %v2616
  %2633 = vst [vmem:[#allocation2 + $0x20] sm:$0xff] %v2617
  %2634 = vst [vmem:[#allocation2 + $0x28] sm:$0xff] %v2618
  %2635 = vst [vmem:[#allocation2 + $0x30] sm:$0xff] %v2619
  %2636 = vst [vmem:[#allocation2 + $0x38] sm:$0xff] %v2620
  %2637 = vst [vmem:[#allocation2 + $0x40] sm:$0xff] %v2621
  %2638 = vst [vmem:[#allocation2 + $0x48] sm:$0xff] %v2622
  %2639 = vst [vmem:[#allocation2 + $0x50] sm:$0xff] %v2623
  %2640 = vst [vmem:[#allocation2 + $0x58] sm:$0xff] %v2624
  %2641 = vst [vmem:[#allocation2 + $0x60] sm:$0xff] %v2625
  %2642 = vst [vmem:[#allocation2 + $0x68] sm:$0xff] %v2626
  %2643 = vst [vmem:[#allocation2 + $0x70] sm:$0xff] %v2627
  %2644 = vst [vmem:[#allocation2 + $0x78] sm:$0xff] %v2628
  %v2645 = vld [vmem:[#allocation2] sm:$0xff]
  %v2646 = vld [vmem:[#allocation2 + $0x8] sm:$0xff]
  %v2647 = vld [vmem:[#allocation2 + $0x10] sm:$0xff]
  %v2648 = vld [vmem:[#allocation2 + $0x18] sm:$0xff]
  %v2649 = vld [vmem:[#allocation2 + $0x20] sm:$0xff]
  %v2650 = vld [vmem:[#allocation2 + $0x28] sm:$0xff]
  %v2651 = vld [vmem:[#allocation2 + $0x30] sm:$0xff]
  %v2652 = vld [vmem:[#allocation2 + $0x38] sm:$0xff]
  %v2653 = vld [vmem:[#allocation2 + $0x40] sm:$0xff]
  %v2654 = vld [vmem:[#allocation2 + $0x48] sm:$0xff]
  %v2655 = vld [vmem:[#allocation2 + $0x50] sm:$0xff]
  %v2656 = vld [vmem:[#allocation2 + $0x58] sm:$0xff]
  %v2657 = vld [vmem:[#allocation2 + $0x60] sm:$0xff]
  %v2658 = vld [vmem:[#allocation2 + $0x68] sm:$0xff]
  %v2659 = vld [vmem:[#allocation2 + $0x70] sm:$0xff]
  %v2660 = vld [vmem:[#allocation2 + $0x78] sm:$0xff]
  %v2661 = vadd.f32 %v2645, %v2646
  %v2662 = vadd.f32 %v2661, %v2647
  %v2663 = vadd.f32 %v2662, %v2648
  %v2664 = vadd.f32 %v2663, %v2649
  %v2665 = vadd.f32 %v2664, %v2650
  %v2666 = vadd.f32 %v2665, %v2651
  %v2667 = vadd.f32 %v2666, %v2652
  %v2668 = vadd.f32 %v2667, %v2653
  %v2669 = vadd.f32 %v2668, %v2654
  %v2670 = vadd.f32 %v2669, %v2655
  %v2671 = vadd.f32 %v2670, %v2656
  %v2672 = vadd.f32 %v2671, %v2657
  %v2673 = vadd.f32 %v2672, %v2658
  %v2674 = vadd.f32 %v2673, %v2659
  %v2675 = vadd.f32 %v2674, %v2660
  %v2676 = vrot.slane %v2675, 4
  %v2677 = vadd.f32 %v2675, %v2676
  %v2678 = vrot.slane %v2677, 2
  %v2679 = vadd.f32 %v2677, %v2678
  %v2680 = vrot.slane %v2679, 1
  %v2681 = vadd.f32 %v2679, %v2680
  %v2682 = vrcp.pop 128.0
  %v2683 = vmul.f32 %v2681, %v2682
  %v2684 = vmul.f32 %v2645, %v2645
  %v2685 = vmul.f32 %v2646, %v2646
  %v2686 = vmul.f32 %v2647, %v2647
  %v2687 = vmul.f32 %v2648, %v2648
  %v2688 = vmul.f32 %v2649, %v2649
  %v2689 = vmul.f32 %v2650, %v2650
  %v2690 = vmul.f32 %v2651, %v2651
  %v2691 = vmul.f32 %v2652, %v2652
  %v2692 = vmul.f32 %v2653, %v2653
  %v2693 = vmul.f32 %v2654, %v2654
  %v2694 = vmul.f32 %v2655, %v2655
  %v2695 = vmul.f32 %v2656, %v2656
  %v2696 = vmul.f32 %v2657, %v2657
  %v2697 = vmul.f32 %v2658, %v2658
  %v2698 = vmul.f32 %v2659, %v2659
  %v2699 = vmul.f32 %v2660, %v2660
  %v2700 = vadd.f32 %v2684, %v2685
  %v2701 = vadd.f32 %v2700, %v2686
  %v2702 = vadd.f32 %v2701, %v2687
  %v2703 = vadd.f32 %v2702, %v2688
  %v2704 = vadd.f32 %v2703, %v2689
  %v2705 = vadd.f32 %v2704, %v2690
  %v2706 = vadd.f32 %v2705, %v2691
  %v2707 = vadd.f32 %v2706, %v2692
  %v2708 = vadd.f32 %v2707, %v2693
  %v2709 = vadd.f32 %v2708, %v2694
  %v2710 = vadd.f32 %v2709, %v2695
  %v2711 = vadd.f32 %v2710, %v2696
  %v2712 = vadd.f32 %v2711, %v2697
  %v2713 = vadd.f32 %v2712, %v2698
  %v2714 = vadd.f32 %v2713, %v2699
  %v2715 = vrot.slane %v2714, 4
  %v2716 = vadd.f32 %v2714, %v2715
  %v2717 = vrot.slane %v2716, 2
  %v2718 = vadd.f32 %v2716, %v2717
  %v2719 = vrot.slane %v2718, 1
  %v2720 = vadd.f32 %v2718, %v2719
  %v2721 = vmul.f32 %v2720, %v2682
  %v2722 = vmul.f32 %v2683, %v2683
  %v2723 = vsub.f32 %v2721, %v2722
  %v2724 = vmax.f32 %v2723, 0.0
  %v2725 = vsub.f32 %v2645, %v2683
  %v2726 = vsub.f32 %v2646, %v2683
  %v2727 = vsub.f32 %v2647, %v2683
  %v2728 = vsub.f32 %v2648, %v2683
  %v2729 = vsub.f32 %v2649, %v2683
  %v2730 = vsub.f32 %v2650, %v2683
  %v2731 = vsub.f32 %v2651, %v2683
  %v2732 = vsub.f32 %v2652, %v2683
  %v2733 = vsub.f32 %v2653, %v2683
  %v2734 = vsub.f32 %v2654, %v2683
  %v2735 = vsub.f32 %v2655, %v2683
  %v2736 = vsub.f32 %v2656, %v2683
  %v2737 = vsub.f32 %v2657, %v2683
  %v2738 = vsub.f32 %v2658, %v2683
  %v2739 = vsub.f32 %v2659, %v2683
  %v2740 = vsub.f32 %v2660, %v2683
  %v2741 = vadd.f32 %v2724, 1e-05
  %v2742 = vrsqrt.pop %v2741
  %v2743 = vmul.f32 %v2725, %v2742
  %v2744 = vmul.f32 %v2726, %v2742
  %v2745 = vmul.f32 %v2727, %v2742
  %v2746 = vmul.f32 %v2728, %v2742
  %v2747 = vmul.f32 %v2729, %v2742
  %v2748 = vmul.f32 %v2730, %v2742
  %v2749 = vmul.f32 %v2731, %v2742
  %v2750 = vmul.f32 %v2732, %v2742
  %v2751 = vmul.f32 %v2733, %v2742
  %v2752 = vmul.f32 %v2734, %v2742
  %v2753 = vmul.f32 %v2735, %v2742
  %v2754 = vmul.f32 %v2736, %v2742
  %v2755 = vmul.f32 %v2737, %v2742
  %v2756 = vmul.f32 %v2738, %v2742
  %v2757 = vmul.f32 %v2739, %v2742
  %v2758 = vmul.f32 %v2740, %v2742
  %v2759 = vmax.f32 %v2743, 0.0
  %v2760 = vmax.f32 %v2744, 0.0
  %v2761 = vmax.f32 %v2745, 0.0
  %v2762 = vmax.f32 %v2746, 0.0
  %v2763 = vmax.f32 %v2747, 0.0
  %v2764 = vmax.f32 %v2748, 0.0
  %v2765 = vmax.f32 %v2749, 0.0
  %v2766 = vmax.f32 %v2750, 0.0
  %v2767 = vmax.f32 %v2751, 0.0
  %v2768 = vmax.f32 %v2752, 0.0
  %v2769 = vmax.f32 %v2753, 0.0
  %v2770 = vmax.f32 %v2754, 0.0
  %v2771 = vmax.f32 %v2755, 0.0
  %v2772 = vmax.f32 %v2756, 0.0
  %v2773 = vmax.f32 %v2757, 0.0
  %v2774 = vmax.f32 %v2758, 0.0
  %2775 = vst [vmem:[#allocation3] sm:$0xff] 0.0
  %2776 = vst [vmem:[#allocation3 + $0x8] sm:$0x3] 0.0
  %2777 = vst [vmem:[#allocation3 + $0x10] sm:$0xff] 0.0
  %2778 = vst [vmem:[#allocation3 + $0x18] sm:$0x3] 0.0
  %2779 = vst [vmem:[#allocation3 + $0x20] sm:$0xff] 0.0
  %2780 = vst [vmem:[#allocation3 + $0x28] sm:$0x3] 0.0
  %2781 = vst [vmem:[#allocation3 + $0x30] sm:$0xff] 0.0
  %2782 = vst [vmem:[#allocation3 + $0x38] sm:$0x3] 0.0
  %2783 = vst [vmem:[#allocation3 + $0x40] sm:$0xff] 0.0
  %2784 = vst [vmem:[#allocation3 + $0x48] sm:$0x3] 0.0
  %2785 = vst [vmem:[#allocation3 + $0x50] sm:$0xff] 0.0
  %2786 = vst [vmem:[#allocation3 + $0x58] sm:$0x3] 0.0
  %2787 = vst [vmem:[#allocation3 + $0x60] sm:$0xff] 0.0
  %2788 = vst [vmem:[#allocation3 + $0x68] sm:$0x3] 0.0
  %2789 = vst [vmem:[#allocation3 + $0x70] sm:$0xff] 0.0
  %2790 = vst [vmem:[#allocation3 + $0x78] sm:$0x3] 0.0
  %2791 = vst [vmem:[#allocation3 + $0x80] sm:$0xff] 0.0
  %2792 = vst [vmem:[#allocation3 + $0x88] sm:$0x3] 0.0
  %2793 = vst [vmem:[#allocation3 + $0x90] sm:$0xff] 0.0
  %2794 = vst [vmem:[#allocation3 + $0x98] sm:$0x3] 0.0
  %2795 = vst [vmem:[#allocation3 + $0xa0] sm:$0xff] 0.0
  %2796 = vst [vmem:[#allocation3 + $0xa8] sm:$0x3] 0.0
  %2797 = vst [vmem:[#allocation3 + $0xb0] sm:$0xff] 0.0
  %2798 = vst [vmem:[#allocation3 + $0xb8] sm:$0x3] 0.0
  %2799 = vst [vmem:[#allocation3 + $0xc0] sm:$0xff] 0.0
  %2800 = vst [vmem:[#allocation3 + $0xc8] sm:$0x3] 0.0
  %2801 = vst [vmem:[#allocation3 + $0xd0] sm:$0xff] 0.0
  %2802 = vst [vmem:[#allocation3 + $0xd8] sm:$0x3] 0.0
  %2803 = vst [vmem:[#allocation3 + $0xe0] sm:$0xff] 0.0
  %2804 = vst [vmem:[#allocation3 + $0xe8] sm:$0x3] 0.0
  %2805 = vst [vmem:[#allocation3 + $0xf0] sm:$0xff] 0.0
  %2806 = vst [vmem:[#allocation3 + $0xf8] sm:$0x3] 0.0
  %2807 = vst [vmem:[#allocation3 + $0x100] sm:$0xff] 0.0
  %2808 = vst [vmem:[#allocation3 + $0x108] sm:$0x3] 0.0
  %2809 = vst [vmem:[#allocation3 + $0x110] sm:$0xff] 0.0
  %2810 = vst [vmem:[#allocation3 + $0x118] sm:$0x3] 0.0
  %2811 = vst [vmem:[#allocation3 + $0x120] sm:$0xff] 0.0
  %2812 = vst [vmem:[#allocation3 + $0x128] sm:$0x3] 0.0
  %2813 = vst [vmem:[#allocation3 + $0x130] sm:$0xff] 0.0
  %2814 = vst [vmem:[#allocation3 + $0x138] sm:$0x3] 0.0
  %s2815 = scalar_lea.vmem [#allocation3], 16
  %2816 = vst [vmem:[%s2815 + $0x1] sm:$0xff] %v2759
  %2817 = vst [vmem:[%s2815 + $0x11] sm:$0xff] %v2760
  %2818 = vst [vmem:[%s2815 + $0x21] sm:$0xff] %v2761
  %2819 = vst [vmem:[%s2815 + $0x31] sm:$0xff] %v2762
  %2820 = vst [vmem:[%s2815 + $0x41] sm:$0xff] %v2763
  %2821 = vst [vmem:[%s2815 + $0x51] sm:$0xff] %v2764
  %2822 = vst [vmem:[%s2815 + $0x61] sm:$0xff] %v2765
  %2823 = vst [vmem:[%s2815 + $0x71] sm:$0xff] %v2766
  %2824 = vst [vmem:[%s2815 + $0xa1] sm:$0xff] %v2767
  %2825 = vst [vmem:[%s2815 + $0xb1] sm:$0xff] %v2768
  %2826 = vst [vmem:[%s2815 + $0xc1] sm:$0xff] %v2769
  %2827 = vst [vmem:[%s2815 + $0xd1] sm:$0xff] %v2770
  %2828 = vst [vmem:[%s2815 + $0xe1] sm:$0xff] %v2771
  %2829 = vst [vmem:[%s2815 + $0xf1] sm:$0xff] %v2772
  %2830 = vst [vmem:[%s2815 + $0x101] sm:$0xff] %v2773
  %2831 = vst [vmem:[%s2815 + $0x111] sm:$0xff] %v2774
  %2832 = vst [vmem:[#allocation2] sm:$0xff] 0.0
  %2833 = vst [vmem:[#allocation2 + $0x8] sm:$0xff] 0.0
  %2834 = vst [vmem:[#allocation2 + $0x10] sm:$0xff] 0.0
  %2835 = vst [vmem:[#allocation2 + $0x18] sm:$0xff] 0.0
  %2836 = vst [vmem:[#allocation2 + $0x20] sm:$0xff] 0.0
  %2837 = vst [vmem:[#allocation2 + $0x28] sm:$0xff] 0.0
  %2838 = vst [vmem:[#allocation2 + $0x30] sm:$0xff] 0.0
  %2839 = vst [vmem:[#allocation2 + $0x38] sm:$0xff] 0.0
  %2840 = vst [vmem:[#allocation2 + $0x40] sm:$0xff] 0.0
  %2841 = vst [vmem:[#allocation2 + $0x48] sm:$0xff] 0.0
  %2842 = vst [vmem:[#allocation2 + $0x50] sm:$0xff] 0.0
  %2843 = vst [vmem:[#allocation2 + $0x58] sm:$0xff] 0.0
  %2844 = vst [vmem:[#allocation2 + $0x60] sm:$0xff] 0.0
  %2845 = vst [vmem:[#allocation2 + $0x68] sm:$0xff] 0.0
  %2846 = vst [vmem:[#allocation2 + $0x70] sm:$0xff] 0.0
  %2847 = vst [vmem:[#allocation2 + $0x78] sm:$0xff] 0.0
  %v2848 = vld [vmem:[#allocation3] sm:$0xff]
  %v2849 = vld [vmem:[#allocation3 + $0x10] sm:$0xff]
  %v2850 = vld [vmem:[#allocation3 + $0x20] sm:$0xff]
  %v2851 = vld [vmem:[#allocation3 + $0x30] sm:$0xff]
  %v2852 = vld [vmem:[#allocation3 + $0x40] sm:$0xff]
  %v2853 = vld [vmem:[#allocation3 + $0x50] sm:$0xff]
  %v2854 = vld [vmem:[#allocation3 + $0x60] sm:$0xff]
  %v2855 = vld [vmem:[#allocation3 + $0x70] sm:$0xff]
  %v2856 = vld [vmem:[#allocation3 + $0xa0] sm:$0xff]
  %v2857 = vld [vmem:[#allocation3 + $0xb0] sm:$0xff]
  %v2858 = vld [vmem:[#allocation3 + $0xc0] sm:$0xff]
  %v2859 = vld [vmem:[#allocation3 + $0xd0] sm:$0xff]
  %v2860 = vld [vmem:[#allocation3 + $0xe0] sm:$0xff]
  %v2861 = vld [vmem:[#allocation3 + $0xf0] sm:$0xff]
  %v2862 = vld [vmem:[#allocation3 + $0x100] sm:$0xff]
  %v2863 = vld [vmem:[#allocation3 + $0x110] sm:$0xff]
  %v2864 = vld [vmem:[#allocation2] sm:$0xff]
  %v2865 = vld [vmem:[#allocation2 + $0x8] sm:$0xff]
  %v2866 = vld [vmem:[#allocation2 + $0x10] sm:$0xff]
  %v2867 = vld [vmem:[#allocation2 + $0x18] sm:$0xff]
  %v2868 = vld [vmem:[#allocation2 + $0x20] sm:$0xff]
  %v2869 = vld [vmem:[#allocation2 + $0x28] sm:$0xff]
  %v2870 = vld [vmem:[#allocation2 + $0x30] sm:$0xff]
  %v2871 = vld [vmem:[#allocation2 + $0x38] sm:$0xff]
  %v2872 = vld [vmem:[#allocation2 + $0x40] sm:$0xff]
  %v2873 = vld [vmem:[#allocation2 + $0x48] sm:$0xff]
  %v2874 = vld [vmem:[#allocation2 + $0x50] sm:$0xff]
  %v2875 = vld [vmem:[#allocation2 + $0x58] sm:$0xff]
  %v2876 = vld [vmem:[#allocation2 + $0x60] sm:$0xff]
  %v2877 = vld [vmem:[#allocation2 + $0x68] sm:$0xff]
  %v2878 = vld [vmem:[#allocation2 + $0x70] sm:$0xff]
  %v2879 = vld [vmem:[#allocation2 + $0x78] sm:$0xff]
  %v2880 = vpack.c.bf16 %v2848, %v2848
  %v2881 = vpack.c.bf16 %v2849, %v2849
  %v2882 = vpack.c.bf16 %v2850, %v2850
  %v2883 = vpack.c.bf16 %v2851, %v2851
  %v2884 = vpack.c.bf16 %v2852, %v2852
  %v2885 = vpack.c.bf16 %v2853, %v2853
  %v2886 = vpack.c.bf16 %v2854, %v2854
  %v2887 = vpack.c.bf16 %v2855, %v2855
  %v2888 = vpack.c.bf16 %v2856, %v2856
  %v2889 = vpack.c.bf16 %v2857, %v2857
  %v2890 = vpack.c.bf16 %v2858, %v2858
  %v2891 = vpack.c.bf16 %v2859, %v2859
  %v2892 = vpack.c.bf16 %v2860, %v2860
  %v2893 = vpack.c.bf16 %v2861, %v2861
  %v2894 = vpack.c.bf16 %v2862, %v2862
  %v2895 = vpack.c.bf16 %v2863, %v2863
  %v2896 = vld [vmem:[%s2] sm:$0xf]
  %v2897 = vld [vmem:[%s2 + $0x4] sm:$0xf]
  %v2898 = vld [vmem:[%s2 + $0x8] sm:$0xf]
  %v2899 = vld [vmem:[%s2 + $0xc] sm:$0xf]
  %v2900 = vld [vmem:[%s2 + $0x10] sm:$0xf]
  %v2901 = vld [vmem:[%s2 + $0x14] sm:$0xf]
  %v2902 = vld [vmem:[%s2 + $0x18] sm:$0xf]
  %v2903 = vld [vmem:[%s2 + $0x1c] sm:$0xf]
  %v2904 = vld [vmem:[%s2 + $0x20] sm:$0xf]
  %v2905 = vld [vmem:[%s2 + $0x24] sm:$0xf]
  %v2906 = vld [vmem:[%s2 + $0x28] sm:$0xf]
  %v2907 = vld [vmem:[%s2 + $0x2c] sm:$0xf]
  %v2908 = vld [vmem:[%s2 + $0x30] sm:$0xf]
  %v2909 = vld [vmem:[%s2 + $0x34] sm:$0xf]
  %v2910 = vld [vmem:[%s2 + $0x38] sm:$0xf]
  %v2911 = vld [vmem:[%s2 + $0x3c] sm:$0xf]
  %v2928 = vunpack.c.l.b16 %v2880
  %v2929 = vunpack.c.l.b16 %v2881
  %v2930 = vunpack.c.l.b16 %v2882
  %v2931 = vunpack.c.l.b16 %v2883
  %v2932 = vunpack.c.l.b16 %v2884
  %v2933 = vunpack.c.l.b16 %v2885
  %v2934 = vunpack.c.l.b16 %v2886
  %v2935 = vunpack.c.l.b16 %v2887
  %v2936 = vunpack.c.l.b16 %v2888
  %v2937 = vunpack.c.l.b16 %v2889
  %v2938 = vunpack.c.l.b16 %v2890
  %v2939 = vunpack.c.l.b16 %v2891
  %v2940 = vunpack.c.l.b16 %v2892
  %v2941 = vunpack.c.l.b16 %v2893
  %v2942 = vunpack.c.l.b16 %v2894
  %v2943 = vunpack.c.l.b16 %v2895
  %v2944 = vpack.c.b16 %v2929, %v2928
  %v2945 = vpack.c.b16 %v2931, %v2930
  %v2946 = vpack.c.b16 %v2933, %v2932
  %v2947 = vpack.c.b16 %v2935, %v2934
  %v2948 = vpack.c.b16 %v2937, %v2936
  %v2949 = vpack.c.b16 %v2939, %v2938
  %v2950 = vpack.c.b16 %v2941, %v2940
  %v2951 = vpack.c.b16 %v2943, %v2942
  %v2976 = vunpack.c.l.b16 %v2896
  %v2977 = vunpack.c.l.b16 %v2897
  %v2978 = vunpack.c.l.b16 %v2898
  %v2979 = vunpack.c.l.b16 %v2899
  %v2980 = vunpack.c.l.b16 %v2900
  %v2981 = vunpack.c.l.b16 %v2901
  %v2982 = vunpack.c.l.b16 %v2902
  %v2983 = vunpack.c.l.b16 %v2903
  %v2984 = vunpack.c.l.b16 %v2904
  %v2985 = vunpack.c.l.b16 %v2905
  %v2986 = vunpack.c.l.b16 %v2906
  %v2987 = vunpack.c.l.b16 %v2907
  %v2988 = vunpack.c.l.b16 %v2908
  %v2989 = vunpack.c.l.b16 %v2909
  %v2990 = vunpack.c.l.b16 %v2910
  %v2991 = vunpack.c.l.b16 %v2911
  %v2992 = vpack.c.b16 %v2977, %v2976
  %v2993 = vpack.c.b16 %v2979, %v2978
  %v2994 = vpack.c.b16 %v2981, %v2980
  %v2995 = vpack.c.b16 %v2983, %v2982
  %v2996 = vpack.c.b16 %v2985, %v2984
  %v2997 = vpack.c.b16 %v2987, %v2986
  %v2998 = vpack.c.b16 %v2989, %v2988
  %v2999 = vpack.c.b16 %v2991, %v2990
  %3008 = vmatprep.subr.bf16.mxu0 0
  %3009 = vmatpush1.bf16.msra.mxu0 %v2999
  %3010 = vmatprep.subr.bf16.mxu0 0
  %3011 = vmatpush1.bf16.msra.mxu0 %v2998
  %3012 = vmatprep.subr.bf16.mxu0 0
  %3013 = vmatpush1.bf16.msra.mxu0 %v2997
  %3014 = vmatprep.subr.bf16.mxu0 0
  %3015 = vmatpush1.bf16.msra.mxu0 %v2996
  %3016 = vmatprep.subr.bf16.mxu0 0
  %3017 = vmatpush1.bf16.msra.mxu0 %v2995
  %3018 = vmatprep.subr.bf16.mxu0 0
  %3019 = vmatpush1.bf16.msra.mxu0 %v2994
  %3020 = vmatprep.subr.bf16.mxu0 0
  %3021 = vmatpush1.bf16.msra.mxu0 %v2993
  %3022 = vmatprep.subr.bf16.mxu0 0
  %3023 = vmatpush1.bf16.msra.mxu0 %v2992
  %3024 = vmatprep.subr.bf16.mxu0 0
  %3025 = vmatpush2.bf16.msra.mxu0 0
  %3026 = vmatprep.subr.bf16.mxu0 0
  %3027 = vmatpush2.bf16.msra.mxu0 0
  %3028 = vmatprep.subr.bf16.mxu0 0
  %3029 = vmatpush2.bf16.msra.mxu0 0
  %3030 = vmatprep.subr.bf16.mxu0 0
  %3031 = vmatpush2.bf16.msra.mxu0 0
  %3032 = vmatprep.subr.bf16.mxu0 0
  %3033 = vmatpush2.bf16.msra.mxu0 0
  %3034 = vmatprep.subr.bf16.mxu0 0
  %3035 = vmatpush2.bf16.msra.mxu0 0
  %3036 = vmatprep.subr.bf16.mxu0 0
  %3037 = vmatpush2.bf16.msra.mxu0 0
  %3038 = vmatprep.subr.bf16.mxu0 0
  %3039 = vmatpush2.bf16.msra.mxu0 0
  %3040 = vmatprep.mubr.bf16.mxu0 0
  %3041 = vmatmul.mubr.bf16.gmra.mxu0 %v2944
  %v3042 = vpop.f32.mrf.mxu0
  %v3043 = vadd.f32 0.0, %v3042
  %v3044 = vpop.f32.mrf.mxu0
  %v3045 = vpop.f32.mrf.mxu0
  %v3046 = vadd.f32 0.0, %v3045
  %v3047 = vpop.f32.mrf.mxu0
  %3048 = vmatprep.mubr.bf16.mxu0 0
  %3049 = vmatmul.mubr.bf16.gmra.mxu0 %v2945
  %v3050 = vpop.f32.mrf.mxu0
  %v3051 = vadd.f32 0.0, %v3050
  %v3052 = vpop.f32.mrf.mxu0
  %v3053 = vpop.f32.mrf.mxu0
  %v3054 = vadd.f32 0.0, %v3053
  %v3055 = vpop.f32.mrf.mxu0
  %3056 = vmatprep.mubr.bf16.mxu0 0
  %3057 = vmatmul.mubr.bf16.gmra.mxu0 %v2946
  %v3058 = vpop.f32.mrf.mxu0
  %v3059 = vadd.f32 0.0, %v3058
  %v3060 = vpop.f32.mrf.mxu0
  %v3061 = vpop.f32.mrf.mxu0
  %v3062 = vadd.f32 0.0, %v3061
  %v3063 = vpop.f32.mrf.mxu0
  %3064 = vmatprep.mubr.bf16.mxu0 0
  %3065 = vmatmul.mubr.bf16.gmra.mxu0 %v2947
  %v3066 = vpop.f32.mrf.mxu0
  %v3067 = vadd.f32 0.0, %v3066
  %v3068 = vpop.f32.mrf.mxu0
  %v3069 = vpop.f32.mrf.mxu0
  %v3070 = vadd.f32 0.0, %v3069
  %v3071 = vpop.f32.mrf.mxu0
  %3072 = vmatprep.mubr.bf16.mxu0 0
  %3073 = vmatmul.mubr.bf16.gmra.mxu0 %v2948
  %v3074 = vpop.f32.mrf.mxu0
  %v3075 = vadd.f32 0.0, %v3074
  %v3076 = vpop.f32.mrf.mxu0
  %v3077 = vpop.f32.mrf.mxu0
  %v3078 = vadd.f32 0.0, %v3077
  %v3079 = vpop.f32.mrf.mxu0
  %3080 = vmatprep.mubr.bf16.mxu0 0
  %3081 = vmatmul.mubr.bf16.gmra.mxu0 %v2949
  %v3082 = vpop.f32.mrf.mxu0
  %v3083 = vadd.f32 0.0, %v3082
  %v3084 = vpop.f32.mrf.mxu0
  %v3085 = vpop.f32.mrf.mxu0
  %v3086 = vadd.f32 0.0, %v3085
  %v3087 = vpop.f32.mrf.mxu0
  %3088 = vmatprep.mubr.bf16.mxu0 0
  %3089 = vmatmul.mubr.bf16.gmra.mxu0 %v2950
  %v3090 = vpop.f32.mrf.mxu0
  %v3091 = vadd.f32 0.0, %v3090
  %v3092 = vpop.f32.mrf.mxu0
  %v3093 = vpop.f32.mrf.mxu0
  %v3094 = vadd.f32 0.0, %v3093
  %v3095 = vpop.f32.mrf.mxu0
  %3096 = vmatprep.mubr.bf16.mxu0 0
  %3097 = vmatmul.mubr.bf16.gmra.mxu0 %v2951
  %v3098 = vpop.f32.mrf.mxu0
  %v3099 = vadd.f32 0.0, %v3098
  %v3100 = vpop.f32.mrf.mxu0
  %v3101 = vpop.f32.mrf.mxu0
  %v3102 = vadd.f32 0.0, %v3101
  %v3103 = vpop.f32.mrf.mxu0
  %3104 = vdwg.mxu0
  %v3105 = vadd.f32 %v2864, %v3043
  %v3106 = vadd.f32 %v2865, %v3046
  %v3107 = vadd.f32 %v2866, %v3051
  %v3108 = vadd.f32 %v2867, %v3054
  %v3109 = vadd.f32 %v2868, %v3059
  %v3110 = vadd.f32 %v2869, %v3062
  %v3111 = vadd.f32 %v2870, %v3067
  %v3112 = vadd.f32 %v2871, %v3070
  %v3113 = vadd.f32 %v2872, %v3075
  %v3114 = vadd.f32 %v2873, %v3078
  %v3115 = vadd.f32 %v2874, %v3083
  %v3116 = vadd.f32 %v2875, %v3086
  %v3117 = vadd.f32 %v2876, %v3091
  %v3118 = vadd.f32 %v2877, %v3094
  %v3119 = vadd.f32 %v2878, %v3099
  %v3120 = vadd.f32 %v2879, %v3102
  %3121 = vst [vmem:[#allocation2] sm:$0xff] %v3105
  %3122 = vst [vmem:[#allocation2 + $0x8] sm:$0xff] %v3106
  %3123 = vst [vmem:[#allocation2 + $0x10] sm:$0xff] %v3107
  %3124 = vst [vmem:[#allocation2 + $0x18] sm:$0xff] %v3108
  %3125 = vst [vmem:[#allocation2 + $0x20] sm:$0xff] %v3109
  %3126 = vst [vmem:[#allocation2 + $0x28] sm:$0xff] %v3110
  %3127 = vst [vmem:[#allocation2 + $0x30] sm:$0xff] %v3111
  %3128 = vst [vmem:[#allocation2 + $0x38] sm:$0xff] %v3112
  %3129 = vst [vmem:[#allocation2 + $0x40] sm:$0xff] %v3113
  %3130 = vst [vmem:[#allocation2 + $0x48] sm:$0xff] %v3114
  %3131 = vst [vmem:[#allocation2 + $0x50] sm:$0xff] %v3115
  %3132 = vst [vmem:[#allocation2 + $0x58] sm:$0xff] %v3116
  %3133 = vst [vmem:[#allocation2 + $0x60] sm:$0xff] %v3117
  %3134 = vst [vmem:[#allocation2 + $0x68] sm:$0xff] %v3118
  %3135 = vst [vmem:[#allocation2 + $0x70] sm:$0xff] %v3119
  %3136 = vst [vmem:[#allocation2 + $0x78] sm:$0xff] %v3120
  %v3137 = vld [vmem:[#allocation3 + $0x1] sm:$0xff]
  %v3138 = vld [vmem:[#allocation3 + $0x11] sm:$0xff]
  %v3139 = vld [vmem:[#allocation3 + $0x21] sm:$0xff]
  %v3140 = vld [vmem:[#allocation3 + $0x31] sm:$0xff]
  %v3141 = vld [vmem:[#allocation3 + $0x41] sm:$0xff]
  %v3142 = vld [vmem:[#allocation3 + $0x51] sm:$0xff]
  %v3143 = vld [vmem:[#allocation3 + $0x61] sm:$0xff]
  %v3144 = vld [vmem:[#allocation3 + $0x71] sm:$0xff]
  %v3145 = vld [vmem:[#allocation3 + $0xa1] sm:$0xff]
  %v3146 = vld [vmem:[#allocation3 + $0xb1] sm:$0xff]
  %v3147 = vld [vmem:[#allocation3 + $0xc1] sm:$0xff]
  %v3148 = vld [vmem:[#allocation3 + $0xd1] sm:$0xff]
  %v3149 = vld [vmem:[#allocation3 + $0xe1] sm:$0xff]
  %v3150 = vld [vmem:[#allocation3 + $0xf1] sm:$0xff]
  %v3151 = vld [vmem:[#allocation3 + $0x101] sm:$0xff]
  %v3152 = vld [vmem:[#allocation3 + $0x111] sm:$0xff]
  %v3153 = vld [vmem:[#allocation2] sm:$0xff]
  %v3154 = vld [vmem:[#allocation2 + $0x8] sm:$0xff]
  %v3155 = vld [vmem:[#allocation2 + $0x10] sm:$0xff]
  %v3156 = vld [vmem:[#allocation2 + $0x18] sm:$0xff]
  %v3157 = vld [vmem:[#allocation2 + $0x20] sm:$0xff]
  %v3158 = vld [vmem:[#allocation2 + $0x28] sm:$0xff]
  %v3159 = vld [vmem:[#allocation2 + $0x30] sm:$0xff]
  %v3160 = vld [vmem:[#allocation2 + $0x38] sm:$0xff]
  %v3161 = vld [vmem:[#allocation2 + $0x40] sm:$0xff]
  %v3162 = vld [vmem:[#allocation2 + $0x48] sm:$0xff]
  %v3163 = vld [vmem:[#allocation2 + $0x50] sm:$0xff]
  %v3164 = vld [vmem:[#allocation2 + $0x58] sm:$0xff]
  %v3165 = vld [vmem:[#allocation2 + $0x60] sm:$0xff]
  %v3166 = vld [vmem:[#allocation2 + $0x68] sm:$0xff]
  %v3167 = vld [vmem:[#allocation2 + $0x70] sm:$0xff]
  %v3168 = vld [vmem:[#allocation2 + $0x78] sm:$0xff]
  %v3169 = vpack.c.bf16 %v3137, %v3137
  %v3170 = vpack.c.bf16 %v3138, %v3138
  %v3171 = vpack.c.bf16 %v3139, %v3139
  %v3172 = vpack.c.bf16 %v3140, %v3140
  %v3173 = vpack.c.bf16 %v3141, %v3141
  %v3174 = vpack.c.bf16 %v3142, %v3142
  %v3175 = vpack.c.bf16 %v3143, %v3143
  %v3176 = vpack.c.bf16 %v3144, %v3144
  %v3177 = vpack.c.bf16 %v3145, %v3145
  %v3178 = vpack.c.bf16 %v3146, %v3146
  %v3179 = vpack.c.bf16 %v3147, %v3147
  %v3180 = vpack.c.bf16 %v3148, %v3148
  %v3181 = vpack.c.bf16 %v3149, %v3149
  %v3182 = vpack.c.bf16 %v3150, %v3150
  %v3183 = vpack.c.bf16 %v3151, %v3151
  %v3184 = vpack.c.bf16 %v3152, %v3152
  %s3185 = scalar_lea.vmem %s2, 64
  %v3186 = vld [vmem:[%s3185] sm:$0xf]
  %v3187 = vld [vmem:[%s3185 + $0x4] sm:$0xf]
  %v3188 = vld [vmem:[%s3185 + $0x8] sm:$0xf]
  %v3189 = vld [vmem:[%s3185 + $0xc] sm:$0xf]
  %v3190 = vld [vmem:[%s3185 + $0x10] sm:$0xf]
  %v3191 = vld [vmem:[%s3185 + $0x14] sm:$0xf]
  %v3192 = vld [vmem:[%s3185 + $0x18] sm:$0xf]
  %v3193 = vld [vmem:[%s3185 + $0x1c] sm:$0xf]
  %v3194 = vld [vmem:[%s3185 + $0x20] sm:$0xf]
  %v3195 = vld [vmem:[%s3185 + $0x24] sm:$0xf]
  %v3196 = vld [vmem:[%s3185 + $0x28] sm:$0xf]
  %v3197 = vld [vmem:[%s3185 + $0x2c] sm:$0xf]
  %v3198 = vld [vmem:[%s3185 + $0x30] sm:$0xf]
  %v3199 = vld [vmem:[%s3185 + $0x34] sm:$0xf]
  %v3200 = vld [vmem:[%s3185 + $0x38] sm:$0xf]
  %v3201 = vld [vmem:[%s3185 + $0x3c] sm:$0xf]
  %v3218 = vunpack.c.l.b16 %v3169
  %v3219 = vunpack.c.l.b16 %v3170
  %v3220 = vunpack.c.l.b16 %v3171
  %v3221 = vunpack.c.l.b16 %v3172
  %v3222 = vunpack.c.l.b16 %v3173
  %v3223 = vunpack.c.l.b16 %v3174
  %v3224 = vunpack.c.l.b16 %v3175
  %v3225 = vunpack.c.l.b16 %v3176
  %v3226 = vunpack.c.l.b16 %v3177
  %v3227 = vunpack.c.l.b16 %v3178
  %v3228 = vunpack.c.l.b16 %v3179
  %v3229 = vunpack.c.l.b16 %v3180
  %v3230 = vunpack.c.l.b16 %v3181
  %v3231 = vunpack.c.l.b16 %v3182
  %v3232 = vunpack.c.l.b16 %v3183
  %v3233 = vunpack.c.l.b16 %v3184
  %v3234 = vpack.c.b16 %v3219, %v3218
  %v3235 = vpack.c.b16 %v3221, %v3220
  %v3236 = vpack.c.b16 %v3223, %v3222
  %v3237 = vpack.c.b16 %v3225, %v3224
  %v3238 = vpack.c.b16 %v3227, %v3226
  %v3239 = vpack.c.b16 %v3229, %v3228
  %v3240 = vpack.c.b16 %v3231, %v3230
  %v3241 = vpack.c.b16 %v3233, %v3232
  %v3266 = vunpack.c.l.b16 %v3186
  %v3267 = vunpack.c.l.b16 %v3187
  %v3268 = vunpack.c.l.b16 %v3188
  %v3269 = vunpack.c.l.b16 %v3189
  %v3270 = vunpack.c.l.b16 %v3190
  %v3271 = vunpack.c.l.b16 %v3191
  %v3272 = vunpack.c.l.b16 %v3192
  %v3273 = vunpack.c.l.b16 %v3193
  %v3274 = vunpack.c.l.b16 %v3194
  %v3275 = vunpack.c.l.b16 %v3195
  %v3276 = vunpack.c.l.b16 %v3196
  %v3277 = vunpack.c.l.b16 %v3197
  %v3278 = vunpack.c.l.b16 %v3198
  %v3279 = vunpack.c.l.b16 %v3199
  %v3280 = vunpack.c.l.b16 %v3200
  %v3281 = vunpack.c.l.b16 %v3201
  %v3282 = vpack.c.b16 %v3267, %v3266
  %v3283 = vpack.c.b16 %v3269, %v3268
  %v3284 = vpack.c.b16 %v3271, %v3270
  %v3285 = vpack.c.b16 %v3273, %v3272
  %v3286 = vpack.c.b16 %v3275, %v3274
  %v3287 = vpack.c.b16 %v3277, %v3276
  %v3288 = vpack.c.b16 %v3279, %v3278
  %v3289 = vpack.c.b16 %v3281, %v3280
  %3298 = vmatprep.subr.bf16.mxu0 0
  %3299 = vmatpush1.bf16.msra.mxu0 %v3289
  %3300 = vmatprep.subr.bf16.mxu0 0
  %3301 = vmatpush1.bf16.msra.mxu0 %v3288
  %3302 = vmatprep.subr.bf16.mxu0 0
  %3303 = vmatpush1.bf16.msra.mxu0 %v3287
  %3304 = vmatprep.subr.bf16.mxu0 0
  %3305 = vmatpush1.bf16.msra.mxu0 %v3286
  %3306 = vmatprep.subr.bf16.mxu0 0
  %3307 = vmatpush1.bf16.msra.mxu0 %v3285
  %3308 = vmatprep.subr.bf16.mxu0 0
  %3309 = vmatpush1.bf16.msra.mxu0 %v3284
  %3310 = vmatprep.subr.bf16.mxu0 0
  %3311 = vmatpush1.bf16.msra.mxu0 %v3283
  %3312 = vmatprep.subr.bf16.mxu0 0
  %3313 = vmatpush1.bf16.msra.mxu0 %v3282
  %3314 = vmatprep.subr.bf16.mxu0 0
  %3315 = vmatpush2.bf16.msra.mxu0 0
  %3316 = vmatprep.subr.bf16.mxu0 0
  %3317 = vmatpush2.bf16.msra.mxu0 0
  %3318 = vmatprep.subr.bf16.mxu0 0
  %3319 = vmatpush2.bf16.msra.mxu0 0
  %3320 = vmatprep.subr.bf16.mxu0 0
  %3321 = vmatpush2.bf16.msra.mxu0 0
  %3322 = vmatprep.subr.bf16.mxu0 0
  %3323 = vmatpush2.bf16.msra.mxu0 0
  %3324 = vmatprep.subr.bf16.mxu0 0
  %3325 = vmatpush2.bf16.msra.mxu0 0
  %3326 = vmatprep.subr.bf16.mxu0 0
  %3327 = vmatpush2.bf16.msra.mxu0 0
  %3328 = vmatprep.subr.bf16.mxu0 0
  %3329 = vmatpush2.bf16.msra.mxu0 0
  %3330 = vmatprep.mubr.bf16.mxu0 0
  %3331 = vmatmul.mubr.bf16.gmra.mxu0 %v3234
  %v3332 = vpop.f32.mrf.mxu0
  %v3333 = vadd.f32 0.0, %v3332
  %v3334 = vpop.f32.mrf.mxu0
  %v3335 = vpop.f32.mrf.mxu0
  %v3336 = vadd.f32 0.0, %v3335
  %v3337 = vpop.f32.mrf.mxu0
  %3338 = vmatprep.mubr.bf16.mxu0 0
  %3339 = vmatmul.mubr.bf16.gmra.mxu0 %v3235
  %v3340 = vpop.f32.mrf.mxu0
  %v3341 = vadd.f32 0.0, %v3340
  %v3342 = vpop.f32.mrf.mxu0
  %v3343 = vpop.f32.mrf.mxu0
  %v3344 = vadd.f32 0.0, %v3343
  %v3345 = vpop.f32.mrf.mxu0
  %3346 = vmatprep.mubr.bf16.mxu0 0
  %3347 = vmatmul.mubr.bf16.gmra.mxu0 %v3236
  %v3348 = vpop.f32.mrf.mxu0
  %v3349 = vadd.f32 0.0, %v3348
  %v3350 = vpop.f32.mrf.mxu0
  %v3351 = vpop.f32.mrf.mxu0
  %v3352 = vadd.f32 0.0, %v3351
  %v3353 = vpop.f32.mrf.mxu0
  %3354 = vmatprep.mubr.bf16.mxu0 0
  %3355 = vmatmul.mubr.bf16.gmra.mxu0 %v3237
  %v3356 = vpop.f32.mrf.mxu0
  %v3357 = vadd.f32 0.0, %v3356
  %v3358 = vpop.f32.mrf.mxu0
  %v3359 = vpop.f32.mrf.mxu0
  %v3360 = vadd.f32 0.0, %v3359
  %v3361 = vpop.f32.mrf.mxu0
  %3362 = vmatprep.mubr.bf16.mxu0 0
  %3363 = vmatmul.mubr.bf16.gmra.mxu0 %v3238
  %v3364 = vpop.f32.mrf.mxu0
  %v3365 = vadd.f32 0.0, %v3364
  %v3366 = vpop.f32.mrf.mxu0
  %v3367 = vpop.f32.mrf.mxu0
  %v3368 = vadd.f32 0.0, %v3367
  %v3369 = vpop.f32.mrf.mxu0
  %3370 = vmatprep.mubr.bf16.mxu0 0
  %3371 = vmatmul.mubr.bf16.gmra.mxu0 %v3239
  %v3372 = vpop.f32.mrf.mxu0
  %v3373 = vadd.f32 0.0, %v3372
  %v3374 = vpop.f32.mrf.mxu0
  %v3375 = vpop.f32.mrf.mxu0
  %v3376 = vadd.f32 0.0, %v3375
  %v3377 = vpop.f32.mrf.mxu0
  %3378 = vmatprep.mubr.bf16.mxu0 0
  %3379 = vmatmul.mubr.bf16.gmra.mxu0 %v3240
  %v3380 = vpop.f32.mrf.mxu0
  %v3381 = vadd.f32 0.0, %v3380
  %v3382 = vpop.f32.mrf.mxu0
  %v3383 = vpop.f32.mrf.mxu0
  %v3384 = vadd.f32 0.0, %v3383
  %v3385 = vpop.f32.mrf.mxu0
  %3386 = vmatprep.mubr.bf16.mxu0 0
  %3387 = vmatmul.mubr.bf16.gmra.mxu0 %v3241
  %v3388 = vpop.f32.mrf.mxu0
  %v3389 = vadd.f32 0.0, %v3388
  %v3390 = vpop.f32.mrf.mxu0
  %v3391 = vpop.f32.mrf.mxu0
  %v3392 = vadd.f32 0.0, %v3391
  %v3393 = vpop.f32.mrf.mxu0
  %3394 = vdwg.mxu0
  %v3395 = vadd.f32 %v3153, %v3333
  %v3396 = vadd.f32 %v3154, %v3336
  %v3397 = vadd.f32 %v3155, %v3341
  %v3398 = vadd.f32 %v3156, %v3344
  %v3399 = vadd.f32 %v3157, %v3349
  %v3400 = vadd.f32 %v3158, %v3352
  %v3401 = vadd.f32 %v3159, %v3357
  %v3402 = vadd.f32 %v3160, %v3360
  %v3403 = vadd.f32 %v3161, %v3365
  %v3404 = vadd.f32 %v3162, %v3368
  %v3405 = vadd.f32 %v3163, %v3373
  %v3406 = vadd.f32 %v3164, %v3376
  %v3407 = vadd.f32 %v3165, %v3381
  %v3408 = vadd.f32 %v3166, %v3384
  %v3409 = vadd.f32 %v3167, %v3389
  %v3410 = vadd.f32 %v3168, %v3392
  %3411 = vst [vmem:[#allocation2] sm:$0xff] %v3395
  %3412 = vst [vmem:[#allocation2 + $0x8] sm:$0xff] %v3396
  %3413 = vst [vmem:[#allocation2 + $0x10] sm:$0xff] %v3397
  %3414 = vst [vmem:[#allocation2 + $0x18] sm:$0xff] %v3398
  %3415 = vst [vmem:[#allocation2 + $0x20] sm:$0xff] %v3399
  %3416 = vst [vmem:[#allocation2 + $0x28] sm:$0xff] %v3400
  %3417 = vst [vmem:[#allocation2 + $0x30] sm:$0xff] %v3401
  %3418 = vst [vmem:[#allocation2 + $0x38] sm:$0xff] %v3402
  %3419 = vst [vmem:[#allocation2 + $0x40] sm:$0xff] %v3403
  %3420 = vst [vmem:[#allocation2 + $0x48] sm:$0xff] %v3404
  %3421 = vst [vmem:[#allocation2 + $0x50] sm:$0xff] %v3405
  %3422 = vst [vmem:[#allocation2 + $0x58] sm:$0xff] %v3406
  %3423 = vst [vmem:[#allocation2 + $0x60] sm:$0xff] %v3407
  %3424 = vst [vmem:[#allocation2 + $0x68] sm:$0xff] %v3408
  %3425 = vst [vmem:[#allocation2 + $0x70] sm:$0xff] %v3409
  %3426 = vst [vmem:[#allocation2 + $0x78] sm:$0xff] %v3410
  %v3427 = vld [vmem:[#allocation3 + $0x2] sm:$0xff]
  %v3428 = vld [vmem:[#allocation3 + $0x12] sm:$0xff]
  %v3429 = vld [vmem:[#allocation3 + $0x22] sm:$0xff]
  %v3430 = vld [vmem:[#allocation3 + $0x32] sm:$0xff]
  %v3431 = vld [vmem:[#allocation3 + $0x42] sm:$0xff]
  %v3432 = vld [vmem:[#allocation3 + $0x52] sm:$0xff]
  %v3433 = vld [vmem:[#allocation3 + $0x62] sm:$0xff]
  %v3434 = vld [vmem:[#allocation3 + $0x72] sm:$0xff]
  %v3435 = vld [vmem:[#allocation3 + $0xa2] sm:$0xff]
  %v3436 = vld [vmem:[#allocation3 + $0xb2] sm:$0xff]
  %v3437 = vld [vmem:[#allocation3 + $0xc2] sm:$0xff]
  %v3438 = vld [vmem:[#allocation3 + $0xd2] sm:$0xff]
  %v3439 = vld [vmem:[#allocation3 + $0xe2] sm:$0xff]
  %v3440 = vld [vmem:[#allocation3 + $0xf2] sm:$0xff]
  %v3441 = vld [vmem:[#allocation3 + $0x102] sm:$0xff]
  %v3442 = vld [vmem:[#allocation3 + $0x112] sm:$0xff]
  %v3443 = vld [vmem:[#allocation2] sm:$0xff]
  %v3444 = vld [vmem:[#allocation2 + $0x8] sm:$0xff]
  %v3445 = vld [vmem:[#allocation2 + $0x10] sm:$0xff]
  %v3446 = vld [vmem:[#allocation2 + $0x18] sm:$0xff]
  %v3447 = vld [vmem:[#allocation2 + $0x20] sm:$0xff]
  %v3448 = vld [vmem:[#allocation2 + $0x28] sm:$0xff]
  %v3449 = vld [vmem:[#allocation2 + $0x30] sm:$0xff]
  %v3450 = vld [vmem:[#allocation2 + $0x38] sm:$0xff]
  %v3451 = vld [vmem:[#allocation2 + $0x40] sm:$0xff]
  %v3452 = vld [vmem:[#allocation2 + $0x48] sm:$0xff]
  %v3453 = vld [vmem:[#allocation2 + $0x50] sm:$0xff]
  %v3454 = vld [vmem:[#allocation2 + $0x58] sm:$0xff]
  %v3455 = vld [vmem:[#allocation2 + $0x60] sm:$0xff]
  %v3456 = vld [vmem:[#allocation2 + $0x68] sm:$0xff]
  %v3457 = vld [vmem:[#allocation2 + $0x70] sm:$0xff]
  %v3458 = vld [vmem:[#allocation2 + $0x78] sm:$0xff]
  %v3459 = vpack.c.bf16 %v3427, %v3427
  %v3460 = vpack.c.bf16 %v3428, %v3428
  %v3461 = vpack.c.bf16 %v3429, %v3429
  %v3462 = vpack.c.bf16 %v3430, %v3430
  %v3463 = vpack.c.bf16 %v3431, %v3431
  %v3464 = vpack.c.bf16 %v3432, %v3432
  %v3465 = vpack.c.bf16 %v3433, %v3433
  %v3466 = vpack.c.bf16 %v3434, %v3434
  %v3467 = vpack.c.bf16 %v3435, %v3435
  %v3468 = vpack.c.bf16 %v3436, %v3436
  %v3469 = vpack.c.bf16 %v3437, %v3437
  %v3470 = vpack.c.bf16 %v3438, %v3438
  %v3471 = vpack.c.bf16 %v3439, %v3439
  %v3472 = vpack.c.bf16 %v3440, %v3440
  %v3473 = vpack.c.bf16 %v3441, %v3441
  %v3474 = vpack.c.bf16 %v3442, %v3442
  %s3475 = scalar_lea.vmem %s2, 128
  %v3476 = vld [vmem:[%s3475] sm:$0xf]
  %v3477 = vld [vmem:[%s3475 + $0x4] sm:$0xf]
  %v3478 = vld [vmem:[%s3475 + $0x8] sm:$0xf]
  %v3479 = vld [vmem:[%s3475 + $0xc] sm:$0xf]
  %v3480 = vld [vmem:[%s3475 + $0x10] sm:$0xf]
  %v3481 = vld [vmem:[%s3475 + $0x14] sm:$0xf]
  %v3482 = vld [vmem:[%s3475 + $0x18] sm:$0xf]
  %v3483 = vld [vmem:[%s3475 + $0x1c] sm:$0xf]
  %v3484 = vld [vmem:[%s3475 + $0x20] sm:$0xf]
  %v3485 = vld [vmem:[%s3475 + $0x24] sm:$0xf]
  %v3486 = vld [vmem:[%s3475 + $0x28] sm:$0xf]
  %v3487 = vld [vmem:[%s3475 + $0x2c] sm:$0xf]
  %v3488 = vld [vmem:[%s3475 + $0x30] sm:$0xf]
  %v3489 = vld [vmem:[%s3475 + $0x34] sm:$0xf]
  %v3490 = vld [vmem:[%s3475 + $0x38] sm:$0xf]
  %v3491 = vld [vmem:[%s3475 + $0x3c] sm:$0xf]
  %v3508 = vunpack.c.l.b16 %v3459
  %v3509 = vunpack.c.l.b16 %v3460
  %v3510 = vunpack.c.l.b16 %v3461
  %v3511 = vunpack.c.l.b16 %v3462
  %v3512 = vunpack.c.l.b16 %v3463
  %v3513 = vunpack.c.l.b16 %v3464
  %v3514 = vunpack.c.l.b16 %v3465
  %v3515 = vunpack.c.l.b16 %v3466
  %v3516 = vunpack.c.l.b16 %v3467
  %v3517 = vunpack.c.l.b16 %v3468
  %v3518 = vunpack.c.l.b16 %v3469
  %v3519 = vunpack.c.l.b16 %v3470
  %v3520 = vunpack.c.l.b16 %v3471
  %v3521 = vunpack.c.l.b16 %v3472
  %v3522 = vunpack.c.l.b16 %v3473
  %v3523 = vunpack.c.l.b16 %v3474
  %v3524 = vpack.c.b16 %v3509, %v3508
  %v3525 = vpack.c.b16 %v3511, %v3510
  %v3526 = vpack.c.b16 %v3513, %v3512
  %v3527 = vpack.c.b16 %v3515, %v3514
  %v3528 = vpack.c.b16 %v3517, %v3516
  %v3529 = vpack.c.b16 %v3519, %v3518
  %v3530 = vpack.c.b16 %v3521, %v3520
  %v3531 = vpack.c.b16 %v3523, %v3522
  %v3556 = vunpack.c.l.b16 %v3476
  %v3557 = vunpack.c.l.b16 %v3477
  %v3558 = vunpack.c.l.b16 %v3478
  %v3559 = vunpack.c.l.b16 %v3479
  %v3560 = vunpack.c.l.b16 %v3480
  %v3561 = vunpack.c.l.b16 %v3481
  %v3562 = vunpack.c.l.b16 %v3482
  %v3563 = vunpack.c.l.b16 %v3483
  %v3564 = vunpack.c.l.b16 %v3484
  %v3565 = vunpack.c.l.b16 %v3485
  %v3566 = vunpack.c.l.b16 %v3486
  %v3567 = vunpack.c.l.b16 %v3487
  %v3568 = vunpack.c.l.b16 %v3488
  %v3569 = vunpack.c.l.b16 %v3489
  %v3570 = vunpack.c.l.b16 %v3490
  %v3571 = vunpack.c.l.b16 %v3491
  %v3572 = vpack.c.b16 %v3557, %v3556
  %v3573 = vpack.c.b16 %v3559, %v3558
  %v3574 = vpack.c.b16 %v3561, %v3560
  %v3575 = vpack.c.b16 %v3563, %v3562
  %v3576 = vpack.c.b16 %v3565, %v3564
  %v3577 = vpack.c.b16 %v3567, %v3566
  %v3578 = vpack.c.b16 %v3569, %v3568
  %v3579 = vpack.c.b16 %v3571, %v3570
  %3588 = vmatprep.subr.bf16.mxu0 0
  %3589 = vmatpush1.bf16.msra.mxu0 %v3579
  %3590 = vmatprep.subr.bf16.mxu0 0
  %3591 = vmatpush1.bf16.msra.mxu0 %v3578
  %3592 = vmatprep.subr.bf16.mxu0 0
  %3593 = vmatpush1.bf16.msra.mxu0 %v3577
  %3594 = vmatprep.subr.bf16.mxu0 0
  %3595 = vmatpush1.bf16.msra.mxu0 %v3576
  %3596 = vmatprep.subr.bf16.mxu0 0
  %3597 = vmatpush1.bf16.msra.mxu0 %v3575
  %3598 = vmatprep.subr.bf16.mxu0 0
  %3599 = vmatpush1.bf16.msra.mxu0 %v3574
  %3600 = vmatprep.subr.bf16.mxu0 0
  %3601 = vmatpush1.bf16.msra.mxu0 %v3573
  %3602 = vmatprep.subr.bf16.mxu0 0
  %3603 = vmatpush1.bf16.msra.mxu0 %v3572
  %3604 = vmatprep.subr.bf16.mxu0 0
  %3605 = vmatpush2.bf16.msra.mxu0 0
  %3606 = vmatprep.subr.bf16.mxu0 0
  %3607 = vmatpush2.bf16.msra.mxu0 0
  %3608 = vmatprep.subr.bf16.mxu0 0
  %3609 = vmatpush2.bf16.msra.mxu0 0
  %3610 = vmatprep.subr.bf16.mxu0 0
  %3611 = vmatpush2.bf16.msra.mxu0 0
  %3612 = vmatprep.subr.bf16.mxu0 0
  %3613 = vmatpush2.bf16.msra.mxu0 0
  %3614 = vmatprep.subr.bf16.mxu0 0
  %3615 = vmatpush2.bf16.msra.mxu0 0
  %3616 = vmatprep.subr.bf16.mxu0 0
  %3617 = vmatpush2.bf16.msra.mxu0 0
  %3618 = vmatprep.subr.bf16.mxu0 0
  %3619 = vmatpush2.bf16.msra.mxu0 0
  %3620 = vmatprep.mubr.bf16.mxu0 0
  %3621 = vmatmul.mubr.bf16.gmra.mxu0 %v3524
  %v3622 = vpop.f32.mrf.mxu0
  %v3623 = vadd.f32 0.0, %v3622
  %v3624 = vpop.f32.mrf.mxu0
  %v3625 = vpop.f32.mrf.mxu0
  %v3626 = vadd.f32 0.0, %v3625
  %v3627 = vpop.f32.mrf.mxu0
  %3628 = vmatprep.mubr.bf16.mxu0 0
  %3629 = vmatmul.mubr.bf16.gmra.mxu0 %v3525
  %v3630 = vpop.f32.mrf.mxu0
  %v3631 = vadd.f32 0.0, %v3630
  %v3632 = vpop.f32.mrf.mxu0
  %v3633 = vpop.f32.mrf.mxu0
  %v3634 = vadd.f32 0.0, %v3633
  %v3635 = vpop.f32.mrf.mxu0
  %3636 = vmatprep.mubr.bf16.mxu0 0
  %3637 = vmatmul.mubr.bf16.gmra.mxu0 %v3526
  %v3638 = vpop.f32.mrf.mxu0
  %v3639 = vadd.f32 0.0, %v3638
  %v3640 = vpop.f32.mrf.mxu0
  %v3641 = vpop.f32.mrf.mxu0
  %v3642 = vadd.f32 0.0, %v3641
  %v3643 = vpop.f32.mrf.mxu0
  %3644 = vmatprep.mubr.bf16.mxu0 0
  %3645 = vmatmul.mubr.bf16.gmra.mxu0 %v3527
  %v3646 = vpop.f32.mrf.mxu0
  %v3647 = vadd.f32 0.0, %v3646
  %v3648 = vpop.f32.mrf.mxu0
  %v3649 = vpop.f32.mrf.mxu0
  %v3650 = vadd.f32 0.0, %v3649
  %v3651 = vpop.f32.mrf.mxu0
  %3652 = vmatprep.mubr.bf16.mxu0 0
  %3653 = vmatmul.mubr.bf16.gmra.mxu0 %v3528
  %v3654 = vpop.f32.mrf.mxu0
  %v3655 = vadd.f32 0.0, %v3654
  %v3656 = vpop.f32.mrf.mxu0
  %v3657 = vpop.f32.mrf.mxu0
  %v3658 = vadd.f32 0.0, %v3657
  %v3659 = vpop.f32.mrf.mxu0
  %3660 = vmatprep.mubr.bf16.mxu0 0
  %3661 = vmatmul.mubr.bf16.gmra.mxu0 %v3529
  %v3662 = vpop.f32.mrf.mxu0
  %v3663 = vadd.f32 0.0, %v3662
  %v3664 = vpop.f32.mrf.mxu0
  %v3665 = vpop.f32.mrf.mxu0
  %v3666 = vadd.f32 0.0, %v3665
  %v3667 = vpop.f32.mrf.mxu0
  %3668 = vmatprep.mubr.bf16.mxu0 0
  %3669 = vmatmul.mubr.bf16.gmra.mxu0 %v3530
  %v3670 = vpop.f32.mrf.mxu0
  %v3671 = vadd.f32 0.0, %v3670
  %v3672 = vpop.f32.mrf.mxu0
  %v3673 = vpop.f32.mrf.mxu0
  %v3674 = vadd.f32 0.0, %v3673
  %v3675 = vpop.f32.mrf.mxu0
  %3676 = vmatprep.mubr.bf16.mxu0 0
  %3677 = vmatmul.mubr.bf16.gmra.mxu0 %v3531
  %v3678 = vpop.f32.mrf.mxu0
  %v3679 = vadd.f32 0.0, %v3678
  %v3680 = vpop.f32.mrf.mxu0
  %v3681 = vpop.f32.mrf.mxu0
  %v3682 = vadd.f32 0.0, %v3681
  %v3683 = vpop.f32.mrf.mxu0
  %3684 = vdwg.mxu0
  %v3685 = vadd.f32 %v3443, %v3623
  %v3686 = vadd.f32 %v3444, %v3626
  %v3687 = vadd.f32 %v3445, %v3631
  %v3688 = vadd.f32 %v3446, %v3634
  %v3689 = vadd.f32 %v3447, %v3639
  %v3690 = vadd.f32 %v3448, %v3642
  %v3691 = vadd.f32 %v3449, %v3647
  %v3692 = vadd.f32 %v3450, %v3650
  %v3693 = vadd.f32 %v3451, %v3655
  %v3694 = vadd.f32 %v3452, %v3658
  %v3695 = vadd.f32 %v3453, %v3663
  %v3696 = vadd.f32 %v3454, %v3666
  %v3697 = vadd.f32 %v3455, %v3671
  %v3698 = vadd.f32 %v3456, %v3674
  %v3699 = vadd.f32 %v3457, %v3679
  %v3700 = vadd.f32 %v3458, %v3682
  %3701 = vst [vmem:[#allocation2] sm:$0xff] %v3685
  %3702 = vst [vmem:[#allocation2 + $0x8] sm:$0xff] %v3686
  %3703 = vst [vmem:[#allocation2 + $0x10] sm:$0xff] %v3687
  %3704 = vst [vmem:[#allocation2 + $0x18] sm:$0xff] %v3688
  %3705 = vst [vmem:[#allocation2 + $0x20] sm:$0xff] %v3689
  %3706 = vst [vmem:[#allocation2 + $0x28] sm:$0xff] %v3690
  %3707 = vst [vmem:[#allocation2 + $0x30] sm:$0xff] %v3691
  %3708 = vst [vmem:[#allocation2 + $0x38] sm:$0xff] %v3692
  %3709 = vst [vmem:[#allocation2 + $0x40] sm:$0xff] %v3693
  %3710 = vst [vmem:[#allocation2 + $0x48] sm:$0xff] %v3694
  %3711 = vst [vmem:[#allocation2 + $0x50] sm:$0xff] %v3695
  %3712 = vst [vmem:[#allocation2 + $0x58] sm:$0xff] %v3696
  %3713 = vst [vmem:[#allocation2 + $0x60] sm:$0xff] %v3697
  %3714 = vst [vmem:[#allocation2 + $0x68] sm:$0xff] %v3698
  %3715 = vst [vmem:[#allocation2 + $0x70] sm:$0xff] %v3699
  %3716 = vst [vmem:[#allocation2 + $0x78] sm:$0xff] %v3700
  %v3717 = vld [vmem:[%s2815] sm:$0xff]
  %v3718 = vld [vmem:[%s2815 + $0x10] sm:$0xff]
  %v3719 = vld [vmem:[%s2815 + $0x20] sm:$0xff]
  %v3720 = vld [vmem:[%s2815 + $0x30] sm:$0xff]
  %v3721 = vld [vmem:[%s2815 + $0x40] sm:$0xff]
  %v3722 = vld [vmem:[%s2815 + $0x50] sm:$0xff]
  %v3723 = vld [vmem:[%s2815 + $0x60] sm:$0xff]
  %v3724 = vld [vmem:[%s2815 + $0x70] sm:$0xff]
  %v3725 = vld [vmem:[%s2815 + $0xa0] sm:$0xff]
  %v3726 = vld [vmem:[%s2815 + $0xb0] sm:$0xff]
  %v3727 = vld [vmem:[%s2815 + $0xc0] sm:$0xff]
  %v3728 = vld [vmem:[%s2815 + $0xd0] sm:$0xff]
  %v3729 = vld [vmem:[%s2815 + $0xe0] sm:$0xff]
  %v3730 = vld [vmem:[%s2815 + $0xf0] sm:$0xff]
  %v3731 = vld [vmem:[%s2815 + $0x100] sm:$0xff]
  %v3732 = vld [vmem:[%s2815 + $0x110] sm:$0xff]
  %v3733 = vld [vmem:[#allocation2] sm:$0xff]
  %v3734 = vld [vmem:[#allocation2 + $0x8] sm:$0xff]
  %v3735 = vld [vmem:[#allocation2 + $0x10] sm:$0xff]
  %v3736 = vld [vmem:[#allocation2 + $0x18] sm:$0xff]
  %v3737 = vld [vmem:[#allocation2 + $0x20] sm:$0xff]
  %v3738 = vld [vmem:[#allocation2 + $0x28] sm:$0xff]
  %v3739 = vld [vmem:[#allocation2 + $0x30] sm:$0xff]
  %v3740 = vld [vmem:[#allocation2 + $0x38] sm:$0xff]
  %v3741 = vld [vmem:[#allocation2 + $0x40] sm:$0xff]
  %v3742 = vld [vmem:[#allocation2 + $0x48] sm:$0xff]
  %v3743 = vld [vmem:[#allocation2 + $0x50] sm:$0xff]
  %v3744 = vld [vmem:[#allocation2 + $0x58] sm:$0xff]
  %v3745 = vld [vmem:[#allocation2 + $0x60] sm:$0xff]
  %v3746 = vld [vmem:[#allocation2 + $0x68] sm:$0xff]
  %v3747 = vld [vmem:[#allocation2 + $0x70] sm:$0xff]
  %v3748 = vld [vmem:[#allocation2 + $0x78] sm:$0xff]
  %v3749 = vpack.c.bf16 %v3717, %v3717
  %v3750 = vpack.c.bf16 %v3718, %v3718
  %v3751 = vpack.c.bf16 %v3719, %v3719
  %v3752 = vpack.c.bf16 %v3720, %v3720
  %v3753 = vpack.c.bf16 %v3721, %v3721
  %v3754 = vpack.c.bf16 %v3722, %v3722
  %v3755 = vpack.c.bf16 %v3723, %v3723
  %v3756 = vpack.c.bf16 %v3724, %v3724
  %v3757 = vpack.c.bf16 %v3725, %v3725
  %v3758 = vpack.c.bf16 %v3726, %v3726
  %v3759 = vpack.c.bf16 %v3727, %v3727
  %v3760 = vpack.c.bf16 %v3728, %v3728
  %v3761 = vpack.c.bf16 %v3729, %v3729
  %v3762 = vpack.c.bf16 %v3730, %v3730
  %v3763 = vpack.c.bf16 %v3731, %v3731
  %v3764 = vpack.c.bf16 %v3732, %v3732
  %s3765 = scalar_lea.vmem %s2, 192
  %v3766 = vld [vmem:[%s3765] sm:$0xf]
  %v3767 = vld [vmem:[%s3765 + $0x4] sm:$0xf]
  %v3768 = vld [vmem:[%s3765 + $0x8] sm:$0xf]
  %v3769 = vld [vmem:[%s3765 + $0xc] sm:$0xf]
  %v3770 = vld [vmem:[%s3765 + $0x10] sm:$0xf]
  %v3771 = vld [vmem:[%s3765 + $0x14] sm:$0xf]
  %v3772 = vld [vmem:[%s3765 + $0x18] sm:$0xf]
  %v3773 = vld [vmem:[%s3765 + $0x1c] sm:$0xf]
  %v3774 = vld [vmem:[%s3765 + $0x20] sm:$0xf]
  %v3775 = vld [vmem:[%s3765 + $0x24] sm:$0xf]
  %v3776 = vld [vmem:[%s3765 + $0x28] sm:$0xf]
  %v3777 = vld [vmem:[%s3765 + $0x2c] sm:$0xf]
  %v3778 = vld [vmem:[%s3765 + $0x30] sm:$0xf]
  %v3779 = vld [vmem:[%s3765 + $0x34] sm:$0xf]
  %v3780 = vld [vmem:[%s3765 + $0x38] sm:$0xf]
  %v3781 = vld [vmem:[%s3765 + $0x3c] sm:$0xf]
  %v3798 = vunpack.c.l.b16 %v3749
  %v3799 = vunpack.c.l.b16 %v3750
  %v3800 = vunpack.c.l.b16 %v3751
  %v3801 = vunpack.c.l.b16 %v3752
  %v3802 = vunpack.c.l.b16 %v3753
  %v3803 = vunpack.c.l.b16 %v3754
  %v3804 = vunpack.c.l.b16 %v3755
  %v3805 = vunpack.c.l.b16 %v3756
  %v3806 = vunpack.c.l.b16 %v3757
  %v3807 = vunpack.c.l.b16 %v3758
  %v3808 = vunpack.c.l.b16 %v3759
  %v3809 = vunpack.c.l.b16 %v3760
  %v3810 = vunpack.c.l.b16 %v3761
  %v3811 = vunpack.c.l.b16 %v3762
  %v3812 = vunpack.c.l.b16 %v3763
  %v3813 = vunpack.c.l.b16 %v3764
  %v3814 = vpack.c.b16 %v3799, %v3798
  %v3815 = vpack.c.b16 %v3801, %v3800
  %v3816 = vpack.c.b16 %v3803, %v3802
  %v3817 = vpack.c.b16 %v3805, %v3804
  %v3818 = vpack.c.b16 %v3807, %v3806
  %v3819 = vpack.c.b16 %v3809, %v3808
  %v3820 = vpack.c.b16 %v3811, %v3810
  %v3821 = vpack.c.b16 %v3813, %v3812
  %v3846 = vunpack.c.l.b16 %v3766
  %v3847 = vunpack.c.l.b16 %v3767
  %v3848 = vunpack.c.l.b16 %v3768
  %v3849 = vunpack.c.l.b16 %v3769
  %v3850 = vunpack.c.l.b16 %v3770
  %v3851 = vunpack.c.l.b16 %v3771
  %v3852 = vunpack.c.l.b16 %v3772
  %v3853 = vunpack.c.l.b16 %v3773
  %v3854 = vunpack.c.l.b16 %v3774
  %v3855 = vunpack.c.l.b16 %v3775
  %v3856 = vunpack.c.l.b16 %v3776
  %v3857 = vunpack.c.l.b16 %v3777
  %v3858 = vunpack.c.l.b16 %v3778
  %v3859 = vunpack.c.l.b16 %v3779
  %v3860 = vunpack.c.l.b16 %v3780
  %v3861 = vunpack.c.l.b16 %v3781
  %v3862 = vpack.c.b16 %v3847, %v3846
  %v3863 = vpack.c.b16 %v3849, %v3848
  %v3864 = vpack.c.b16 %v3851, %v3850
  %v3865 = vpack.c.b16 %v3853, %v3852
  %v3866 = vpack.c.b16 %v3855, %v3854
  %v3867 = vpack.c.b16 %v3857, %v3856
  %v3868 = vpack.c.b16 %v3859, %v3858
  %v3869 = vpack.c.b16 %v3861, %v3860
  %3878 = vmatprep.subr.bf16.mxu0 0
  %3879 = vmatpush1.bf16.msra.mxu0 %v3869
  %3880 = vmatprep.subr.bf16.mxu0 0
  %3881 = vmatpush1.bf16.msra.mxu0 %v3868
  %3882 = vmatprep.subr.bf16.mxu0 0
  %3883 = vmatpush1.bf16.msra.mxu0 %v3867
  %3884 = vmatprep.subr.bf16.mxu0 0
  %3885 = vmatpush1.bf16.msra.mxu0 %v3866
  %3886 = vmatprep.subr.bf16.mxu0 0
  %3887 = vmatpush1.bf16.msra.mxu0 %v3865
  %3888 = vmatprep.subr.bf16.mxu0 0
  %3889 = vmatpush1.bf16.msra.mxu0 %v3864
  %3890 = vmatprep.subr.bf16.mxu0 0
  %3891 = vmatpush1.bf16.msra.mxu0 %v3863
  %3892 = vmatprep.subr.bf16.mxu0 0
  %3893 = vmatpush1.bf16.msra.mxu0 %v3862
  %3894 = vmatprep.subr.bf16.mxu0 0
  %3895 = vmatpush2.bf16.msra.mxu0 0
  %3896 = vmatprep.subr.bf16.mxu0 0
  %3897 = vmatpush2.bf16.msra.mxu0 0
  %3898 = vmatprep.subr.bf16.mxu0 0
  %3899 = vmatpush2.bf16.msra.mxu0 0
  %3900 = vmatprep.subr.bf16.mxu0 0
  %3901 = vmatpush2.bf16.msra.mxu0 0
  %3902 = vmatprep.subr.bf16.mxu0 0
  %3903 = vmatpush2.bf16.msra.mxu0 0
  %3904 = vmatprep.subr.bf16.mxu0 0
  %3905 = vmatpush2.bf16.msra.mxu0 0
  %3906 = vmatprep.subr.bf16.mxu0 0
  %3907 = vmatpush2.bf16.msra.mxu0 0
  %3908 = vmatprep.subr.bf16.mxu0 0
  %3909 = vmatpush2.bf16.msra.mxu0 0
  %3910 = vmatprep.mubr.bf16.mxu0 0
  %3911 = vmatmul.mubr.bf16.gmra.mxu0 %v3814
  %v3912 = vpop.f32.mrf.mxu0
  %v3913 = vadd.f32 0.0, %v3912
  %v3914 = vpop.f32.mrf.mxu0
  %v3915 = vpop.f32.mrf.mxu0
  %v3916 = vadd.f32 0.0, %v3915
  %v3917 = vpop.f32.mrf.mxu0
  %3918 = vmatprep.mubr.bf16.mxu0 0
  %3919 = vmatmul.mubr.bf16.gmra.mxu0 %v3815
  %v3920 = vpop.f32.mrf.mxu0
  %v3921 = vadd.f32 0.0, %v3920
  %v3922 = vpop.f32.mrf.mxu0
  %v3923 = vpop.f32.mrf.mxu0
  %v3924 = vadd.f32 0.0, %v3923
  %v3925 = vpop.f32.mrf.mxu0
  %3926 = vmatprep.mubr.bf16.mxu0 0
  %3927 = vmatmul.mubr.bf16.gmra.mxu0 %v3816
  %v3928 = vpop.f32.mrf.mxu0
  %v3929 = vadd.f32 0.0, %v3928
  %v3930 = vpop.f32.mrf.mxu0
  %v3931 = vpop.f32.mrf.mxu0
  %v3932 = vadd.f32 0.0, %v3931
  %v3933 = vpop.f32.mrf.mxu0
  %3934 = vmatprep.mubr.bf16.mxu0 0
  %3935 = vmatmul.mubr.bf16.gmra.mxu0 %v3817
  %v3936 = vpop.f32.mrf.mxu0
  %v3937 = vadd.f32 0.0, %v3936
  %v3938 = vpop.f32.mrf.mxu0
  %v3939 = vpop.f32.mrf.mxu0
  %v3940 = vadd.f32 0.0, %v3939
  %v3941 = vpop.f32.mrf.mxu0
  %3942 = vmatprep.mubr.bf16.mxu0 0
  %3943 = vmatmul.mubr.bf16.gmra.mxu0 %v3818
  %v3944 = vpop.f32.mrf.mxu0
  %v3945 = vadd.f32 0.0, %v3944
  %v3946 = vpop.f32.mrf.mxu0
  %v3947 = vpop.f32.mrf.mxu0
  %v3948 = vadd.f32 0.0, %v3947
  %v3949 = vpop.f32.mrf.mxu0
  %3950 = vmatprep.mubr.bf16.mxu0 0
  %3951 = vmatmul.mubr.bf16.gmra.mxu0 %v3819
  %v3952 = vpop.f32.mrf.mxu0
  %v3953 = vadd.f32 0.0, %v3952
  %v3954 = vpop.f32.mrf.mxu0
  %v3955 = vpop.f32.mrf.mxu0
  %v3956 = vadd.f32 0.0, %v3955
  %v3957 = vpop.f32.mrf.mxu0
  %3958 = vmatprep.mubr.bf16.mxu0 0
  %3959 = vmatmul.mubr.bf16.gmra.mxu0 %v3820
  %v3960 = vpop.f32.mrf.mxu0
  %v3961 = vadd.f32 0.0, %v3960
  %v3962 = vpop.f32.mrf.mxu0
  %v3963 = vpop.f32.mrf.mxu0
  %v3964 = vadd.f32 0.0, %v3963
  %v3965 = vpop.f32.mrf.mxu0
  %3966 = vmatprep.mubr.bf16.mxu0 0
  %3967 = vmatmul.mubr.bf16.gmra.mxu0 %v3821
  %v3968 = vpop.f32.mrf.mxu0
  %v3969 = vadd.f32 0.0, %v3968
  %v3970 = vpop.f32.mrf.mxu0
  %v3971 = vpop.f32.mrf.mxu0
  %v3972 = vadd.f32 0.0, %v3971
  %v3973 = vpop.f32.mrf.mxu0
  %3974 = vdwg.mxu0
  %v3975 = vadd.f32 %v3733, %v3913
  %v3976 = vadd.f32 %v3734, %v3916
  %v3977 = vadd.f32 %v3735, %v3921
  %v3978 = vadd.f32 %v3736, %v3924
  %v3979 = vadd.f32 %v3737, %v3929
  %v3980 = vadd.f32 %v3738, %v3932
  %v3981 = vadd.f32 %v3739, %v3937
  %v3982 = vadd.f32 %v3740, %v3940
  %v3983 = vadd.f32 %v3741, %v3945
  %v3984 = vadd.f32 %v3742, %v3948
  %v3985 = vadd.f32 %v3743, %v3953
  %v3986 = vadd.f32 %v3744, %v3956
  %v3987 = vadd.f32 %v3745, %v3961
  %v3988 = vadd.f32 %v3746, %v3964
  %v3989 = vadd.f32 %v3747, %v3969
  %v3990 = vadd.f32 %v3748, %v3972
  %3991 = vst [vmem:[#allocation2] sm:$0xff] %v3975
  %3992 = vst [vmem:[#allocation2 + $0x8] sm:$0xff] %v3976
  %3993 = vst [vmem:[#allocation2 + $0x10] sm:$0xff] %v3977
  %3994 = vst [vmem:[#allocation2 + $0x18] sm:$0xff] %v3978
  %3995 = vst [vmem:[#allocation2 + $0x20] sm:$0xff] %v3979
  %3996 = vst [vmem:[#allocation2 + $0x28] sm:$0xff] %v3980
  %3997 = vst [vmem:[#allocation2 + $0x30] sm:$0xff] %v3981
  %3998 = vst [vmem:[#allocation2 + $0x38] sm:$0xff] %v3982
  %3999 = vst [vmem:[#allocation2 + $0x40] sm:$0xff] %v3983
  %4000 = vst [vmem:[#allocation2 + $0x48] sm:$0xff] %v3984
  %4001 = vst [vmem:[#allocation2 + $0x50] sm:$0xff] %v3985
  %4002 = vst [vmem:[#allocation2 + $0x58] sm:$0xff] %v3986
  %4003 = vst [vmem:[#allocation2 + $0x60] sm:$0xff] %v3987
  %4004 = vst [vmem:[#allocation2 + $0x68] sm:$0xff] %v3988
  %4005 = vst [vmem:[#allocation2 + $0x70] sm:$0xff] %v3989
  %4006 = vst [vmem:[#allocation2 + $0x78] sm:$0xff] %v3990
  %v4007 = vld [vmem:[%s2815 + $0x1] sm:$0xff]
  %v4008 = vld [vmem:[%s2815 + $0x11] sm:$0xff]
  %v4009 = vld [vmem:[%s2815 + $0x21] sm:$0xff]
  %v4010 = vld [vmem:[%s2815 + $0x31] sm:$0xff]
  %v4011 = vld [vmem:[%s2815 + $0x41] sm:$0xff]
  %v4012 = vld [vmem:[%s2815 + $0x51] sm:$0xff]
  %v4013 = vld [vmem:[%s2815 + $0x61] sm:$0xff]
  %v4014 = vld [vmem:[%s2815 + $0x71] sm:$0xff]
  %v4015 = vld [vmem:[%s2815 + $0xa1] sm:$0xff]
  %v4016 = vld [vmem:[%s2815 + $0xb1] sm:$0xff]
  %v4017 = vld [vmem:[%s2815 + $0xc1] sm:$0xff]
  %v4018 = vld [vmem:[%s2815 + $0xd1] sm:$0xff]
  %v4019 = vld [vmem:[%s2815 + $0xe1] sm:$0xff]
  %v4020 = vld [vmem:[%s2815 + $0xf1] sm:$0xff]
  %v4021 = vld [vmem:[%s2815 + $0x101] sm:$0xff]
  %v4022 = vld [vmem:[%s2815 + $0x111] sm:$0xff]
  %v4023 = vld [vmem:[#allocation2] sm:$0xff]
  %v4024 = vld [vmem:[#allocation2 + $0x8] sm:$0xff]
  %v4025 = vld [vmem:[#allocation2 + $0x10] sm:$0xff]
  %v4026 = vld [vmem:[#allocation2 + $0x18] sm:$0xff]
  %v4027 = vld [vmem:[#allocation2 + $0x20] sm:$0xff]
  %v4028 = vld [vmem:[#allocation2 + $0x28] sm:$0xff]
  %v4029 = vld [vmem:[#allocation2 + $0x30] sm:$0xff]
  %v4030 = vld [vmem:[#allocation2 + $0x38] sm:$0xff]
  %v4031 = vld [vmem:[#allocation2 + $0x40] sm:$0xff]
  %v4032 = vld [vmem:[#allocation2 + $0x48] sm:$0xff]
  %v4033 = vld [vmem:[#allocation2 + $0x50] sm:$0xff]
  %v4034 = vld [vmem:[#allocation2 + $0x58] sm:$0xff]
  %v4035 = vld [vmem:[#allocation2 + $0x60] sm:$0xff]
  %v4036 = vld [vmem:[#allocation2 + $0x68] sm:$0xff]
  %v4037 = vld [vmem:[#allocation2 + $0x70] sm:$0xff]
  %v4038 = vld [vmem:[#allocation2 + $0x78] sm:$0xff]
  %v4039 = vpack.c.bf16 %v4007, %v4007
  %v4040 = vpack.c.bf16 %v4008, %v4008
  %v4041 = vpack.c.bf16 %v4009, %v4009
  %v4042 = vpack.c.bf16 %v4010, %v4010
  %v4043 = vpack.c.bf16 %v4011, %v4011
  %v4044 = vpack.c.bf16 %v4012, %v4012
  %v4045 = vpack.c.bf16 %v4013, %v4013
  %v4046 = vpack.c.bf16 %v4014, %v4014
  %v4047 = vpack.c.bf16 %v4015, %v4015
  %v4048 = vpack.c.bf16 %v4016, %v4016
  %v4049 = vpack.c.bf16 %v4017, %v4017
  %v4050 = vpack.c.bf16 %v4018, %v4018
  %v4051 = vpack.c.bf16 %v4019, %v4019
  %v4052 = vpack.c.bf16 %v4020, %v4020
  %v4053 = vpack.c.bf16 %v4021, %v4021
  %v4054 = vpack.c.bf16 %v4022, %v4022
  %s4055 = scalar_lea.vmem %s2, 256
  %v4056 = vld [vmem:[%s4055] sm:$0xf]
  %v4057 = vld [vmem:[%s4055 + $0x4] sm:$0xf]
  %v4058 = vld [vmem:[%s4055 + $0x8] sm:$0xf]
  %v4059 = vld [vmem:[%s4055 + $0xc] sm:$0xf]
  %v4060 = vld [vmem:[%s4055 + $0x10] sm:$0xf]
  %v4061 = vld [vmem:[%s4055 + $0x14] sm:$0xf]
  %v4062 = vld [vmem:[%s4055 + $0x18] sm:$0xf]
  %v4063 = vld [vmem:[%s4055 + $0x1c] sm:$0xf]
  %v4064 = vld [vmem:[%s4055 + $0x20] sm:$0xf]
  %v4065 = vld [vmem:[%s4055 + $0x24] sm:$0xf]
  %v4066 = vld [vmem:[%s4055 + $0x28] sm:$0xf]
  %v4067 = vld [vmem:[%s4055 + $0x2c] sm:$0xf]
  %v4068 = vld [vmem:[%s4055 + $0x30] sm:$0xf]
  %v4069 = vld [vmem:[%s4055 + $0x34] sm:$0xf]
  %v4070 = vld [vmem:[%s4055 + $0x38] sm:$0xf]
  %v4071 = vld [vmem:[%s4055 + $0x3c] sm:$0xf]
  %v4088 = vunpack.c.l.b16 %v4039
  %v4089 = vunpack.c.l.b16 %v4040
  %v4090 = vunpack.c.l.b16 %v4041
  %v4091 = vunpack.c.l.b16 %v4042
  %v4092 = vunpack.c.l.b16 %v4043
  %v4093 = vunpack.c.l.b16 %v4044
  %v4094 = vunpack.c.l.b16 %v4045
  %v4095 = vunpack.c.l.b16 %v4046
  %v4096 = vunpack.c.l.b16 %v4047
  %v4097 = vunpack.c.l.b16 %v4048
  %v4098 = vunpack.c.l.b16 %v4049
  %v4099 = vunpack.c.l.b16 %v4050
  %v4100 = vunpack.c.l.b16 %v4051
  %v4101 = vunpack.c.l.b16 %v4052
  %v4102 = vunpack.c.l.b16 %v4053
  %v4103 = vunpack.c.l.b16 %v4054
  %v4104 = vpack.c.b16 %v4089, %v4088
  %v4105 = vpack.c.b16 %v4091, %v4090
  %v4106 = vpack.c.b16 %v4093, %v4092
  %v4107 = vpack.c.b16 %v4095, %v4094
  %v4108 = vpack.c.b16 %v4097, %v4096
  %v4109 = vpack.c.b16 %v4099, %v4098
  %v4110 = vpack.c.b16 %v4101, %v4100
  %v4111 = vpack.c.b16 %v4103, %v4102
  %v4136 = vunpack.c.l.b16 %v4056
  %v4137 = vunpack.c.l.b16 %v4057
  %v4138 = vunpack.c.l.b16 %v4058
  %v4139 = vunpack.c.l.b16 %v4059
  %v4140 = vunpack.c.l.b16 %v4060
  %v4141 = vunpack.c.l.b16 %v4061
  %v4142 = vunpack.c.l.b16 %v4062
  %v4143 = vunpack.c.l.b16 %v4063
  %v4144 = vunpack.c.l.b16 %v4064
  %v4145 = vunpack.c.l.b16 %v4065
  %v4146 = vunpack.c.l.b16 %v4066
  %v4147 = vunpack.c.l.b16 %v4067
  %v4148 = vunpack.c.l.b16 %v4068
  %v4149 = vunpack.c.l.b16 %v4069
  %v4150 = vunpack.c.l.b16 %v4070
  %v4151 = vunpack.c.l.b16 %v4071
  %v4152 = vpack.c.b16 %v4137, %v4136
  %v4153 = vpack.c.b16 %v4139, %v4138
  %v4154 = vpack.c.b16 %v4141, %v4140
  %v4155 = vpack.c.b16 %v4143, %v4142
  %v4156 = vpack.c.b16 %v4145, %v4144
  %v4157 = vpack.c.b16 %v4147, %v4146
  %v4158 = vpack.c.b16 %v4149, %v4148
  %v4159 = vpack.c.b16 %v4151, %v4150
  %4168 = vmatprep.subr.bf16.mxu0 0
  %4169 = vmatpush1.bf16.msra.mxu0 %v4159
  %4170 = vmatprep.subr.bf16.mxu0 0
  %4171 = vmatpush1.bf16.msra.mxu0 %v4158
  %4172 = vmatprep.subr.bf16.mxu0 0
  %4173 = vmatpush1.bf16.msra.mxu0 %v4157
  %4174 = vmatprep.subr.bf16.mxu0 0
  %4175 = vmatpush1.bf16.msra.mxu0 %v4156
  %4176 = vmatprep.subr.bf16.mxu0 0
  %4177 = vmatpush1.bf16.msra.mxu0 %v4155
  %4178 = vmatprep.subr.bf16.mxu0 0
  %4179 = vmatpush1.bf16.msra.mxu0 %v4154
  %4180 = vmatprep.subr.bf16.mxu0 0
  %4181 = vmatpush1.bf16.msra.mxu0 %v4153
  %4182 = vmatprep.subr.bf16.mxu0 0
  %4183 = vmatpush1.bf16.msra.mxu0 %v4152
  %4184 = vmatprep.subr.bf16.mxu0 0
  %4185 = vmatpush2.bf16.msra.mxu0 0
  %4186 = vmatprep.subr.bf16.mxu0 0
  %4187 = vmatpush2.bf16.msra.mxu0 0
  %4188 = vmatprep.subr.bf16.mxu0 0
  %4189 = vmatpush2.bf16.msra.mxu0 0
  %4190 = vmatprep.subr.bf16.mxu0 0
  %4191 = vmatpush2.bf16.msra.mxu0 0
  %4192 = vmatprep.subr.bf16.mxu0 0
  %4193 = vmatpush2.bf16.msra.mxu0 0
  %4194 = vmatprep.subr.bf16.mxu0 0
  %4195 = vmatpush2.bf16.msra.mxu0 0
  %4196 = vmatprep.subr.bf16.mxu0 0
  %4197 = vmatpush2.bf16.msra.mxu0 0
  %4198 = vmatprep.subr.bf16.mxu0 0
  %4199 = vmatpush2.bf16.msra.mxu0 0
  %4200 = vmatprep.mubr.bf16.mxu0 0
  %4201 = vmatmul.mubr.bf16.gmra.mxu0 %v4104
  %v4202 = vpop.f32.mrf.mxu0
  %v4203 = vadd.f32 0.0, %v4202
  %v4204 = vpop.f32.mrf.mxu0
  %v4205 = vpop.f32.mrf.mxu0
  %v4206 = vadd.f32 0.0, %v4205
  %v4207 = vpop.f32.mrf.mxu0
  %4208 = vmatprep.mubr.bf16.mxu0 0
  %4209 = vmatmul.mubr.bf16.gmra.mxu0 %v4105
  %v4210 = vpop.f32.mrf.mxu0
  %v4211 = vadd.f32 0.0, %v4210
  %v4212 = vpop.f32.mrf.mxu0
  %v4213 = vpop.f32.mrf.mxu0
  %v4214 = vadd.f32 0.0, %v4213
  %v4215 = vpop.f32.mrf.mxu0
  %4216 = vmatprep.mubr.bf16.mxu0 0
  %4217 = vmatmul.mubr.bf16.gmra.mxu0 %v4106
  %v4218 = vpop.f32.mrf.mxu0
  %v4219 = vadd.f32 0.0, %v4218
  %v4220 = vpop.f32.mrf.mxu0
  %v4221 = vpop.f32.mrf.mxu0
  %v4222 = vadd.f32 0.0, %v4221
  %v4223 = vpop.f32.mrf.mxu0
  %4224 = vmatprep.mubr.bf16.mxu0 0
  %4225 = vmatmul.mubr.bf16.gmra.mxu0 %v4107
  %v4226 = vpop.f32.mrf.mxu0
  %v4227 = vadd.f32 0.0, %v4226
  %v4228 = vpop.f32.mrf.mxu0
  %v4229 = vpop.f32.mrf.mxu0
  %v4230 = vadd.f32 0.0, %v4229
  %v4231 = vpop.f32.mrf.mxu0
  %4232 = vmatprep.mubr.bf16.mxu0 0
  %4233 = vmatmul.mubr.bf16.gmra.mxu0 %v4108
  %v4234 = vpop.f32.mrf.mxu0
  %v4235 = vadd.f32 0.0, %v4234
  %v4236 = vpop.f32.mrf.mxu0
  %v4237 = vpop.f32.mrf.mxu0
  %v4238 = vadd.f32 0.0, %v4237
  %v4239 = vpop.f32.mrf.mxu0
  %4240 = vmatprep.mubr.bf16.mxu0 0
  %4241 = vmatmul.mubr.bf16.gmra.mxu0 %v4109
  %v4242 = vpop.f32.mrf.mxu0
  %v4243 = vadd.f32 0.0, %v4242
  %v4244 = vpop.f32.mrf.mxu0
  %v4245 = vpop.f32.mrf.mxu0
  %v4246 = vadd.f32 0.0, %v4245
  %v4247 = vpop.f32.mrf.mxu0
  %4248 = vmatprep.mubr.bf16.mxu0 0
  %4249 = vmatmul.mubr.bf16.gmra.mxu0 %v4110
  %v4250 = vpop.f32.mrf.mxu0
  %v4251 = vadd.f32 0.0, %v4250
  %v4252 = vpop.f32.mrf.mxu0
  %v4253 = vpop.f32.mrf.mxu0
  %v4254 = vadd.f32 0.0, %v4253
  %v4255 = vpop.f32.mrf.mxu0
  %4256 = vmatprep.mubr.bf16.mxu0 0
  %4257 = vmatmul.mubr.bf16.gmra.mxu0 %v4111
  %v4258 = vpop.f32.mrf.mxu0
  %v4259 = vadd.f32 0.0, %v4258
  %v4260 = vpop.f32.mrf.mxu0
  %v4261 = vpop.f32.mrf.mxu0
  %v4262 = vadd.f32 0.0, %v4261
  %v4263 = vpop.f32.mrf.mxu0
  %4264 = vdwg.mxu0
  %v4265 = vadd.f32 %v4023, %v4203
  %v4266 = vadd.f32 %v4024, %v4206
  %v4267 = vadd.f32 %v4025, %v4211
  %v4268 = vadd.f32 %v4026, %v4214
  %v4269 = vadd.f32 %v4027, %v4219
  %v4270 = vadd.f32 %v4028, %v4222
  %v4271 = vadd.f32 %v4029, %v4227
  %v4272 = vadd.f32 %v4030, %v4230
  %v4273 = vadd.f32 %v4031, %v4235
  %v4274 = vadd.f32 %v4032, %v4238
  %v4275 = vadd.f32 %v4033, %v4243
  %v4276 = vadd.f32 %v4034, %v4246
  %v4277 = vadd.f32 %v4035, %v4251
  %v4278 = vadd.f32 %v4036, %v4254
  %v4279 = vadd.f32 %v4037, %v4259
  %v4280 = vadd.f32 %v4038, %v4262
  %4281 = vst [vmem:[#allocation2] sm:$0xff] %v4265
  %4282 = vst [vmem:[#allocation2 + $0x8] sm:$0xff] %v4266
  %4283 = vst [vmem:[#allocation2 + $0x10] sm:$0xff] %v4267
  %4284 = vst [vmem:[#allocation2 + $0x18] sm:$0xff] %v4268
  %4285 = vst [vmem:[#allocation2 + $0x20] sm:$0xff] %v4269
  %4286 = vst [vmem:[#allocation2 + $0x28] sm:$0xff] %v4270
  %4287 = vst [vmem:[#allocation2 + $0x30] sm:$0xff] %v4271
  %4288 = vst [vmem:[#allocation2 + $0x38] sm:$0xff] %v4272
  %4289 = vst [vmem:[#allocation2 + $0x40] sm:$0xff] %v4273
  %4290 = vst [vmem:[#allocation2 + $0x48] sm:$0xff] %v4274
  %4291 = vst [vmem:[#allocation2 + $0x50] sm:$0xff] %v4275
  %4292 = vst [vmem:[#allocation2 + $0x58] sm:$0xff] %v4276
  %4293 = vst [vmem:[#allocation2 + $0x60] sm:$0xff] %v4277
  %4294 = vst [vmem:[#allocation2 + $0x68] sm:$0xff] %v4278
  %4295 = vst [vmem:[#allocation2 + $0x70] sm:$0xff] %v4279
  %4296 = vst [vmem:[#allocation2 + $0x78] sm:$0xff] %v4280
  %v4297 = vld [vmem:[%s2815 + $0x2] sm:$0xff]
  %v4298 = vld [vmem:[%s2815 + $0x12] sm:$0xff]
  %v4299 = vld [vmem:[%s2815 + $0x22] sm:$0xff]
  %v4300 = vld [vmem:[%s2815 + $0x32] sm:$0xff]
  %v4301 = vld [vmem:[%s2815 + $0x42] sm:$0xff]
  %v4302 = vld [vmem:[%s2815 + $0x52] sm:$0xff]
  %v4303 = vld [vmem:[%s2815 + $0x62] sm:$0xff]
  %v4304 = vld [vmem:[%s2815 + $0x72] sm:$0xff]
  %v4305 = vld [vmem:[%s2815 + $0xa2] sm:$0xff]
  %v4306 = vld [vmem:[%s2815 + $0xb2] sm:$0xff]
  %v4307 = vld [vmem:[%s2815 + $0xc2] sm:$0xff]
  %v4308 = vld [vmem:[%s2815 + $0xd2] sm:$0xff]
  %v4309 = vld [vmem:[%s2815 + $0xe2] sm:$0xff]
  %v4310 = vld [vmem:[%s2815 + $0xf2] sm:$0xff]
  %v4311 = vld [vmem:[%s2815 + $0x102] sm:$0xff]
  %v4312 = vld [vmem:[%s2815 + $0x112] sm:$0xff]
  %v4313 = vld [vmem:[#allocation2] sm:$0xff]
  %v4314 = vld [vmem:[#allocation2 + $0x8] sm:$0xff]
  %v4315 = vld [vmem:[#allocation2 + $0x10] sm:$0xff]
  %v4316 = vld [vmem:[#allocation2 + $0x18] sm:$0xff]
  %v4317 = vld [vmem:[#allocation2 + $0x20] sm:$0xff]
  %v4318 = vld [vmem:[#allocation2 + $0x28] sm:$0xff]
  %v4319 = vld [vmem:[#allocation2 + $0x30] sm:$0xff]
  %v4320 = vld [vmem:[#allocation2 + $0x38] sm:$0xff]
  %v4321 = vld [vmem:[#allocation2 + $0x40] sm:$0xff]
  %v4322 = vld [vmem:[#allocation2 + $0x48] sm:$0xff]
  %v4323 = vld [vmem:[#allocation2 + $0x50] sm:$0xff]
  %v4324 = vld [vmem:[#allocation2 + $0x58] sm:$0xff]
  %v4325 = vld [vmem:[#allocation2 + $0x60] sm:$0xff]
  %v4326 = vld [vmem:[#allocation2 + $0x68] sm:$0xff]
  %v4327 = vld [vmem:[#allocation2 + $0x70] sm:$0xff]
  %v4328 = vld [vmem:[#allocation2 + $0x78] sm:$0xff]
  %v4329 = vpack.c.bf16 %v4297, %v4297
  %v4330 = vpack.c.bf16 %v4298, %v4298
  %v4331 = vpack.c.bf16 %v4299, %v4299
  %v4332 = vpack.c.bf16 %v4300, %v4300
  %v4333 = vpack.c.bf16 %v4301, %v4301
  %v4334 = vpack.c.bf16 %v4302, %v4302
  %v4335 = vpack.c.bf16 %v4303, %v4303
  %v4336 = vpack.c.bf16 %v4304, %v4304
  %v4337 = vpack.c.bf16 %v4305, %v4305
  %v4338 = vpack.c.bf16 %v4306, %v4306
  %v4339 = vpack.c.bf16 %v4307, %v4307
  %v4340 = vpack.c.bf16 %v4308, %v4308
  %v4341 = vpack.c.bf16 %v4309, %v4309
  %v4342 = vpack.c.bf16 %v4310, %v4310
  %v4343 = vpack.c.bf16 %v4311, %v4311
  %v4344 = vpack.c.bf16 %v4312, %v4312
  %s4345 = scalar_lea.vmem %s2, 320
  %v4346 = vld [vmem:[%s4345] sm:$0xf]
  %v4347 = vld [vmem:[%s4345 + $0x4] sm:$0xf]
  %v4348 = vld [vmem:[%s4345 + $0x8] sm:$0xf]
  %v4349 = vld [vmem:[%s4345 + $0xc] sm:$0xf]
  %v4350 = vld [vmem:[%s4345 + $0x10] sm:$0xf]
  %v4351 = vld [vmem:[%s4345 + $0x14] sm:$0xf]
  %v4352 = vld [vmem:[%s4345 + $0x18] sm:$0xf]
  %v4353 = vld [vmem:[%s4345 + $0x1c] sm:$0xf]
  %v4354 = vld [vmem:[%s4345 + $0x20] sm:$0xf]
  %v4355 = vld [vmem:[%s4345 + $0x24] sm:$0xf]
  %v4356 = vld [vmem:[%s4345 + $0x28] sm:$0xf]
  %v4357 = vld [vmem:[%s4345 + $0x2c] sm:$0xf]
  %v4358 = vld [vmem:[%s4345 + $0x30] sm:$0xf]
  %v4359 = vld [vmem:[%s4345 + $0x34] sm:$0xf]
  %v4360 = vld [vmem:[%s4345 + $0x38] sm:$0xf]
  %v4361 = vld [vmem:[%s4345 + $0x3c] sm:$0xf]
  %v4378 = vunpack.c.l.b16 %v4329
  %v4379 = vunpack.c.l.b16 %v4330
  %v4380 = vunpack.c.l.b16 %v4331
  %v4381 = vunpack.c.l.b16 %v4332
  %v4382 = vunpack.c.l.b16 %v4333
  %v4383 = vunpack.c.l.b16 %v4334
  %v4384 = vunpack.c.l.b16 %v4335
  %v4385 = vunpack.c.l.b16 %v4336
  %v4386 = vunpack.c.l.b16 %v4337
  %v4387 = vunpack.c.l.b16 %v4338
  %v4388 = vunpack.c.l.b16 %v4339
  %v4389 = vunpack.c.l.b16 %v4340
  %v4390 = vunpack.c.l.b16 %v4341
  %v4391 = vunpack.c.l.b16 %v4342
  %v4392 = vunpack.c.l.b16 %v4343
  %v4393 = vunpack.c.l.b16 %v4344
  %v4394 = vpack.c.b16 %v4379, %v4378
  %v4395 = vpack.c.b16 %v4381, %v4380
  %v4396 = vpack.c.b16 %v4383, %v4382
  %v4397 = vpack.c.b16 %v4385, %v4384
  %v4398 = vpack.c.b16 %v4387, %v4386
  %v4399 = vpack.c.b16 %v4389, %v4388
  %v4400 = vpack.c.b16 %v4391, %v4390
  %v4401 = vpack.c.b16 %v4393, %v4392
  %v4426 = vunpack.c.l.b16 %v4346
  %v4427 = vunpack.c.l.b16 %v4347
  %v4428 = vunpack.c.l.b16 %v4348
  %v4429 = vunpack.c.l.b16 %v4349
  %v4430 = vunpack.c.l.b16 %v4350
  %v4431 = vunpack.c.l.b16 %v4351
  %v4432 = vunpack.c.l.b16 %v4352
  %v4433 = vunpack.c.l.b16 %v4353
  %v4434 = vunpack.c.l.b16 %v4354
  %v4435 = vunpack.c.l.b16 %v4355
  %v4436 = vunpack.c.l.b16 %v4356
  %v4437 = vunpack.c.l.b16 %v4357
  %v4438 = vunpack.c.l.b16 %v4358
  %v4439 = vunpack.c.l.b16 %v4359
  %v4440 = vunpack.c.l.b16 %v4360
  %v4441 = vunpack.c.l.b16 %v4361
  %v4442 = vpack.c.b16 %v4427, %v4426
  %v4443 = vpack.c.b16 %v4429, %v4428
  %v4444 = vpack.c.b16 %v4431, %v4430
  %v4445 = vpack.c.b16 %v4433, %v4432
  %v4446 = vpack.c.b16 %v4435, %v4434
  %v4447 = vpack.c.b16 %v4437, %v4436
  %v4448 = vpack.c.b16 %v4439, %v4438
  %v4449 = vpack.c.b16 %v4441, %v4440
  %4458 = vmatprep.subr.bf16.mxu0 0
  %4459 = vmatpush1.bf16.msra.mxu0 %v4449
  %4460 = vmatprep.subr.bf16.mxu0 0
  %4461 = vmatpush1.bf16.msra.mxu0 %v4448
  %4462 = vmatprep.subr.bf16.mxu0 0
  %4463 = vmatpush1.bf16.msra.mxu0 %v4447
  %4464 = vmatprep.subr.bf16.mxu0 0
  %4465 = vmatpush1.bf16.msra.mxu0 %v4446
  %4466 = vmatprep.subr.bf16.mxu0 0
  %4467 = vmatpush1.bf16.msra.mxu0 %v4445
  %4468 = vmatprep.subr.bf16.mxu0 0
  %4469 = vmatpush1.bf16.msra.mxu0 %v4444
  %4470 = vmatprep.subr.bf16.mxu0 0
  %4471 = vmatpush1.bf16.msra.mxu0 %v4443
  %4472 = vmatprep.subr.bf16.mxu0 0
  %4473 = vmatpush1.bf16.msra.mxu0 %v4442
  %4474 = vmatprep.subr.bf16.mxu0 0
  %4475 = vmatpush2.bf16.msra.mxu0 0
  %4476 = vmatprep.subr.bf16.mxu0 0
  %4477 = vmatpush2.bf16.msra.mxu0 0
  %4478 = vmatprep.subr.bf16.mxu0 0
  %4479 = vmatpush2.bf16.msra.mxu0 0
  %4480 = vmatprep.subr.bf16.mxu0 0
  %4481 = vmatpush2.bf16.msra.mxu0 0
  %4482 = vmatprep.subr.bf16.mxu0 0
  %4483 = vmatpush2.bf16.msra.mxu0 0
  %4484 = vmatprep.subr.bf16.mxu0 0
  %4485 = vmatpush2.bf16.msra.mxu0 0
  %4486 = vmatprep.subr.bf16.mxu0 0
  %4487 = vmatpush2.bf16.msra.mxu0 0
  %4488 = vmatprep.subr.bf16.mxu0 0
  %4489 = vmatpush2.bf16.msra.mxu0 0
  %4490 = vmatprep.mubr.bf16.mxu0 0
  %4491 = vmatmul.mubr.bf16.gmra.mxu0 %v4394
  %v4492 = vpop.f32.mrf.mxu0
  %v4493 = vadd.f32 0.0, %v4492
  %v4494 = vpop.f32.mrf.mxu0
  %v4495 = vpop.f32.mrf.mxu0
  %v4496 = vadd.f32 0.0, %v4495
  %v4497 = vpop.f32.mrf.mxu0
  %4498 = vmatprep.mubr.bf16.mxu0 0
  %4499 = vmatmul.mubr.bf16.gmra.mxu0 %v4395
  %v4500 = vpop.f32.mrf.mxu0
  %v4501 = vadd.f32 0.0, %v4500
  %v4502 = vpop.f32.mrf.mxu0
  %v4503 = vpop.f32.mrf.mxu0
  %v4504 = vadd.f32 0.0, %v4503
  %v4505 = vpop.f32.mrf.mxu0
  %4506 = vmatprep.mubr.bf16.mxu0 0
  %4507 = vmatmul.mubr.bf16.gmra.mxu0 %v4396
  %v4508 = vpop.f32.mrf.mxu0
  %v4509 = vadd.f32 0.0, %v4508
  %v4510 = vpop.f32.mrf.mxu0
  %v4511 = vpop.f32.mrf.mxu0
  %v4512 = vadd.f32 0.0, %v4511
  %v4513 = vpop.f32.mrf.mxu0
  %4514 = vmatprep.mubr.bf16.mxu0 0
  %4515 = vmatmul.mubr.bf16.gmra.mxu0 %v4397
  %v4516 = vpop.f32.mrf.mxu0
  %v4517 = vadd.f32 0.0, %v4516
  %v4518 = vpop.f32.mrf.mxu0
  %v4519 = vpop.f32.mrf.mxu0
  %v4520 = vadd.f32 0.0, %v4519
  %v4521 = vpop.f32.mrf.mxu0
  %4522 = vmatprep.mubr.bf16.mxu0 0
  %4523 = vmatmul.mubr.bf16.gmra.mxu0 %v4398
  %v4524 = vpop.f32.mrf.mxu0
  %v4525 = vadd.f32 0.0, %v4524
  %v4526 = vpop.f32.mrf.mxu0
  %v4527 = vpop.f32.mrf.mxu0
  %v4528 = vadd.f32 0.0, %v4527
  %v4529 = vpop.f32.mrf.mxu0
  %4530 = vmatprep.mubr.bf16.mxu0 0
  %4531 = vmatmul.mubr.bf16.gmra.mxu0 %v4399
  %v4532 = vpop.f32.mrf.mxu0
  %v4533 = vadd.f32 0.0, %v4532
  %v4534 = vpop.f32.mrf.mxu0
  %v4535 = vpop.f32.mrf.mxu0
  %v4536 = vadd.f32 0.0, %v4535
  %v4537 = vpop.f32.mrf.mxu0
  %4538 = vmatprep.mubr.bf16.mxu0 0
  %4539 = vmatmul.mubr.bf16.gmra.mxu0 %v4400
  %v4540 = vpop.f32.mrf.mxu0
  %v4541 = vadd.f32 0.0, %v4540
  %v4542 = vpop.f32.mrf.mxu0
  %v4543 = vpop.f32.mrf.mxu0
  %v4544 = vadd.f32 0.0, %v4543
  %v4545 = vpop.f32.mrf.mxu0
  %4546 = vmatprep.mubr.bf16.mxu0 0
  %4547 = vmatmul.mubr.bf16.gmra.mxu0 %v4401
  %v4548 = vpop.f32.mrf.mxu0
  %v4549 = vadd.f32 0.0, %v4548
  %v4550 = vpop.f32.mrf.mxu0
  %v4551 = vpop.f32.mrf.mxu0
  %v4552 = vadd.f32 0.0, %v4551
  %v4553 = vpop.f32.mrf.mxu0
  %4554 = vdwg.mxu0
  %v4555 = vadd.f32 %v4313, %v4493
  %v4556 = vadd.f32 %v4314, %v4496
  %v4557 = vadd.f32 %v4315, %v4501
  %v4558 = vadd.f32 %v4316, %v4504
  %v4559 = vadd.f32 %v4317, %v4509
  %v4560 = vadd.f32 %v4318, %v4512
  %v4561 = vadd.f32 %v4319, %v4517
  %v4562 = vadd.f32 %v4320, %v4520
  %v4563 = vadd.f32 %v4321, %v4525
  %v4564 = vadd.f32 %v4322, %v4528
  %v4565 = vadd.f32 %v4323, %v4533
  %v4566 = vadd.f32 %v4324, %v4536
  %v4567 = vadd.f32 %v4325, %v4541
  %v4568 = vadd.f32 %v4326, %v4544
  %v4569 = vadd.f32 %v4327, %v4549
  %v4570 = vadd.f32 %v4328, %v4552
  %4571 = vst [vmem:[#allocation2] sm:$0xff] %v4555
  %4572 = vst [vmem:[#allocation2 + $0x8] sm:$0xff] %v4556
  %4573 = vst [vmem:[#allocation2 + $0x10] sm:$0xff] %v4557
  %4574 = vst [vmem:[#allocation2 + $0x18] sm:$0xff] %v4558
  %4575 = vst [vmem:[#allocation2 + $0x20] sm:$0xff] %v4559
  %4576 = vst [vmem:[#allocation2 + $0x28] sm:$0xff] %v4560
  %4577 = vst [vmem:[#allocation2 + $0x30] sm:$0xff] %v4561
  %4578 = vst [vmem:[#allocation2 + $0x38] sm:$0xff] %v4562
  %4579 = vst [vmem:[#allocation2 + $0x40] sm:$0xff] %v4563
  %4580 = vst [vmem:[#allocation2 + $0x48] sm:$0xff] %v4564
  %4581 = vst [vmem:[#allocation2 + $0x50] sm:$0xff] %v4565
  %4582 = vst [vmem:[#allocation2 + $0x58] sm:$0xff] %v4566
  %4583 = vst [vmem:[#allocation2 + $0x60] sm:$0xff] %v4567
  %4584 = vst [vmem:[#allocation2 + $0x68] sm:$0xff] %v4568
  %4585 = vst [vmem:[#allocation2 + $0x70] sm:$0xff] %v4569
  %4586 = vst [vmem:[#allocation2 + $0x78] sm:$0xff] %v4570
  %s4587 = scalar_lea.vmem [#allocation3], 32
  %v4588 = vld [vmem:[%s4587] sm:$0xff]
  %v4589 = vld [vmem:[%s4587 + $0x10] sm:$0xff]
  %v4590 = vld [vmem:[%s4587 + $0x20] sm:$0xff]
  %v4591 = vld [vmem:[%s4587 + $0x30] sm:$0xff]
  %v4592 = vld [vmem:[%s4587 + $0x40] sm:$0xff]
  %v4593 = vld [vmem:[%s4587 + $0x50] sm:$0xff]
  %v4594 = vld [vmem:[%s4587 + $0x60] sm:$0xff]
  %v4595 = vld [vmem:[%s4587 + $0x70] sm:$0xff]
  %v4596 = vld [vmem:[%s4587 + $0xa0] sm:$0xff]
  %v4597 = vld [vmem:[%s4587 + $0xb0] sm:$0xff]
  %v4598 = vld [vmem:[%s4587 + $0xc0] sm:$0xff]
  %v4599 = vld [vmem:[%s4587 + $0xd0] sm:$0xff]
  %v4600 = vld [vmem:[%s4587 + $0xe0] sm:$0xff]
  %v4601 = vld [vmem:[%s4587 + $0xf0] sm:$0xff]
  %v4602 = vld [vmem:[%s4587 + $0x100] sm:$0xff]
  %v4603 = vld [vmem:[%s4587 + $0x110] sm:$0xff]
  %v4604 = vld [vmem:[#allocation2] sm:$0xff]
  %v4605 = vld [vmem:[#allocation2 + $0x8] sm:$0xff]
  %v4606 = vld [vmem:[#allocation2 + $0x10] sm:$0xff]
  %v4607 = vld [vmem:[#allocation2 + $0x18] sm:$0xff]
  %v4608 = vld [vmem:[#allocation2 + $0x20] sm:$0xff]
  %v4609 = vld [vmem:[#allocation2 + $0x28] sm:$0xff]
  %v4610 = vld [vmem:[#allocation2 + $0x30] sm:$0xff]
  %v4611 = vld [vmem:[#allocation2 + $0x38] sm:$0xff]
  %v4612 = vld [vmem:[#allocation2 + $0x40] sm:$0xff]
  %v4613 = vld [vmem:[#allocation2 + $0x48] sm:$0xff]
  %v4614 = vld [vmem:[#allocation2 + $0x50] sm:$0xff]
  %v4615 = vld [vmem:[#allocation2 + $0x58] sm:$0xff]
  %v4616 = vld [vmem:[#allocation2 + $0x60] sm:$0xff]
  %v4617 = vld [vmem:[#allocation2 + $0x68] sm:$0xff]
  %v4618 = vld [vmem:[#allocation2 + $0x70] sm:$0xff]
  %v4619 = vld [vmem:[#allocation2 + $0x78] sm:$0xff]
  %v4620 = vpack.c.bf16 %v4588, %v4588
  %v4621 = vpack.c.bf16 %v4589, %v4589
  %v4622 = vpack.c.bf16 %v4590, %v4590
  %v4623 = vpack.c.bf16 %v4591, %v4591
  %v4624 = vpack.c.bf16 %v4592, %v4592
  %v4625 = vpack.c.bf16 %v4593, %v4593
  %v4626 = vpack.c.bf16 %v4594, %v4594
  %v4627 = vpack.c.bf16 %v4595, %v4595
  %v4628 = vpack.c.bf16 %v4596, %v4596
  %v4629 = vpack.c.bf16 %v4597, %v4597
  %v4630 = vpack.c.bf16 %v4598, %v4598
  %v4631 = vpack.c.bf16 %v4599, %v4599
  %v4632 = vpack.c.bf16 %v4600, %v4600
  %v4633 = vpack.c.bf16 %v4601, %v4601
  %v4634 = vpack.c.bf16 %v4602, %v4602
  %v4635 = vpack.c.bf16 %v4603, %v4603
  %s4636 = scalar_lea.vmem %s2, 384
  %v4637 = vld [vmem:[%s4636] sm:$0xf]
  %v4638 = vld [vmem:[%s4636 + $0x4] sm:$0xf]
  %v4639 = vld [vmem:[%s4636 + $0x8] sm:$0xf]
  %v4640 = vld [vmem:[%s4636 + $0xc] sm:$0xf]
  %v4641 = vld [vmem:[%s4636 + $0x10] sm:$0xf]
  %v4642 = vld [vmem:[%s4636 + $0x14] sm:$0xf]
  %v4643 = vld [vmem:[%s4636 + $0x18] sm:$0xf]
  %v4644 = vld [vmem:[%s4636 + $0x1c] sm:$0xf]
  %v4645 = vld [vmem:[%s4636 + $0x20] sm:$0xf]
  %v4646 = vld [vmem:[%s4636 + $0x24] sm:$0xf]
  %v4647 = vld [vmem:[%s4636 + $0x28] sm:$0xf]
  %v4648 = vld [vmem:[%s4636 + $0x2c] sm:$0xf]
  %v4649 = vld [vmem:[%s4636 + $0x30] sm:$0xf]
  %v4650 = vld [vmem:[%s4636 + $0x34] sm:$0xf]
  %v4651 = vld [vmem:[%s4636 + $0x38] sm:$0xf]
  %v4652 = vld [vmem:[%s4636 + $0x3c] sm:$0xf]
  %v4669 = vunpack.c.l.b16 %v4620
  %v4670 = vunpack.c.l.b16 %v4621
  %v4671 = vunpack.c.l.b16 %v4622
  %v4672 = vunpack.c.l.b16 %v4623
  %v4673 = vunpack.c.l.b16 %v4624
  %v4674 = vunpack.c.l.b16 %v4625
  %v4675 = vunpack.c.l.b16 %v4626
  %v4676 = vunpack.c.l.b16 %v4627
  %v4677 = vunpack.c.l.b16 %v4628
  %v4678 = vunpack.c.l.b16 %v4629
  %v4679 = vunpack.c.l.b16 %v4630
  %v4680 = vunpack.c.l.b16 %v4631
  %v4681 = vunpack.c.l.b16 %v4632
  %v4682 = vunpack.c.l.b16 %v4633
  %v4683 = vunpack.c.l.b16 %v4634
  %v4684 = vunpack.c.l.b16 %v4635
  %v4685 = vpack.c.b16 %v4670, %v4669
  %v4686 = vpack.c.b16 %v4672, %v4671
  %v4687 = vpack.c.b16 %v4674, %v4673
  %v4688 = vpack.c.b16 %v4676, %v4675
  %v4689 = vpack.c.b16 %v4678, %v4677
  %v4690 = vpack.c.b16 %v4680, %v4679
  %v4691 = vpack.c.b16 %v4682, %v4681
  %v4692 = vpack.c.b16 %v4684, %v4683
  %v4717 = vunpack.c.l.b16 %v4637
  %v4718 = vunpack.c.l.b16 %v4638
  %v4719 = vunpack.c.l.b16 %v4639
  %v4720 = vunpack.c.l.b16 %v4640
  %v4721 = vunpack.c.l.b16 %v4641
  %v4722 = vunpack.c.l.b16 %v4642
  %v4723 = vunpack.c.l.b16 %v4643
  %v4724 = vunpack.c.l.b16 %v4644
  %v4725 = vunpack.c.l.b16 %v4645
  %v4726 = vunpack.c.l.b16 %v4646
  %v4727 = vunpack.c.l.b16 %v4647
  %v4728 = vunpack.c.l.b16 %v4648
  %v4729 = vunpack.c.l.b16 %v4649
  %v4730 = vunpack.c.l.b16 %v4650
  %v4731 = vunpack.c.l.b16 %v4651
  %v4732 = vunpack.c.l.b16 %v4652
  %v4733 = vpack.c.b16 %v4718, %v4717
  %v4734 = vpack.c.b16 %v4720, %v4719
  %v4735 = vpack.c.b16 %v4722, %v4721
  %v4736 = vpack.c.b16 %v4724, %v4723
  %v4737 = vpack.c.b16 %v4726, %v4725
  %v4738 = vpack.c.b16 %v4728, %v4727
  %v4739 = vpack.c.b16 %v4730, %v4729
  %v4740 = vpack.c.b16 %v4732, %v4731
  %4749 = vmatprep.subr.bf16.mxu0 0
  %4750 = vmatpush1.bf16.msra.mxu0 %v4740
  %4751 = vmatprep.subr.bf16.mxu0 0
  %4752 = vmatpush1.bf16.msra.mxu0 %v4739
  %4753 = vmatprep.subr.bf16.mxu0 0
  %4754 = vmatpush1.bf16.msra.mxu0 %v4738
  %4755 = vmatprep.subr.bf16.mxu0 0
  %4756 = vmatpush1.bf16.msra.mxu0 %v4737
  %4757 = vmatprep.subr.bf16.mxu0 0
  %4758 = vmatpush1.bf16.msra.mxu0 %v4736
  %4759 = vmatprep.subr.bf16.mxu0 0
  %4760 = vmatpush1.bf16.msra.mxu0 %v4735
  %4761 = vmatprep.subr.bf16.mxu0 0
  %4762 = vmatpush1.bf16.msra.mxu0 %v4734
  %4763 = vmatprep.subr.bf16.mxu0 0
  %4764 = vmatpush1.bf16.msra.mxu0 %v4733
  %4765 = vmatprep.subr.bf16.mxu0 0
  %4766 = vmatpush2.bf16.msra.mxu0 0
  %4767 = vmatprep.subr.bf16.mxu0 0
  %4768 = vmatpush2.bf16.msra.mxu0 0
  %4769 = vmatprep.subr.bf16.mxu0 0
  %4770 = vmatpush2.bf16.msra.mxu0 0
  %4771 = vmatprep.subr.bf16.mxu0 0
  %4772 = vmatpush2.bf16.msra.mxu0 0
  %4773 = vmatprep.subr.bf16.mxu0 0
  %4774 = vmatpush2.bf16.msra.mxu0 0
  %4775 = vmatprep.subr.bf16.mxu0 0
  %4776 = vmatpush2.bf16.msra.mxu0 0
  %4777 = vmatprep.subr.bf16.mxu0 0
  %4778 = vmatpush2.bf16.msra.mxu0 0
  %4779 = vmatprep.subr.bf16.mxu0 0
  %4780 = vmatpush2.bf16.msra.mxu0 0
  %4781 = vmatprep.mubr.bf16.mxu0 0
  %4782 = vmatmul.mubr.bf16.gmra.mxu0 %v4685
  %v4783 = vpop.f32.mrf.mxu0
  %v4784 = vadd.f32 0.0, %v4783
  %v4785 = vpop.f32.mrf.mxu0
  %v4786 = vpop.f32.mrf.mxu0
  %v4787 = vadd.f32 0.0, %v4786
  %v4788 = vpop.f32.mrf.mxu0
  %4789 = vmatprep.mubr.bf16.mxu0 0
  %4790 = vmatmul.mubr.bf16.gmra.mxu0 %v4686
  %v4791 = vpop.f32.mrf.mxu0
  %v4792 = vadd.f32 0.0, %v4791
  %v4793 = vpop.f32.mrf.mxu0
  %v4794 = vpop.f32.mrf.mxu0
  %v4795 = vadd.f32 0.0, %v4794
  %v4796 = vpop.f32.mrf.mxu0
  %4797 = vmatprep.mubr.bf16.mxu0 0
  %4798 = vmatmul.mubr.bf16.gmra.mxu0 %v4687
  %v4799 = vpop.f32.mrf.mxu0
  %v4800 = vadd.f32 0.0, %v4799
  %v4801 = vpop.f32.mrf.mxu0
  %v4802 = vpop.f32.mrf.mxu0
  %v4803 = vadd.f32 0.0, %v4802
  %v4804 = vpop.f32.mrf.mxu0
  %4805 = vmatprep.mubr.bf16.mxu0 0
  %4806 = vmatmul.mubr.bf16.gmra.mxu0 %v4688
  %v4807 = vpop.f32.mrf.mxu0
  %v4808 = vadd.f32 0.0, %v4807
  %v4809 = vpop.f32.mrf.mxu0
  %v4810 = vpop.f32.mrf.mxu0
  %v4811 = vadd.f32 0.0, %v4810
  %v4812 = vpop.f32.mrf.mxu0
  %4813 = vmatprep.mubr.bf16.mxu0 0
  %4814 = vmatmul.mubr.bf16.gmra.mxu0 %v4689
  %v4815 = vpop.f32.mrf.mxu0
  %v4816 = vadd.f32 0.0, %v4815
  %v4817 = vpop.f32.mrf.mxu0
  %v4818 = vpop.f32.mrf.mxu0
  %v4819 = vadd.f32 0.0, %v4818
  %v4820 = vpop.f32.mrf.mxu0
  %4821 = vmatprep.mubr.bf16.mxu0 0
  %4822 = vmatmul.mubr.bf16.gmra.mxu0 %v4690
  %v4823 = vpop.f32.mrf.mxu0
  %v4824 = vadd.f32 0.0, %v4823
  %v4825 = vpop.f32.mrf.mxu0
  %v4826 = vpop.f32.mrf.mxu0
  %v4827 = vadd.f32 0.0, %v4826
  %v4828 = vpop.f32.mrf.mxu0
  %4829 = vmatprep.mubr.bf16.mxu0 0
  %4830 = vmatmul.mubr.bf16.gmra.mxu0 %v4691
  %v4831 = vpop.f32.mrf.mxu0
  %v4832 = vadd.f32 0.0, %v4831
  %v4833 = vpop.f32.mrf.mxu0
  %v4834 = vpop.f32.mrf.mxu0
  %v4835 = vadd.f32 0.0, %v4834
  %v4836 = vpop.f32.mrf.mxu0
  %4837 = vmatprep.mubr.bf16.mxu0 0
  %4838 = vmatmul.mubr.bf16.gmra.mxu0 %v4692
  %v4839 = vpop.f32.mrf.mxu0
  %v4840 = vadd.f32 0.0, %v4839
  %v4841 = vpop.f32.mrf.mxu0
  %v4842 = vpop.f32.mrf.mxu0
  %v4843 = vadd.f32 0.0, %v4842
  %v4844 = vpop.f32.mrf.mxu0
  %4845 = vdwg.mxu0
  %v4846 = vadd.f32 %v4604, %v4784
  %v4847 = vadd.f32 %v4605, %v4787
  %v4848 = vadd.f32 %v4606, %v4792
  %v4849 = vadd.f32 %v4607, %v4795
  %v4850 = vadd.f32 %v4608, %v4800
  %v4851 = vadd.f32 %v4609, %v4803
  %v4852 = vadd.f32 %v4610, %v4808
  %v4853 = vadd.f32 %v4611, %v4811
  %v4854 = vadd.f32 %v4612, %v4816
  %v4855 = vadd.f32 %v4613, %v4819
  %v4856 = vadd.f32 %v4614, %v4824
  %v4857 = vadd.f32 %v4615, %v4827
  %v4858 = vadd.f32 %v4616, %v4832
  %v4859 = vadd.f32 %v4617, %v4835
  %v4860 = vadd.f32 %v4618, %v4840
  %v4861 = vadd.f32 %v4619, %v4843
  %4862 = vst [vmem:[#allocation2] sm:$0xff] %v4846
  %4863 = vst [vmem:[#allocation2 + $0x8] sm:$0xff] %v4847
  %4864 = vst [vmem:[#allocation2 + $0x10] sm:$0xff] %v4848
  %4865 = vst [vmem:[#allocation2 + $0x18] sm:$0xff] %v4849
  %4866 = vst [vmem:[#allocation2 + $0x20] sm:$0xff] %v4850
  %4867 = vst [vmem:[#allocation2 + $0x28] sm:$0xff] %v4851
  %4868 = vst [vmem:[#allocation2 + $0x30] sm:$0xff] %v4852
  %4869 = vst [vmem:[#allocation2 + $0x38] sm:$0xff] %v4853
  %4870 = vst [vmem:[#allocation2 + $0x40] sm:$0xff] %v4854
  %4871 = vst [vmem:[#allocation2 + $0x48] sm:$0xff] %v4855
  %4872 = vst [vmem:[#allocation2 + $0x50] sm:$0xff] %v4856
  %4873 = vst [vmem:[#allocation2 + $0x58] sm:$0xff] %v4857
  %4874 = vst [vmem:[#allocation2 + $0x60] sm:$0xff] %v4858
  %4875 = vst [vmem:[#allocation2 + $0x68] sm:$0xff] %v4859
  %4876 = vst [vmem:[#allocation2 + $0x70] sm:$0xff] %v4860
  %4877 = vst [vmem:[#allocation2 + $0x78] sm:$0xff] %v4861
  %v4878 = vld [vmem:[%s4587 + $0x1] sm:$0xff]
  %v4879 = vld [vmem:[%s4587 + $0x11] sm:$0xff]
  %v4880 = vld [vmem:[%s4587 + $0x21] sm:$0xff]
  %v4881 = vld [vmem:[%s4587 + $0x31] sm:$0xff]
  %v4882 = vld [vmem:[%s4587 + $0x41] sm:$0xff]
  %v4883 = vld [vmem:[%s4587 + $0x51] sm:$0xff]
  %v4884 = vld [vmem:[%s4587 + $0x61] sm:$0xff]
  %v4885 = vld [vmem:[%s4587 + $0x71] sm:$0xff]
  %v4886 = vld [vmem:[%s4587 + $0xa1] sm:$0xff]
  %v4887 = vld [vmem:[%s4587 + $0xb1] sm:$0xff]
  %v4888 = vld [vmem:[%s4587 + $0xc1] sm:$0xff]
  %v4889 = vld [vmem:[%s4587 + $0xd1] sm:$0xff]
  %v4890 = vld [vmem:[%s4587 + $0xe1] sm:$0xff]
  %v4891 = vld [vmem:[%s4587 + $0xf1] sm:$0xff]
  %v4892 = vld [vmem:[%s4587 + $0x101] sm:$0xff]
  %v4893 = vld [vmem:[%s4587 + $0x111] sm:$0xff]
  %v4894 = vld [vmem:[#allocation2] sm:$0xff]
  %v4895 = vld [vmem:[#allocation2 + $0x8] sm:$0xff]
  %v4896 = vld [vmem:[#allocation2 + $0x10] sm:$0xff]
  %v4897 = vld [vmem:[#allocation2 + $0x18] sm:$0xff]
  %v4898 = vld [vmem:[#allocation2 + $0x20] sm:$0xff]
  %v4899 = vld [vmem:[#allocation2 + $0x28] sm:$0xff]
  %v4900 = vld [vmem:[#allocation2 + $0x30] sm:$0xff]
  %v4901 = vld [vmem:[#allocation2 + $0x38] sm:$0xff]
  %v4902 = vld [vmem:[#allocation2 + $0x40] sm:$0xff]
  %v4903 = vld [vmem:[#allocation2 + $0x48] sm:$0xff]
  %v4904 = vld [vmem:[#allocation2 + $0x50] sm:$0xff]
  %v4905 = vld [vmem:[#allocation2 + $0x58] sm:$0xff]
  %v4906 = vld [vmem:[#allocation2 + $0x60] sm:$0xff]
  %v4907 = vld [vmem:[#allocation2 + $0x68] sm:$0xff]
  %v4908 = vld [vmem:[#allocation2 + $0x70] sm:$0xff]
  %v4909 = vld [vmem:[#allocation2 + $0x78] sm:$0xff]
  %v4910 = vpack.c.bf16 %v4878, %v4878
  %v4911 = vpack.c.bf16 %v4879, %v4879
  %v4912 = vpack.c.bf16 %v4880, %v4880
  %v4913 = vpack.c.bf16 %v4881, %v4881
  %v4914 = vpack.c.bf16 %v4882, %v4882
  %v4915 = vpack.c.bf16 %v4883, %v4883
  %v4916 = vpack.c.bf16 %v4884, %v4884
  %v4917 = vpack.c.bf16 %v4885, %v4885
  %v4918 = vpack.c.bf16 %v4886, %v4886
  %v4919 = vpack.c.bf16 %v4887, %v4887
  %v4920 = vpack.c.bf16 %v4888, %v4888
  %v4921 = vpack.c.bf16 %v4889, %v4889
  %v4922 = vpack.c.bf16 %v4890, %v4890
  %v4923 = vpack.c.bf16 %v4891, %v4891
  %v4924 = vpack.c.bf16 %v4892, %v4892
  %v4925 = vpack.c.bf16 %v4893, %v4893
  %s4926 = scalar_lea.vmem %s2, 448
  %v4927 = vld [vmem:[%s4926] sm:$0xf]
  %v4928 = vld [vmem:[%s4926 + $0x4] sm:$0xf]
  %v4929 = vld [vmem:[%s4926 + $0x8] sm:$0xf]
  %v4930 = vld [vmem:[%s4926 + $0xc] sm:$0xf]
  %v4931 = vld [vmem:[%s4926 + $0x10] sm:$0xf]
  %v4932 = vld [vmem:[%s4926 + $0x14] sm:$0xf]
  %v4933 = vld [vmem:[%s4926 + $0x18] sm:$0xf]
  %v4934 = vld [vmem:[%s4926 + $0x1c] sm:$0xf]
  %v4935 = vld [vmem:[%s4926 + $0x20] sm:$0xf]
  %v4936 = vld [vmem:[%s4926 + $0x24] sm:$0xf]
  %v4937 = vld [vmem:[%s4926 + $0x28] sm:$0xf]
  %v4938 = vld [vmem:[%s4926 + $0x2c] sm:$0xf]
  %v4939 = vld [vmem:[%s4926 + $0x30] sm:$0xf]
  %v4940 = vld [vmem:[%s4926 + $0x34] sm:$0xf]
  %v4941 = vld [vmem:[%s4926 + $0x38] sm:$0xf]
  %v4942 = vld [vmem:[%s4926 + $0x3c] sm:$0xf]
  %v4959 = vunpack.c.l.b16 %v4910
  %v4960 = vunpack.c.l.b16 %v4911
  %v4961 = vunpack.c.l.b16 %v4912
  %v4962 = vunpack.c.l.b16 %v4913
  %v4963 = vunpack.c.l.b16 %v4914
  %v4964 = vunpack.c.l.b16 %v4915
  %v4965 = vunpack.c.l.b16 %v4916
  %v4966 = vunpack.c.l.b16 %v4917
  %v4967 = vunpack.c.l.b16 %v4918
  %v4968 = vunpack.c.l.b16 %v4919
  %v4969 = vunpack.c.l.b16 %v4920
  %v4970 = vunpack.c.l.b16 %v4921
  %v4971 = vunpack.c.l.b16 %v4922
  %v4972 = vunpack.c.l.b16 %v4923
  %v4973 = vunpack.c.l.b16 %v4924
  %v4974 = vunpack.c.l.b16 %v4925
  %v4975 = vpack.c.b16 %v4960, %v4959
  %v4976 = vpack.c.b16 %v4962, %v4961
  %v4977 = vpack.c.b16 %v4964, %v4963
  %v4978 = vpack.c.b16 %v4966, %v4965
  %v4979 = vpack.c.b16 %v4968, %v4967
  %v4980 = vpack.c.b16 %v4970, %v4969
  %v4981 = vpack.c.b16 %v4972, %v4971
  %v4982 = vpack.c.b16 %v4974, %v4973
  %v5007 = vunpack.c.l.b16 %v4927
  %v5008 = vunpack.c.l.b16 %v4928
  %v5009 = vunpack.c.l.b16 %v4929
  %v5010 = vunpack.c.l.b16 %v4930
  %v5011 = vunpack.c.l.b16 %v4931
  %v5012 = vunpack.c.l.b16 %v4932
  %v5013 = vunpack.c.l.b16 %v4933
  %v5014 = vunpack.c.l.b16 %v4934
  %v5015 = vunpack.c.l.b16 %v4935
  %v5016 = vunpack.c.l.b16 %v4936
  %v5017 = vunpack.c.l.b16 %v4937
  %v5018 = vunpack.c.l.b16 %v4938
  %v5019 = vunpack.c.l.b16 %v4939
  %v5020 = vunpack.c.l.b16 %v4940
  %v5021 = vunpack.c.l.b16 %v4941
  %v5022 = vunpack.c.l.b16 %v4942
  %v5023 = vpack.c.b16 %v5008, %v5007
  %v5024 = vpack.c.b16 %v5010, %v5009
  %v5025 = vpack.c.b16 %v5012, %v5011
  %v5026 = vpack.c.b16 %v5014, %v5013
  %v5027 = vpack.c.b16 %v5016, %v5015
  %v5028 = vpack.c.b16 %v5018, %v5017
  %v5029 = vpack.c.b16 %v5020, %v5019
  %v5030 = vpack.c.b16 %v5022, %v5021
  %5039 = vmatprep.subr.bf16.mxu0 0
  %5040 = vmatpush1.bf16.msra.mxu0 %v5030
  %5041 = vmatprep.subr.bf16.mxu0 0
  %5042 = vmatpush1.bf16.msra.mxu0 %v5029
  %5043 = vmatprep.subr.bf16.mxu0 0
  %5044 = vmatpush1.bf16.msra.mxu0 %v5028
  %5045 = vmatprep.subr.bf16.mxu0 0
  %5046 = vmatpush1.bf16.msra.mxu0 %v5027
  %5047 = vmatprep.subr.bf16.mxu0 0
  %5048 = vmatpush1.bf16.msra.mxu0 %v5026
  %5049 = vmatprep.subr.bf16.mxu0 0
  %5050 = vmatpush1.bf16.msra.mxu0 %v5025
  %5051 = vmatprep.subr.bf16.mxu0 0
  %5052 = vmatpush1.bf16.msra.mxu0 %v5024
  %5053 = vmatprep.subr.bf16.mxu0 0
  %5054 = vmatpush1.bf16.msra.mxu0 %v5023
  %5055 = vmatprep.subr.bf16.mxu0 0
  %5056 = vmatpush2.bf16.msra.mxu0 0
  %5057 = vmatprep.subr.bf16.mxu0 0
  %5058 = vmatpush2.bf16.msra.mxu0 0
  %5059 = vmatprep.subr.bf16.mxu0 0
  %5060 = vmatpush2.bf16.msra.mxu0 0
  %5061 = vmatprep.subr.bf16.mxu0 0
  %5062 = vmatpush2.bf16.msra.mxu0 0
  %5063 = vmatprep.subr.bf16.mxu0 0
  %5064 = vmatpush2.bf16.msra.mxu0 0
  %5065 = vmatprep.subr.bf16.mxu0 0
  %5066 = vmatpush2.bf16.msra.mxu0 0
  %5067 = vmatprep.subr.bf16.mxu0 0
  %5068 = vmatpush2.bf16.msra.mxu0 0
  %5069 = vmatprep.subr.bf16.mxu0 0
  %5070 = vmatpush2.bf16.msra.mxu0 0
  %5071 = vmatprep.mubr.bf16.mxu0 0
  %5072 = vmatmul.mubr.bf16.gmra.mxu0 %v4975
  %v5073 = vpop.f32.mrf.mxu0
  %v5074 = vadd.f32 0.0, %v5073
  %v5075 = vpop.f32.mrf.mxu0
  %v5076 = vpop.f32.mrf.mxu0
  %v5077 = vadd.f32 0.0, %v5076
  %v5078 = vpop.f32.mrf.mxu0
  %5079 = vmatprep.mubr.bf16.mxu0 0
  %5080 = vmatmul.mubr.bf16.gmra.mxu0 %v4976
  %v5081 = vpop.f32.mrf.mxu0
  %v5082 = vadd.f32 0.0, %v5081
  %v5083 = vpop.f32.mrf.mxu0
  %v5084 = vpop.f32.mrf.mxu0
  %v5085 = vadd.f32 0.0, %v5084
  %v5086 = vpop.f32.mrf.mxu0
  %5087 = vmatprep.mubr.bf16.mxu0 0
  %5088 = vmatmul.mubr.bf16.gmra.mxu0 %v4977
  %v5089 = vpop.f32.mrf.mxu0
  %v5090 = vadd.f32 0.0, %v5089
  %v5091 = vpop.f32.mrf.mxu0
  %v5092 = vpop.f32.mrf.mxu0
  %v5093 = vadd.f32 0.0, %v5092
  %v5094 = vpop.f32.mrf.mxu0
  %5095 = vmatprep.mubr.bf16.mxu0 0
  %5096 = vmatmul.mubr.bf16.gmra.mxu0 %v4978
  %v5097 = vpop.f32.mrf.mxu0
  %v5098 = vadd.f32 0.0, %v5097
  %v5099 = vpop.f32.mrf.mxu0
  %v5100 = vpop.f32.mrf.mxu0
  %v5101 = vadd.f32 0.0, %v5100
  %v5102 = vpop.f32.mrf.mxu0
  %5103 = vmatprep.mubr.bf16.mxu0 0
  %5104 = vmatmul.mubr.bf16.gmra.mxu0 %v4979
  %v5105 = vpop.f32.mrf.mxu0
  %v5106 = vadd.f32 0.0, %v5105
  %v5107 = vpop.f32.mrf.mxu0
  %v5108 = vpop.f32.mrf.mxu0
  %v5109 = vadd.f32 0.0, %v5108
  %v5110 = vpop.f32.mrf.mxu0
  %5111 = vmatprep.mubr.bf16.mxu0 0
  %5112 = vmatmul.mubr.bf16.gmra.mxu0 %v4980
  %v5113 = vpop.f32.mrf.mxu0
  %v5114 = vadd.f32 0.0, %v5113
  %v5115 = vpop.f32.mrf.mxu0
  %v5116 = vpop.f32.mrf.mxu0
  %v5117 = vadd.f32 0.0, %v5116
  %v5118 = vpop.f32.mrf.mxu0
  %5119 = vmatprep.mubr.bf16.mxu0 0
  %5120 = vmatmul.mubr.bf16.gmra.mxu0 %v4981
  %v5121 = vpop.f32.mrf.mxu0
  %v5122 = vadd.f32 0.0, %v5121
  %v5123 = vpop.f32.mrf.mxu0
  %v5124 = vpop.f32.mrf.mxu0
  %v5125 = vadd.f32 0.0, %v5124
  %v5126 = vpop.f32.mrf.mxu0
  %5127 = vmatprep.mubr.bf16.mxu0 0
  %5128 = vmatmul.mubr.bf16.gmra.mxu0 %v4982
  %v5129 = vpop.f32.mrf.mxu0
  %v5130 = vadd.f32 0.0, %v5129
  %v5131 = vpop.f32.mrf.mxu0
  %v5132 = vpop.f32.mrf.mxu0
  %v5133 = vadd.f32 0.0, %v5132
  %v5134 = vpop.f32.mrf.mxu0
  %5135 = vdwg.mxu0
  %v5136 = vadd.f32 %v4894, %v5074
  %v5137 = vadd.f32 %v4895, %v5077
  %v5138 = vadd.f32 %v4896, %v5082
  %v5139 = vadd.f32 %v4897, %v5085
  %v5140 = vadd.f32 %v4898, %v5090
  %v5141 = vadd.f32 %v4899, %v5093
  %v5142 = vadd.f32 %v4900, %v5098
  %v5143 = vadd.f32 %v4901, %v5101
  %v5144 = vadd.f32 %v4902, %v5106
  %v5145 = vadd.f32 %v4903, %v5109
  %v5146 = vadd.f32 %v4904, %v5114
  %v5147 = vadd.f32 %v4905, %v5117
  %v5148 = vadd.f32 %v4906, %v5122
  %v5149 = vadd.f32 %v4907, %v5125
  %v5150 = vadd.f32 %v4908, %v5130
  %v5151 = vadd.f32 %v4909, %v5133
  %5152 = vst [vmem:[#allocation2] sm:$0xff] %v5136
  %5153 = vst [vmem:[#allocation2 + $0x8] sm:$0xff] %v5137
  %5154 = vst [vmem:[#allocation2 + $0x10] sm:$0xff] %v5138
  %5155 = vst [vmem:[#allocation2 + $0x18] sm:$0xff] %v5139
  %5156 = vst [vmem:[#allocation2 + $0x20] sm:$0xff] %v5140
  %5157 = vst [vmem:[#allocation2 + $0x28] sm:$0xff] %v5141
  %5158 = vst [vmem:[#allocation2 + $0x30] sm:$0xff] %v5142
  %5159 = vst [vmem:[#allocation2 + $0x38] sm:$0xff] %v5143
  %5160 = vst [vmem:[#allocation2 + $0x40] sm:$0xff] %v5144
  %5161 = vst [vmem:[#allocation2 + $0x48] sm:$0xff] %v5145
  %5162 = vst [vmem:[#allocation2 + $0x50] sm:$0xff] %v5146
  %5163 = vst [vmem:[#allocation2 + $0x58] sm:$0xff] %v5147
  %5164 = vst [vmem:[#allocation2 + $0x60] sm:$0xff] %v5148
  %5165 = vst [vmem:[#allocation2 + $0x68] sm:$0xff] %v5149
  %5166 = vst [vmem:[#allocation2 + $0x70] sm:$0xff] %v5150
  %5167 = vst [vmem:[#allocation2 + $0x78] sm:$0xff] %v5151
  %v5168 = vld [vmem:[%s4587 + $0x2] sm:$0xff]
  %v5169 = vld [vmem:[%s4587 + $0x12] sm:$0xff]
  %v5170 = vld [vmem:[%s4587 + $0x22] sm:$0xff]
  %v5171 = vld [vmem:[%s4587 + $0x32] sm:$0xff]
  %v5172 = vld [vmem:[%s4587 + $0x42] sm:$0xff]
  %v5173 = vld [vmem:[%s4587 + $0x52] sm:$0xff]
  %v5174 = vld [vmem:[%s4587 + $0x62] sm:$0xff]
  %v5175 = vld [vmem:[%s4587 + $0x72] sm:$0xff]
  %v5176 = vld [vmem:[%s4587 + $0xa2] sm:$0xff]
  %v5177 = vld [vmem:[%s4587 + $0xb2] sm:$0xff]
  %v5178 = vld [vmem:[%s4587 + $0xc2] sm:$0xff]
  %v5179 = vld [vmem:[%s4587 + $0xd2] sm:$0xff]
  %v5180 = vld [vmem:[%s4587 + $0xe2] sm:$0xff]
  %v5181 = vld [vmem:[%s4587 + $0xf2] sm:$0xff]
  %v5182 = vld [vmem:[%s4587 + $0x102] sm:$0xff]
  %v5183 = vld [vmem:[%s4587 + $0x112] sm:$0xff]
  %v5184 = vld [vmem:[#allocation2] sm:$0xff]
  %v5185 = vld [vmem:[#allocation2 + $0x8] sm:$0xff]
  %v5186 = vld [vmem:[#allocation2 + $0x10] sm:$0xff]
  %v5187 = vld [vmem:[#allocation2 + $0x18] sm:$0xff]
  %v5188 = vld [vmem:[#allocation2 + $0x20] sm:$0xff]
  %v5189 = vld [vmem:[#allocation2 + $0x28] sm:$0xff]
  %v5190 = vld [vmem:[#allocation2 + $0x30] sm:$0xff]
  %v5191 = vld [vmem:[#allocation2 + $0x38] sm:$0xff]
  %v5192 = vld [vmem:[#allocation2 + $0x40] sm:$0xff]
  %v5193 = vld [vmem:[#allocation2 + $0x48] sm:$0xff]
  %v5194 = vld [vmem:[#allocation2 + $0x50] sm:$0xff]
  %v5195 = vld [vmem:[#allocation2 + $0x58] sm:$0xff]
  %v5196 = vld [vmem:[#allocation2 + $0x60] sm:$0xff]
  %v5197 = vld [vmem:[#allocation2 + $0x68] sm:$0xff]
  %v5198 = vld [vmem:[#allocation2 + $0x70] sm:$0xff]
  %v5199 = vld [vmem:[#allocation2 + $0x78] sm:$0xff]
  %v5200 = vpack.c.bf16 %v5168, %v5168
  %v5201 = vpack.c.bf16 %v5169, %v5169
  %v5202 = vpack.c.bf16 %v5170, %v5170
  %v5203 = vpack.c.bf16 %v5171, %v5171
  %v5204 = vpack.c.bf16 %v5172, %v5172
  %v5205 = vpack.c.bf16 %v5173, %v5173
  %v5206 = vpack.c.bf16 %v5174, %v5174
  %v5207 = vpack.c.bf16 %v5175, %v5175
  %v5208 = vpack.c.bf16 %v5176, %v5176
  %v5209 = vpack.c.bf16 %v5177, %v5177
  %v5210 = vpack.c.bf16 %v5178, %v5178
  %v5211 = vpack.c.bf16 %v5179, %v5179
  %v5212 = vpack.c.bf16 %v5180, %v5180
  %v5213 = vpack.c.bf16 %v5181, %v5181
  %v5214 = vpack.c.bf16 %v5182, %v5182
  %v5215 = vpack.c.bf16 %v5183, %v5183
  %s5216 = scalar_lea.vmem %s2, 512
  %v5217 = vld [vmem:[%s5216] sm:$0xf]
  %v5218 = vld [vmem:[%s5216 + $0x4] sm:$0xf]
  %v5219 = vld [vmem:[%s5216 + $0x8] sm:$0xf]
  %v5220 = vld [vmem:[%s5216 + $0xc] sm:$0xf]
  %v5221 = vld [vmem:[%s5216 + $0x10] sm:$0xf]
  %v5222 = vld [vmem:[%s5216 + $0x14] sm:$0xf]
  %v5223 = vld [vmem:[%s5216 + $0x18] sm:$0xf]
  %v5224 = vld [vmem:[%s5216 + $0x1c] sm:$0xf]
  %v5225 = vld [vmem:[%s5216 + $0x20] sm:$0xf]
  %v5226 = vld [vmem:[%s5216 + $0x24] sm:$0xf]
  %v5227 = vld [vmem:[%s5216 + $0x28] sm:$0xf]
  %v5228 = vld [vmem:[%s5216 + $0x2c] sm:$0xf]
  %v5229 = vld [vmem:[%s5216 + $0x30] sm:$0xf]
  %v5230 = vld [vmem:[%s5216 + $0x34] sm:$0xf]
  %v5231 = vld [vmem:[%s5216 + $0x38] sm:$0xf]
  %v5232 = vld [vmem:[%s5216 + $0x3c] sm:$0xf]
  %v5249 = vunpack.c.l.b16 %v5200
  %v5250 = vunpack.c.l.b16 %v5201
  %v5251 = vunpack.c.l.b16 %v5202
  %v5252 = vunpack.c.l.b16 %v5203
  %v5253 = vunpack.c.l.b16 %v5204
  %v5254 = vunpack.c.l.b16 %v5205
  %v5255 = vunpack.c.l.b16 %v5206
  %v5256 = vunpack.c.l.b16 %v5207
  %v5257 = vunpack.c.l.b16 %v5208
  %v5258 = vunpack.c.l.b16 %v5209
  %v5259 = vunpack.c.l.b16 %v5210
  %v5260 = vunpack.c.l.b16 %v5211
  %v5261 = vunpack.c.l.b16 %v5212
  %v5262 = vunpack.c.l.b16 %v5213
  %v5263 = vunpack.c.l.b16 %v5214
  %v5264 = vunpack.c.l.b16 %v5215
  %v5265 = vpack.c.b16 %v5250, %v5249
  %v5266 = vpack.c.b16 %v5252, %v5251
  %v5267 = vpack.c.b16 %v5254, %v5253
  %v5268 = vpack.c.b16 %v5256, %v5255
  %v5269 = vpack.c.b16 %v5258, %v5257
  %v5270 = vpack.c.b16 %v5260, %v5259
  %v5271 = vpack.c.b16 %v5262, %v5261
  %v5272 = vpack.c.b16 %v5264, %v5263
  %v5297 = vunpack.c.l.b16 %v5217
  %v5298 = vunpack.c.l.b16 %v5218
  %v5299 = vunpack.c.l.b16 %v5219
  %v5300 = vunpack.c.l.b16 %v5220
  %v5301 = vunpack.c.l.b16 %v5221
  %v5302 = vunpack.c.l.b16 %v5222
  %v5303 = vunpack.c.l.b16 %v5223
  %v5304 = vunpack.c.l.b16 %v5224
  %v5305 = vunpack.c.l.b16 %v5225
  %v5306 = vunpack.c.l.b16 %v5226
  %v5307 = vunpack.c.l.b16 %v5227
  %v5308 = vunpack.c.l.b16 %v5228
  %v5309 = vunpack.c.l.b16 %v5229
  %v5310 = vunpack.c.l.b16 %v5230
  %v5311 = vunpack.c.l.b16 %v5231
  %v5312 = vunpack.c.l.b16 %v5232
  %v5313 = vpack.c.b16 %v5298, %v5297
  %v5314 = vpack.c.b16 %v5300, %v5299
  %v5315 = vpack.c.b16 %v5302, %v5301
  %v5316 = vpack.c.b16 %v5304, %v5303
  %v5317 = vpack.c.b16 %v5306, %v5305
  %v5318 = vpack.c.b16 %v5308, %v5307
  %v5319 = vpack.c.b16 %v5310, %v5309
  %v5320 = vpack.c.b16 %v5312, %v5311
  %5329 = vmatprep.subr.bf16.mxu0 0
  %5330 = vmatpush1.bf16.msra.mxu0 %v5320
  %5331 = vmatprep.subr.bf16.mxu0 0
  %5332 = vmatpush1.bf16.msra.mxu0 %v5319
  %5333 = vmatprep.subr.bf16.mxu0 0
  %5334 = vmatpush1.bf16.msra.mxu0 %v5318
  %5335 = vmatprep.subr.bf16.mxu0 0
  %5336 = vmatpush1.bf16.msra.mxu0 %v5317
  %5337 = vmatprep.subr.bf16.mxu0 0
  %5338 = vmatpush1.bf16.msra.mxu0 %v5316
  %5339 = vmatprep.subr.bf16.mxu0 0
  %5340 = vmatpush1.bf16.msra.mxu0 %v5315
  %5341 = vmatprep.subr.bf16.mxu0 0
  %5342 = vmatpush1.bf16.msra.mxu0 %v5314
  %5343 = vmatprep.subr.bf16.mxu0 0
  %5344 = vmatpush1.bf16.msra.mxu0 %v5313
  %5345 = vmatprep.subr.bf16.mxu0 0
  %5346 = vmatpush2.bf16.msra.mxu0 0
  %5347 = vmatprep.subr.bf16.mxu0 0
  %5348 = vmatpush2.bf16.msra.mxu0 0
  %5349 = vmatprep.subr.bf16.mxu0 0
  %5350 = vmatpush2.bf16.msra.mxu0 0
  %5351 = vmatprep.subr.bf16.mxu0 0
  %5352 = vmatpush2.bf16.msra.mxu0 0
  %5353 = vmatprep.subr.bf16.mxu0 0
  %5354 = vmatpush2.bf16.msra.mxu0 0
  %5355 = vmatprep.subr.bf16.mxu0 0
  %5356 = vmatpush2.bf16.msra.mxu0 0
  %5357 = vmatprep.subr.bf16.mxu0 0
  %5358 = vmatpush2.bf16.msra.mxu0 0
  %5359 = vmatprep.subr.bf16.mxu0 0
  %5360 = vmatpush2.bf16.msra.mxu0 0
  %5361 = vmatprep.mubr.bf16.mxu0 0
  %5362 = vmatmul.mubr.bf16.gmra.mxu0 %v5265
  %v5363 = vpop.f32.mrf.mxu0
  %v5364 = vadd.f32 0.0, %v5363
  %v5365 = vpop.f32.mrf.mxu0
  %v5366 = vpop.f32.mrf.mxu0
  %v5367 = vadd.f32 0.0, %v5366
  %v5368 = vpop.f32.mrf.mxu0
  %5369 = vmatprep.mubr.bf16.mxu0 0
  %5370 = vmatmul.mubr.bf16.gmra.mxu0 %v5266
  %v5371 = vpop.f32.mrf.mxu0
  %v5372 = vadd.f32 0.0, %v5371
  %v5373 = vpop.f32.mrf.mxu0
  %v5374 = vpop.f32.mrf.mxu0
  %v5375 = vadd.f32 0.0, %v5374
  %v5376 = vpop.f32.mrf.mxu0
  %5377 = vmatprep.mubr.bf16.mxu0 0
  %5378 = vmatmul.mubr.bf16.gmra.mxu0 %v5267
  %v5379 = vpop.f32.mrf.mxu0
  %v5380 = vadd.f32 0.0, %v5379
  %v5381 = vpop.f32.mrf.mxu0
  %v5382 = vpop.f32.mrf.mxu0
  %v5383 = vadd.f32 0.0, %v5382
  %v5384 = vpop.f32.mrf.mxu0
  %5385 = vmatprep.mubr.bf16.mxu0 0
  %5386 = vmatmul.mubr.bf16.gmra.mxu0 %v5268
  %v5387 = vpop.f32.mrf.mxu0
  %v5388 = vadd.f32 0.0, %v5387
  %v5389 = vpop.f32.mrf.mxu0
  %v5390 = vpop.f32.mrf.mxu0
  %v5391 = vadd.f32 0.0, %v5390
  %v5392 = vpop.f32.mrf.mxu0
  %5393 = vmatprep.mubr.bf16.mxu0 0
  %5394 = vmatmul.mubr.bf16.gmra.mxu0 %v5269
  %v5395 = vpop.f32.mrf.mxu0
  %v5396 = vadd.f32 0.0, %v5395
  %v5397 = vpop.f32.mrf.mxu0
  %v5398 = vpop.f32.mrf.mxu0
  %v5399 = vadd.f32 0.0, %v5398
  %v5400 = vpop.f32.mrf.mxu0
  %5401 = vmatprep.mubr.bf16.mxu0 0
  %5402 = vmatmul.mubr.bf16.gmra.mxu0 %v5270
  %v5403 = vpop.f32.mrf.mxu0
  %v5404 = vadd.f32 0.0, %v5403
  %v5405 = vpop.f32.mrf.mxu0
  %v5406 = vpop.f32.mrf.mxu0
  %v5407 = vadd.f32 0.0, %v5406
  %v5408 = vpop.f32.mrf.mxu0
  %5409 = vmatprep.mubr.bf16.mxu0 0
  %5410 = vmatmul.mubr.bf16.gmra.mxu0 %v5271
  %v5411 = vpop.f32.mrf.mxu0
  %v5412 = vadd.f32 0.0, %v5411
  %v5413 = vpop.f32.mrf.mxu0
  %v5414 = vpop.f32.mrf.mxu0
  %v5415 = vadd.f32 0.0, %v5414
  %v5416 = vpop.f32.mrf.mxu0
  %5417 = vmatprep.mubr.bf16.mxu0 0
  %5418 = vmatmul.mubr.bf16.gmra.mxu0 %v5272
  %v5419 = vpop.f32.mrf.mxu0
  %v5420 = vadd.f32 0.0, %v5419
  %v5421 = vpop.f32.mrf.mxu0
  %v5422 = vpop.f32.mrf.mxu0
  %v5423 = vadd.f32 0.0, %v5422
  %v5424 = vpop.f32.mrf.mxu0
  %5425 = vdwg.mxu0
  %v5426 = vadd.f32 %v5184, %v5364
  %v5427 = vadd.f32 %v5185, %v5367
  %v5428 = vadd.f32 %v5186, %v5372
  %v5429 = vadd.f32 %v5187, %v5375
  %v5430 = vadd.f32 %v5188, %v5380
  %v5431 = vadd.f32 %v5189, %v5383
  %v5432 = vadd.f32 %v5190, %v5388
  %v5433 = vadd.f32 %v5191, %v5391
  %v5434 = vadd.f32 %v5192, %v5396
  %v5435 = vadd.f32 %v5193, %v5399
  %v5436 = vadd.f32 %v5194, %v5404
  %v5437 = vadd.f32 %v5195, %v5407
  %v5438 = vadd.f32 %v5196, %v5412
  %v5439 = vadd.f32 %v5197, %v5415
  %v5440 = vadd.f32 %v5198, %v5420
  %v5441 = vadd.f32 %v5199, %v5423
  %5442 = vst [vmem:[#allocation2] sm:$0xff] %v5426
  %5443 = vst [vmem:[#allocation2 + $0x8] sm:$0xff] %v5427
  %5444 = vst [vmem:[#allocation2 + $0x10] sm:$0xff] %v5428
  %5445 = vst [vmem:[#allocation2 + $0x18] sm:$0xff] %v5429
  %5446 = vst [vmem:[#allocation2 + $0x20] sm:$0xff] %v5430
  %5447 = vst [vmem:[#allocation2 + $0x28] sm:$0xff] %v5431
  %5448 = vst [vmem:[#allocation2 + $0x30] sm:$0xff] %v5432
  %5449 = vst [vmem:[#allocation2 + $0x38] sm:$0xff] %v5433
  %5450 = vst [vmem:[#allocation2 + $0x40] sm:$0xff] %v5434
  %5451 = vst [vmem:[#allocation2 + $0x48] sm:$0xff] %v5435
  %5452 = vst [vmem:[#allocation2 + $0x50] sm:$0xff] %v5436
  %5453 = vst [vmem:[#allocation2 + $0x58] sm:$0xff] %v5437
  %5454 = vst [vmem:[#allocation2 + $0x60] sm:$0xff] %v5438
  %5455 = vst [vmem:[#allocation2 + $0x68] sm:$0xff] %v5439
  %5456 = vst [vmem:[#allocation2 + $0x70] sm:$0xff] %v5440
  %5457 = vst [vmem:[#allocation2 + $0x78] sm:$0xff] %v5441
  %v5458 = vld [vmem:[#allocation2] sm:$0xff]
  %v5459 = vld [vmem:[#allocation2 + $0x8] sm:$0xff]
  %v5460 = vld [vmem:[#allocation2 + $0x10] sm:$0xff]
  %v5461 = vld [vmem:[#allocation2 + $0x18] sm:$0xff]
  %v5462 = vld [vmem:[#allocation2 + $0x20] sm:$0xff]
  %v5463 = vld [vmem:[#allocation2 + $0x28] sm:$0xff]
  %v5464 = vld [vmem:[#allocation2 + $0x30] sm:$0xff]
  %v5465 = vld [vmem:[#allocation2 + $0x38] sm:$0xff]
  %v5466 = vld [vmem:[#allocation2 + $0x40] sm:$0xff]
  %v5467 = vld [vmem:[#allocation2 + $0x48] sm:$0xff]
  %v5468 = vld [vmem:[#allocation2 + $0x50] sm:$0xff]
  %v5469 = vld [vmem:[#allocation2 + $0x58] sm:$0xff]
  %v5470 = vld [vmem:[#allocation2 + $0x60] sm:$0xff]
  %v5471 = vld [vmem:[#allocation2 + $0x68] sm:$0xff]
  %v5472 = vld [vmem:[#allocation2 + $0x70] sm:$0xff]
  %v5473 = vld [vmem:[#allocation2 + $0x78] sm:$0xff]
  %v5474 = vadd.f32 %v5458, %v5459
  %v5475 = vadd.f32 %v5474, %v5460
  %v5476 = vadd.f32 %v5475, %v5461
  %v5477 = vadd.f32 %v5476, %v5462
  %v5478 = vadd.f32 %v5477, %v5463
  %v5479 = vadd.f32 %v5478, %v5464
  %v5480 = vadd.f32 %v5479, %v5465
  %v5481 = vadd.f32 %v5480, %v5466
  %v5482 = vadd.f32 %v5481, %v5467
  %v5483 = vadd.f32 %v5482, %v5468
  %v5484 = vadd.f32 %v5483, %v5469
  %v5485 = vadd.f32 %v5484, %v5470
  %v5486 = vadd.f32 %v5485, %v5471
  %v5487 = vadd.f32 %v5486, %v5472
  %v5488 = vadd.f32 %v5487, %v5473
  %v5489 = vrot.slane %v5488, 4
  %v5490 = vadd.f32 %v5488, %v5489
  %v5491 = vrot.slane %v5490, 2
  %v5492 = vadd.f32 %v5490, %v5491
  %v5493 = vrot.slane %v5492, 1
  %v5494 = vadd.f32 %v5492, %v5493
  %v5495 = vmul.f32 %v5494, %v2682
  %v5496 = vmul.f32 %v5458, %v5458
  %v5497 = vmul.f32 %v5459, %v5459
  %v5498 = vmul.f32 %v5460, %v5460
  %v5499 = vmul.f32 %v5461, %v5461
  %v5500 = vmul.f32 %v5462, %v5462
  %v5501 = vmul.f32 %v5463, %v5463
  %v5502 = vmul.f32 %v5464, %v5464
  %v5503 = vmul.f32 %v5465, %v5465
  %v5504 = vmul.f32 %v5466, %v5466
  %v5505 = vmul.f32 %v5467, %v5467
  %v5506 = vmul.f32 %v5468, %v5468
  %v5507 = vmul.f32 %v5469, %v5469
  %v5508 = vmul.f32 %v5470, %v5470
  %v5509 = vmul.f32 %v5471, %v5471
  %v5510 = vmul.f32 %v5472, %v5472
  %v5511 = vmul.f32 %v5473, %v5473
  %v5512 = vadd.f32 %v5496, %v5497
  %v5513 = vadd.f32 %v5512, %v5498
  %v5514 = vadd.f32 %v5513, %v5499
  %v5515 = vadd.f32 %v5514, %v5500
  %v5516 = vadd.f32 %v5515, %v5501
  %v5517 = vadd.f32 %v5516, %v5502
  %v5518 = vadd.f32 %v5517, %v5503
  %v5519 = vadd.f32 %v5518, %v5504
  %v5520 = vadd.f32 %v5519, %v5505
  %v5521 = vadd.f32 %v5520, %v5506
  %v5522 = vadd.f32 %v5521, %v5507
  %v5523 = vadd.f32 %v5522, %v5508
  %v5524 = vadd.f32 %v5523, %v5509
  %v5525 = vadd.f32 %v5524, %v5510
  %v5526 = vadd.f32 %v5525, %v5511
  %v5527 = vrot.slane %v5526, 4
  %v5528 = vadd.f32 %v5526, %v5527
  %v5529 = vrot.slane %v5528, 2
  %v5530 = vadd.f32 %v5528, %v5529
  %v5531 = vrot.slane %v5530, 1
  %v5532 = vadd.f32 %v5530, %v5531
  %v5533 = vmul.f32 %v5532, %v2682
  %v5534 = vmul.f32 %v5495, %v5495
  %v5535 = vsub.f32 %v5533, %v5534
  %v5536 = vmax.f32 %v5535, 0.0
  %v5537 = vsub.f32 %v5458, %v5495
  %v5538 = vsub.f32 %v5459, %v5495
  %v5539 = vsub.f32 %v5460, %v5495
  %v5540 = vsub.f32 %v5461, %v5495
  %v5541 = vsub.f32 %v5462, %v5495
  %v5542 = vsub.f32 %v5463, %v5495
  %v5543 = vsub.f32 %v5464, %v5495
  %v5544 = vsub.f32 %v5465, %v5495
  %v5545 = vsub.f32 %v5466, %v5495
  %v5546 = vsub.f32 %v5467, %v5495
  %v5547 = vsub.f32 %v5468, %v5495
  %v5548 = vsub.f32 %v5469, %v5495
  %v5549 = vsub.f32 %v5470, %v5495
  %v5550 = vsub.f32 %v5471, %v5495
  %v5551 = vsub.f32 %v5472, %v5495
  %v5552 = vsub.f32 %v5473, %v5495
  %v5553 = vadd.f32 %v5536, 1e-05
  %v5554 = vrsqrt.pop %v5553
  %v5555 = vmul.f32 %v5537, %v5554
  %v5556 = vmul.f32 %v5538, %v5554
  %v5557 = vmul.f32 %v5539, %v5554
  %v5558 = vmul.f32 %v5540, %v5554
  %v5559 = vmul.f32 %v5541, %v5554
  %v5560 = vmul.f32 %v5542, %v5554
  %v5561 = vmul.f32 %v5543, %v5554
  %v5562 = vmul.f32 %v5544, %v5554
  %v5563 = vmul.f32 %v5545, %v5554
  %v5564 = vmul.f32 %v5546, %v5554
  %v5565 = vmul.f32 %v5547, %v5554
  %v5566 = vmul.f32 %v5548, %v5554
  %v5567 = vmul.f32 %v5549, %v5554
  %v5568 = vmul.f32 %v5550, %v5554
  %v5569 = vmul.f32 %v5551, %v5554
  %v5570 = vmul.f32 %v5552, %v5554
  %v5571 = vld [vmem:[%s1208] sm:$0xff]
  %v5572 = vld [vmem:[%s1208 + $0x10] sm:$0xff]
  %v5573 = vld [vmem:[%s1208 + $0x20] sm:$0xff]
  %v5574 = vld [vmem:[%s1208 + $0x30] sm:$0xff]
  %v5575 = vld [vmem:[%s1208 + $0x40] sm:$0xff]
  %v5576 = vld [vmem:[%s1208 + $0x50] sm:$0xff]
  %v5577 = vld [vmem:[%s1208 + $0x60] sm:$0xff]
  %v5578 = vld [vmem:[%s1208 + $0x70] sm:$0xff]
  %v5579 = vld [vmem:[%s1208 + $0x90] sm:$0xff]
  %v5580 = vld [vmem:[%s1208 + $0xa0] sm:$0xff]
  %v5581 = vld [vmem:[%s1208 + $0xb0] sm:$0xff]
  %v5582 = vld [vmem:[%s1208 + $0xc0] sm:$0xff]
  %v5583 = vld [vmem:[%s1208 + $0xd0] sm:$0xff]
  %v5584 = vld [vmem:[%s1208 + $0xe0] sm:$0xff]
  %v5585 = vld [vmem:[%s1208 + $0xf0] sm:$0xff]
  %v5586 = vld [vmem:[%s1208 + $0x100] sm:$0xff]
  %v5587 = vld [vmem:[%s917 + $0x1] sm:$0xff]
  %v5588 = vld [vmem:[%s917 + $0x11] sm:$0xff]
  %v5589 = vld [vmem:[%s917 + $0x21] sm:$0xff]
  %v5590 = vld [vmem:[%s917 + $0x31] sm:$0xff]
  %v5591 = vld [vmem:[%s917 + $0x41] sm:$0xff]
  %v5592 = vld [vmem:[%s917 + $0x51] sm:$0xff]
  %v5593 = vld [vmem:[%s917 + $0x61] sm:$0xff]
  %v5594 = vld [vmem:[%s917 + $0x71] sm:$0xff]
  %v5595 = vld [vmem:[%s917 + $0x91] sm:$0xff]
  %v5596 = vld [vmem:[%s917 + $0xa1] sm:$0xff]
  %v5597 = vld [vmem:[%s917 + $0xb1] sm:$0xff]
  %v5598 = vld [vmem:[%s917 + $0xc1] sm:$0xff]
  %v5599 = vld [vmem:[%s917 + $0xd1] sm:$0xff]
  %v5600 = vld [vmem:[%s917 + $0xe1] sm:$0xff]
  %v5601 = vld [vmem:[%s917 + $0xf1] sm:$0xff]
  %v5602 = vld [vmem:[%s917 + $0x101] sm:$0xff]
  %v5603 = vadd.f32 %v5571, %v5587
  %v5604 = vadd.f32 %v5572, %v5588
  %v5605 = vadd.f32 %v5573, %v5589
  %v5606 = vadd.f32 %v5574, %v5590
  %v5607 = vadd.f32 %v5575, %v5591
  %v5608 = vadd.f32 %v5576, %v5592
  %v5609 = vadd.f32 %v5577, %v5593
  %v5610 = vadd.f32 %v5578, %v5594
  %v5611 = vadd.f32 %v5579, %v5595
  %v5612 = vadd.f32 %v5580, %v5596
  %v5613 = vadd.f32 %v5581, %v5597
  %v5614 = vadd.f32 %v5582, %v5598
  %v5615 = vadd.f32 %v5583, %v5599
  %v5616 = vadd.f32 %v5584, %v5600
  %v5617 = vadd.f32 %v5585, %v5601
  %v5618 = vadd.f32 %v5586, %v5602
  %v5619 = vld [vmem:[%s2080] sm:$0xff]
  %v5620 = vld [vmem:[%s2080 + $0x10] sm:$0xff]
  %v5621 = vld [vmem:[%s2080 + $0x20] sm:$0xff]
  %v5622 = vld [vmem:[%s2080 + $0x30] sm:$0xff]
  %v5623 = vld [vmem:[%s2080 + $0x40] sm:$0xff]
  %v5624 = vld [vmem:[%s2080 + $0x50] sm:$0xff]
  %v5625 = vld [vmem:[%s2080 + $0x60] sm:$0xff]
  %v5626 = vld [vmem:[%s2080 + $0x70] sm:$0xff]
  %v5627 = vld [vmem:[%s2080 + $0x90] sm:$0xff]
  %v5628 = vld [vmem:[%s2080 + $0xa0] sm:$0xff]
  %v5629 = vld [vmem:[%s2080 + $0xb0] sm:$0xff]
  %v5630 = vld [vmem:[%s2080 + $0xc0] sm:$0xff]
  %v5631 = vld [vmem:[%s2080 + $0xd0] sm:$0xff]
  %v5632 = vld [vmem:[%s2080 + $0xe0] sm:$0xff]
  %v5633 = vld [vmem:[%s2080 + $0xf0] sm:$0xff]
  %v5634 = vld [vmem:[%s2080 + $0x100] sm:$0xff]
  %v5635 = vadd.f32 %v5603, %v5619
  %v5636 = vadd.f32 %v5604, %v5620
  %v5637 = vadd.f32 %v5605, %v5621
  %v5638 = vadd.f32 %v5606, %v5622
  %v5639 = vadd.f32 %v5607, %v5623
  %v5640 = vadd.f32 %v5608, %v5624
  %v5641 = vadd.f32 %v5609, %v5625
  %v5642 = vadd.f32 %v5610, %v5626
  %v5643 = vadd.f32 %v5611, %v5627
  %v5644 = vadd.f32 %v5612, %v5628
  %v5645 = vadd.f32 %v5613, %v5629
  %v5646 = vadd.f32 %v5614, %v5630
  %v5647 = vadd.f32 %v5615, %v5631
  %v5648 = vadd.f32 %v5616, %v5632
  %v5649 = vadd.f32 %v5617, %v5633
  %v5650 = vadd.f32 %v5618, %v5634
  %v5651 = vld [vmem:[%s1789 + $0x1] sm:$0xff]
  %v5652 = vld [vmem:[%s1789 + $0x11] sm:$0xff]
  %v5653 = vld [vmem:[%s1789 + $0x21] sm:$0xff]
  %v5654 = vld [vmem:[%s1789 + $0x31] sm:$0xff]
  %v5655 = vld [vmem:[%s1789 + $0x41] sm:$0xff]
  %v5656 = vld [vmem:[%s1789 + $0x51] sm:$0xff]
  %v5657 = vld [vmem:[%s1789 + $0x61] sm:$0xff]
  %v5658 = vld [vmem:[%s1789 + $0x71] sm:$0xff]
  %v5659 = vld [vmem:[%s1789 + $0x91] sm:$0xff]
  %v5660 = vld [vmem:[%s1789 + $0xa1] sm:$0xff]
  %v5661 = vld [vmem:[%s1789 + $0xb1] sm:$0xff]
  %v5662 = vld [vmem:[%s1789 + $0xc1] sm:$0xff]
  %v5663 = vld [vmem:[%s1789 + $0xd1] sm:$0xff]
  %v5664 = vld [vmem:[%s1789 + $0xe1] sm:$0xff]
  %v5665 = vld [vmem:[%s1789 + $0xf1] sm:$0xff]
  %v5666 = vld [vmem:[%s1789 + $0x101] sm:$0xff]
  %v5667 = vadd.f32 %v5635, %v5651
  %v5668 = vadd.f32 %v5636, %v5652
  %v5669 = vadd.f32 %v5637, %v5653
  %v5670 = vadd.f32 %v5638, %v5654
  %v5671 = vadd.f32 %v5639, %v5655
  %v5672 = vadd.f32 %v5640, %v5656
  %v5673 = vadd.f32 %v5641, %v5657
  %v5674 = vadd.f32 %v5642, %v5658
  %v5675 = vadd.f32 %v5643, %v5659
  %v5676 = vadd.f32 %v5644, %v5660
  %v5677 = vadd.f32 %v5645, %v5661
  %v5678 = vadd.f32 %v5646, %v5662
  %v5679 = vadd.f32 %v5647, %v5663
  %v5680 = vadd.f32 %v5648, %v5664
  %v5681 = vadd.f32 %v5649, %v5665
  %v5682 = vadd.f32 %v5650, %v5666
  %v5683 = vmul.f32 %v5667, 0.25
  %v5684 = vmul.f32 %v5668, 0.25
  %v5685 = vmul.f32 %v5669, 0.25
  %v5686 = vmul.f32 %v5670, 0.25
  %v5687 = vmul.f32 %v5671, 0.25
  %v5688 = vmul.f32 %v5672, 0.25
  %v5689 = vmul.f32 %v5673, 0.25
  %v5690 = vmul.f32 %v5674, 0.25
  %v5691 = vmul.f32 %v5675, 0.25
  %v5692 = vmul.f32 %v5676, 0.25
  %v5693 = vmul.f32 %v5677, 0.25
  %v5694 = vmul.f32 %v5678, 0.25
  %v5695 = vmul.f32 %v5679, 0.25
  %v5696 = vmul.f32 %v5680, 0.25
  %v5697 = vmul.f32 %v5681, 0.25
  %v5698 = vmul.f32 %v5682, 0.25
  %v5699 = vadd.f32 %v5555, %v5683
  %v5700 = vadd.f32 %v5556, %v5684
  %v5701 = vadd.f32 %v5557, %v5685
  %v5702 = vadd.f32 %v5558, %v5686
  %v5703 = vadd.f32 %v5559, %v5687
  %v5704 = vadd.f32 %v5560, %v5688
  %v5705 = vadd.f32 %v5561, %v5689
  %v5706 = vadd.f32 %v5562, %v5690
  %v5707 = vadd.f32 %v5563, %v5691
  %v5708 = vadd.f32 %v5564, %v5692
  %v5709 = vadd.f32 %v5565, %v5693
  %v5710 = vadd.f32 %v5566, %v5694
  %v5711 = vadd.f32 %v5567, %v5695
  %v5712 = vadd.f32 %v5568, %v5696
  %v5713 = vadd.f32 %v5569, %v5697
  %v5714 = vadd.f32 %v5570, %v5698
  %v5715 = vmax.f32 %v5699, 0.0
  %v5716 = vmax.f32 %v5700, 0.0
  %v5717 = vmax.f32 %v5701, 0.0
  %v5718 = vmax.f32 %v5702, 0.0
  %v5719 = vmax.f32 %v5703, 0.0
  %v5720 = vmax.f32 %v5704, 0.0
  %v5721 = vmax.f32 %v5705, 0.0
  %v5722 = vmax.f32 %v5706, 0.0
  %v5723 = vmax.f32 %v5707, 0.0
  %v5724 = vmax.f32 %v5708, 0.0
  %v5725 = vmax.f32 %v5709, 0.0
  %v5726 = vmax.f32 %v5710, 0.0
  %v5727 = vmax.f32 %v5711, 0.0
  %v5728 = vmax.f32 %v5712, 0.0
  %v5729 = vmax.f32 %v5713, 0.0
  %v5730 = vmax.f32 %v5714, 0.0
  %5731 = vst [vmem:[%s3] sm:$0xff] %v5715
  %5732 = vst [vmem:[%s3 + $0x8] sm:$0xff] %v5716
  %5733 = vst [vmem:[%s3 + $0x10] sm:$0xff] %v5717
  %5734 = vst [vmem:[%s3 + $0x18] sm:$0xff] %v5718
  %5735 = vst [vmem:[%s3 + $0x20] sm:$0xff] %v5719
  %5736 = vst [vmem:[%s3 + $0x28] sm:$0xff] %v5720
  %5737 = vst [vmem:[%s3 + $0x30] sm:$0xff] %v5721
  %5738 = vst [vmem:[%s3 + $0x38] sm:$0xff] %v5722
  %5739 = vst [vmem:[%s3 + $0x40] sm:$0xff] %v5723
  %5740 = vst [vmem:[%s3 + $0x48] sm:$0xff] %v5724
  %5741 = vst [vmem:[%s3 + $0x50] sm:$0xff] %v5725
  %5742 = vst [vmem:[%s3 + $0x58] sm:$0xff] %v5726
  %5743 = vst [vmem:[%s3 + $0x60] sm:$0xff] %v5727
  %5744 = vst [vmem:[%s3 + $0x68] sm:$0xff] %v5728
  %5745 = vst [vmem:[%s3 + $0x70] sm:$0xff] %v5729
  %5746 = vst [vmem:[%s3 + $0x78] sm:$0xff] %v5730
  // Predicated region
  $region14: #{basic_block_forward.1} parent=0 // pred_check
    _
  $region15: #{basic_block_forward.1} parent=0 // pred_check_branch
    %5748 = sbr.rel (0) target = $region17
  $region16: #{basic_block_forward.1} parent=0 // pred_region
    _
  $region17: #{basic_block_forward.1} parent=0 // pred_fallthru
    _
  // Predicated region
  $region18: #{basic_block_forward.1} parent=0 // pred_check
    _
  $region19: #{basic_block_forward.1} parent=0 // pred_check_branch
    %5750 = sbr.rel (0) target = $region21
  $region20: #{basic_block_forward.1} parent=0 // pred_region
    _
  $region21: #{basic_block_forward.1} parent=0 // pred_fallthru
    _

</llo_original>
